<compile_context>
chip_gen: v7x
topology: tpu7x:2x2x1
jax: 0.10.0
libtpu: 0.0.40
codegen_flags: <defaults>
</compile_context>

<pallas_src>
import functools
import numpy as np
import jax
import jax.numpy as jnp
from jax.experimental import pallas as pl
from jax.experimental.pallas import tpu as pltpu


# ---------------------------------------------------------------------------
# Fused all-heads Pallas kernel
# ---------------------------------------------------------------------------

def _leaky(v, alpha):
    if alpha < 0:
        return v
    return jnp.where(v >= 0.0, v, alpha * v)


def _fused_multi_kernel(*refs, act_alpha, eps, head_flags):
    """All heads fused.  head_flags: tuple of (has_stddev, has_avg) per head,
    matching the input-ref ordering produced by the wrapper."""
    o_ref = refs[-1]
    idx = 0

    def take(n):
        nonlocal idx
        out = refs[idx:idx + n]
        idx += n
        return out

    total = None
    for has_stddev, has_avg in head_flags:
        x_ref, wr_ref, br_ref, w1_ref, b1_ref = take(5)
        if has_stddev:
            we_ref, s_ref, sb_ref = take(3)
        w2_ref, b2_ref, wl_ref, bl_ref = take(4)
        if has_avg:
            (avg_ref,) = take(1)

        # from_rgb (1x1 conv over every time step, block-diagonal weight)
        h = jnp.dot(x_ref[...], wr_ref[...], preferred_element_type=jnp.float32) + br_ref[...]
        h = _leaky(h, act_alpha)

        # conv1 (k taps, same padding): one banded-block matmul
        y = jnp.dot(h, w1_ref[...], preferred_element_type=jnp.float32) + b1_ref[...]

        if has_stddev:
            # MinibatchStddev folded into conv1 as a rank-1 update with extra-channel taps wE.
            S = s_ref[...]     # (M, Bh): group-averaging matrix, entries 1/G
            Sb = sb_ref[...]   # (Bh, M): broadcast per-group stat back to its rows
            mu = jnp.dot(S, h, preferred_element_type=jnp.float32)            # (M, T*Cin)
            d = h - jnp.dot(Sb, mu, preferred_element_type=jnp.float32)       # (Bh, T*Cin)
            var = jnp.dot(S, d * d, preferred_element_type=jnp.float32)       # (M, T*Cin)
            sd = jnp.sqrt(var + eps)
            stat = jnp.mean(sd, axis=1, keepdims=True)                        # (M, 1)
            stat_col = jnp.dot(Sb, stat, preferred_element_type=jnp.float32)  # (Bh, 1)
            y = y + stat_col * we_ref[...]

        h1 = _leaky(y, act_alpha)

        # linear-last conv (kernel = T, pad 0) -> (Bh, Cout)
        h2 = jnp.dot(h1, w2_ref[...], preferred_element_type=jnp.float32) + b2_ref[...]
        h2 = _leaky(h2, act_alpha)

        # final 1x1 linear (no activation); head weight already folded into wl/bl
        out = jnp.dot(h2, wl_ref[...], preferred_element_type=jnp.float32) + bl_ref[...]  # (Bh, 1)

        if has_avg:
            # fold the wrapper-side mean (over channels / over chunks) into a matmul
            out = jnp.dot(avg_ref[...], out, preferred_element_type=jnp.float32)          # (B, 1)

        total = out if total is None else total + out

    o_ref[...] = total.astype(o_ref.dtype)


# ---------------------------------------------------------------------------
# Raw (PyTorch-layout) parameter init + one-time folding into block weights
# ---------------------------------------------------------------------------

def init_raw_disc_params(key, ch_rgb, ch_in, hidden, ch_out, k_size, ik, group_size):
    ks = jax.random.split(key, 8)

    def w_init(k, shape):  # kaiming-style, deterministic
        fan_in = shape[1] * shape[2]
        return jax.random.normal(k, shape, jnp.float32) * jnp.sqrt(2.0 / fan_in)

    c1_in = ch_in + (1 if group_size >= 0 else 0)
    return dict(
        from_rgb_w=w_init(ks[0], (ch_in, ch_rgb, 1)),
        from_rgb_b=0.01 * jax.random.normal(ks[1], (ch_in,), jnp.float32),
        c1_w=w_init(ks[2], (hidden, c1_in, k_size)),
        c1_b=0.01 * jax.random.normal(ks[3], (hidden,), jnp.float32),
        c2_w=w_init(ks[4], (ch_out, hidden, ik)),
        c2_b=0.01 * jax.random.normal(ks[5], (ch_out,), jnp.float32),
        lin_w=w_init(ks[6], (1, ch_out, 1)),
        lin_b=0.01 * jax.random.normal(ks[7], (1,), jnp.float32),
    )


def precompute_head(raw, T, k_size, group_size):
    """Fold PyTorch conv weights into the big block-matmul weights (done once)."""
    ch_in = raw["from_rgb_w"].shape[0]
    hidden = raw["c1_w"].shape[0]
    ch_out = raw["c2_w"].shape[0]
    has_stddev = group_size >= 0
    pad = (k_size - 1) // 2

    # from_rgb 1x1 -> block-diagonal over time
    w_small = jnp.transpose(raw["from_rgb_w"][:, :, 0], (1, 0))          # (Crgb, Cin)
    Wrgb = jnp.kron(jnp.eye(T, dtype=jnp.float32), w_small)              # (T*Crgb, T*Cin)
    brgb = jnp.tile(raw["from_rgb_b"], T).reshape(1, T * ch_in)

    # conv1 (same padding) -> banded block weight; wE = stddev-channel taps
    w1_kio = np.asarray(jnp.transpose(raw["c1_w"], (2, 1, 0)))           # (K, C1, H)
    W1 = np.zeros((T * ch_in, T * hidden), np.float32)
    wE = np.zeros((1, T * hidden), np.float32)
    for t in range(T):
        for k in range(k_size):
            tp = t + k - pad
            if 0 <= tp < T:
                W1[tp * ch_in:(tp + 1) * ch_in, t * hidden:(t + 1) * hidden] = w1_kio[k, :ch_in, :]
                if has_stddev:
                    wE[0, t * hidden:(t + 1) * hidden] += w1_kio[k, ch_in, :]
    b1 = jnp.tile(raw["c1_b"], T).reshape(1, T * hidden)

    # linear-last conv (kernel = T, pad 0) -> dense (T*H, Cout), t-major rows
    W2 = jnp.transpose(raw["c2_w"], (2, 1, 0)).reshape(T * hidden, ch_out)
    b2 = raw["c2_b"].reshape(1, ch_out)

    # final 1x1 linear
    Wlin = jnp.transpose(raw["lin_w"][:, :, 0], (1, 0))                  # (Cout, 1)
    blin = raw["lin_b"].reshape(1, 1)

    return dict(group_size=group_size, T=T, raw=raw,
                Wrgb=Wrgb.astype(jnp.float32), brgb=brgb.astype(jnp.float32),
                W1=jnp.asarray(W1), b1=b1.astype(jnp.float32),
                wE=jnp.asarray(wE),
                W2=W2.astype(jnp.float32), b2=b2.astype(jnp.float32),
                Wlin=Wlin.astype(jnp.float32), blin=blin.astype(jnp.float32))


# ---------------------------------------------------------------------------
# MultiDiscriminator (depth = 0, alpha = 1.0, y = None)
# ---------------------------------------------------------------------------

class MultiDiscriminatorPallas:
    def __init__(self, key,
                 initial_kernel_size=16, num_rgb_channels=4,
                 fmap_base=32, fmap_max=32, fmap_min=8, kernel_size=3,
                 act_alpha=0.2, group_size=4,
                 progression_scale_up=(2,), progression_scale_down=(1,),
                 all_sinc_weight=0.0, all_time_weight=1.0,
                 shared_sinc_weight=0.0, shared_time_weight=1.0,
                 one_sec_weight=1.0):
        # TODO(synk): SincEncoder heads (all_sinc / shared_sinc) not implemented (class missing).
        assert all_sinc_weight == 0.0 and shared_sinc_weight == 0.0
        self.act_alpha = act_alpha
        self.all_time_weight = all_time_weight
        self.shared_time_weight = shared_time_weight
        self.one_sec_weight = one_sec_weight
        self.depth = 0            # default _depth
        self.ik = initial_kernel_size

        def nf(base, fmax, fmin, stage):
            return min(max(int(base / 2.0 ** stage), fmin), fmax)

        k1, k2, k3 = jax.random.split(key, 3)

        # all_time_net: last DBlock only (depth 0)
        ci, co = nf(fmap_base, fmap_max, fmap_min, 1), nf(fmap_base, fmap_max, fmap_min, 0)
        raw_all = init_raw_disc_params(k1, num_rgb_channels, ci, max(ci, 4), co,
                                       kernel_size, initial_kernel_size, group_size)
        self.all_time = precompute_head(raw_all, initial_kernel_size, kernel_size, group_size)

        # shared nets use fmap_base//2 etc. and ch_rgb = 1
        fb2, fx2, fn2 = fmap_base // 2, fmap_max // 2, fmap_min // 2
        ci2, co2 = nf(fb2, fx2, fn2, 1), nf(fb2, fx2, fn2, 0)
        raw_sh = init_raw_disc_params(k2, 1, ci2, max(ci2, 4), co2,
                                      kernel_size, initial_kernel_size, group_size)
        self.shared_time = precompute_head(raw_sh, initial_kernel_size, kernel_size, group_size)

        # one_sec_net: initial_kernel_size=1, ch_rgb=num_rgb_channels, group_size=-1
        raw_os = init_raw_disc_params(k3, num_rgb_channels, ci2, max(ci2, 4), co2,
                                      kernel_size, 1, -1)
        self.one_sec = precompute_head(raw_os, 1, kernel_size, -1)

        self.signal_lens = (np.cumprod(np.array([1] + list(progression_scale_up)))
                            / np.cumprod(np.array([1] + list(progression_scale_down)))
                            ).astype(np.int32)

    def __call__(self, x, y=None):
        # TODO(synk): class-conditional (y) path and depth > 0 progressive path not implemented.
        assert y is None
        B, C, T = x.shape
        assert T == self.ik
        eps = 1e-8

        inputs = []
        head_flags = []

        def add_head(p, x2, head_weight, avg=None):
            Bh = x2.shape[0]
            has_stddev = p["group_size"] >= 0
            inputs.extend([x2.astype(jnp.float32), p["Wrgb"], p["brgb"], p["W1"], p["b1"]])
            if has_stddev:
                G = min(p["group_size"], Bh)
                assert Bh % G == 0, "batch must be divisible by the stddev group size"
                M = Bh // G
                bi = np.arange(Bh)
                S = np.zeros((M, Bh), np.float32)
                S[bi % M, bi] = 1.0 / G
                Sb = np.zeros((Bh, M), np.float32)
                Sb[bi, bi % M] = 1.0
                inputs.extend([p["wE"], jnp.asarray(S), jnp.asarray(Sb)])
            # head weight folded into the final linear weights -> no extra kernel mul
            inputs.extend([p["W2"], p["b2"],
                           (head_weight * p["Wlin"]).astype(jnp.float32),
                           (head_weight * p["blin"]).astype(jnp.float32)])
            has_avg = avg is not None
            if has_avg:
                inputs.append(jnp.asarray(avg, dtype=jnp.float32))
            head_flags.append((has_stddev, has_avg))

        if self.all_time_weight != 0:
            # (B, T*Crgb) channels-last / time-major columns (col = t*Crgb + c)
            x2 = jnp.transpose(x, (0, 2, 1)).reshape(B, T * C)
            add_head(self.all_time, x2, float(self.all_time_weight))

        if self.shared_time_weight != 0:
            xs = x.reshape(B * C, T)                 # x.view(-1, 1, T), Crgb = 1
            bi = np.arange(B * C)
            avg_c = np.zeros((B, B * C), np.float32)  # mean over rgb channels
            avg_c[bi // C, bi] = 1.0 / C
            add_head(self.shared_time, xs, float(self.shared_time_weight), avg=avg_c)

        if self.one_sec_weight != 0:
            stride = int(self.signal_lens[self.depth])  # == 1 at depth 0
            assert stride == 1  # TODO(synk): depth>0 chunking unused at default depth=0
            n = T // stride
            # torch.cat of T unit-stride chunks along batch == a single transpose
            xc = jnp.transpose(x, (2, 0, 1)).reshape(n * B, C)
            bi = np.arange(n * B)
            avg_n = np.zeros((B, n * B), np.float32)  # mean over chunks
            avg_n[bi % B, bi] = 1.0 / n
            add_head(self.one_sec, xc, float(self.one_sec_weight), avg=avg_n)

        assert head_flags, "at least one head must be enabled"

        kernel = functools.partial(_fused_multi_kernel, act_alpha=self.act_alpha,
                                   eps=eps, head_flags=tuple(head_flags))
        vmem = pl.BlockSpec(memory_space=pltpu.MemorySpace.VMEM)
        out = pl.pallas_call(
            kernel,
            out_shape=jax.ShapeDtypeStruct((B, 1), jnp.float32),
            in_specs=[vmem] * len(inputs),
            out_specs=vmem,
        )(*inputs)
        return out[:, 0]


# ---------------------------------------------------------------------------
# Pure-JAX reference (mirrors the PyTorch forward at depth 0) for validation
# ---------------------------------------------------------------------------

def _ref_head(raw, x_nct, act_alpha, group_size, eps=1e-8):
    leaky = lambda v: jnp.where(v >= 0.0, v, act_alpha * v)
    x = jnp.transpose(x_nct, (0, 2, 1))                                   # (B, T, C)
    h = leaky(jnp.einsum('btc,oc->bto', x, raw["from_rgb_w"][:, :, 0]) + raw["from_rgb_b"])
    if group_size >= 0:
        B, T, C = h.shape
        G = min(group_size, B); M = B // G
        hg = h.reshape(G, M, T, C)
        mu = hg.mean(axis=0, keepdims=True)
        sd = jnp.sqrt(((hg - mu) ** 2).mean(axis=0) + eps)
        stat = sd.mean(axis=(1, 2))                                       # (M,)
        extra = jnp.broadcast_to(stat[None, :, None, None], (G, M, T, 1)).reshape(B, T, 1)
        h = jnp.concatenate([h, extra], axis=-1)
    K = raw["c1_w"].shape[2]; pad = (K - 1) // 2
    Tcur = h.shape[1]
    hp = jnp.pad(h, ((0, 0), (pad, pad), (0, 0)))
    wk = jnp.transpose(raw["c1_w"], (2, 1, 0))
    y = sum(jnp.einsum('btc,ch->bth', hp[:, k:k + Tcur, :], wk[k]) for k in range(K)) + raw["c1_b"]
    h = leaky(y)
    B, Tcur, H = h.shape
    w2 = jnp.transpose(raw["c2_w"], (2, 1, 0)).reshape(Tcur * H, -1)
    h2 = leaky(h.reshape(B, Tcur * H) @ w2 + raw["c2_b"])
    wl = jnp.transpose(raw["lin_w"][:, :, 0], (1, 0))
    return (h2 @ wl + raw["lin_b"])[:, 0]


def _ref_multi(model, x):
    B, C, T = x.shape
    o = model.all_time_weight * _ref_head(model.all_time["raw"], x, model.act_alpha,
                                          model.all_time["group_size"])
    xs = x.reshape(B * C, 1, T)
    tmp = _ref_head(model.shared_time["raw"], xs, model.act_alpha,
                    model.shared_time["group_size"])
    o = o + model.shared_time_weight * tmp.reshape(B, C).mean(axis=1)
    xc = jnp.transpose(x, (2, 0, 1)).reshape(T * B, C, 1)
    r = model.one_sec_weight * _ref_head(model.one_sec["raw"], xc, model.act_alpha, -1)
    o = o + r.reshape(T, B).mean(axis=0)
    return o


# ---------------------------------------------------------------------------
# Main
# ---------------------------------------------------------------------------

if __name__ == "__main__":
    key = jax.random.PRNGKey(0)
    k_param, k_x = jax.random.split(key)

    model = MultiDiscriminatorPallas(k_param)

    # PyTorch-style NCT input: (batch=4, rgb_channels=4, T=initial_kernel_size=16)
    x = jax.random.normal(k_x, (4, 4, 16), jnp.float32)

    out = jax.block_until_ready(model(x))
    assert out.shape == (4,)
    assert bool(jnp.all(jnp.isfinite(out)))

    ref = jax.block_until_ready(_ref_multi(model, x))
    assert bool(jnp.allclose(out, ref, rtol=2e-2, atol=2e-2)), (out, ref)

    print("KERNEL_OK")
</pallas_src>

<mosaic_0001>
module attributes {stable_mosaic.version = 11 : i64} {
  func.func @_fused_multi_kernel(%arg0: memref<4x64xf32, #tpu.memory_space<vmem>>, %arg1: memref<64x256xf32, #tpu.memory_space<vmem>>, %arg2: memref<1x256xf32, #tpu.memory_space<vmem>>, %arg3: memref<256x256xf32, #tpu.memory_space<vmem>>, %arg4: memref<1x256xf32, #tpu.memory_space<vmem>>, %arg5: memref<1x256xf32, #tpu.memory_space<vmem>>, %arg6: memref<1x4xf32, #tpu.memory_space<vmem>>, %arg7: memref<4x1xf32, #tpu.memory_space<vmem>>, %arg8: memref<256x32xf32, #tpu.memory_space<vmem>>, %arg9: memref<1x32xf32, #tpu.memory_space<vmem>>, %arg10: memref<32x1xf32, #tpu.memory_space<vmem>>, %arg11: memref<1x1xf32, #tpu.memory_space<vmem>>, %arg12: memref<16x16xf32, #tpu.memory_space<vmem>>, %arg13: memref<16x128xf32, #tpu.memory_space<vmem>>, %arg14: memref<1x128xf32, #tpu.memory_space<vmem>>, %arg15: memref<128x128xf32, #tpu.memory_space<vmem>>, %arg16: memref<1x128xf32, #tpu.memory_space<vmem>>, %arg17: memref<1x128xf32, #tpu.memory_space<vmem>>, %arg18: memref<4x16xf32, #tpu.memory_space<vmem>>, %arg19: memref<16x4xf32, #tpu.memory_space<vmem>>, %arg20: memref<128x16xf32, #tpu.memory_space<vmem>>, %arg21: memref<1x16xf32, #tpu.memory_space<vmem>>, %arg22: memref<16x1xf32, #tpu.memory_space<vmem>>, %arg23: memref<1x1xf32, #tpu.memory_space<vmem>>, %arg24: memref<4x16xf32, #tpu.memory_space<vmem>>, %arg25: memref<64x4xf32, #tpu.memory_space<vmem>>, %arg26: memref<4x8xf32, #tpu.memory_space<vmem>>, %arg27: memref<1x8xf32, #tpu.memory_space<vmem>>, %arg28: memref<8x8xf32, #tpu.memory_space<vmem>>, %arg29: memref<1x8xf32, #tpu.memory_space<vmem>>, %arg30: memref<8x16xf32, #tpu.memory_space<vmem>>, %arg31: memref<1x16xf32, #tpu.memory_space<vmem>>, %arg32: memref<16x1xf32, #tpu.memory_space<vmem>>, %arg33: memref<1x1xf32, #tpu.memory_space<vmem>>, %arg34: memref<4x64xf32, #tpu.memory_space<vmem>>, %arg35: memref<4x1xf32, #tpu.memory_space<vmem>>) attributes {dimension_semantics = [], scalar_prefetch = 0 : i64, scratch_operands = 0 : i64, tpu.core_type = #tpu.core_type<tc>} {
    %c0 = arith.constant 0 : index
    %c0_0 = arith.constant 0 : index
    %0 = vector.load %arg0[%c0, %c0_0] : memref<4x64xf32, #tpu.memory_space<vmem>>, vector<4x64xf32>
    %c0_1 = arith.constant 0 : index
    %c0_2 = arith.constant 0 : index
    %1 = vector.load %arg1[%c0_1, %c0_2] : memref<64x256xf32, #tpu.memory_space<vmem>>, vector<64x256xf32>
    %cst = arith.constant dense<0.000000e+00> : vector<4x256xf32>
    %2 = tpu.matmul %0, %1, %cst {dimension_numbers = #tpu.dot_dimension_numbers<[1], [0], [0], [1], [0, 0, 1, 1], [], []>} : vector<4x64xf32>, vector<64x256xf32>, vector<4x256xf32> -> vector<4x256xf32>
    %c0_3 = arith.constant 0 : index
    %c0_4 = arith.constant 0 : index
    %3 = vector.load %arg2[%c0_3, %c0_4] : memref<1x256xf32, #tpu.memory_space<vmem>>, vector<1x256xf32>
    %4 = vector.broadcast %3 : vector<1x256xf32> to vector<4x256xf32>
    %5 = arith.addf %2, %4 : vector<4x256xf32>
    %cst_5 = arith.constant 0.000000e+00 : f32
    %6 = vector.broadcast %cst_5 : f32 to vector<4x256xf32>
    %7 = arith.cmpf oge, %5, %6 : vector<4x256xf32>
    %cst_6 = arith.constant 2.000000e-01 : f32
    %8 = vector.broadcast %cst_6 : f32 to vector<4x256xf32>
    %9 = arith.mulf %8, %5 : vector<4x256xf32>
    %10 = arith.select %7, %5, %9 : vector<4x256xi1>, vector<4x256xf32>
    %c0_7 = arith.constant 0 : index
    %c0_8 = arith.constant 0 : index
    %11 = vector.load %arg3[%c0_7, %c0_8] : memref<256x256xf32, #tpu.memory_space<vmem>>, vector<256x256xf32>
    %cst_9 = arith.constant dense<0.000000e+00> : vector<4x256xf32>
    %12 = tpu.matmul %10, %11, %cst_9 {dimension_numbers = #tpu.dot_dimension_numbers<[1], [0], [0], [1], [0, 0, 1, 1], [], []>} : vector<4x256xf32>, vector<256x256xf32>, vector<4x256xf32> -> vector<4x256xf32>
    %c0_10 = arith.constant 0 : index
    %c0_11 = arith.constant 0 : index
    %13 = vector.load %arg4[%c0_10, %c0_11] : memref<1x256xf32, #tpu.memory_space<vmem>>, vector<1x256xf32>
    %14 = vector.broadcast %13 : vector<1x256xf32> to vector<4x256xf32>
    %15 = arith.addf %12, %14 : vector<4x256xf32>
    %c0_12 = arith.constant 0 : index
    %c0_13 = arith.constant 0 : index
    %16 = vector.load %arg6[%c0_12, %c0_13] : memref<1x4xf32, #tpu.memory_space<vmem>>, vector<1x4xf32>
    %c0_14 = arith.constant 0 : index
    %c0_15 = arith.constant 0 : index
    %17 = vector.load %arg7[%c0_14, %c0_15] : memref<4x1xf32, #tpu.memory_space<vmem>>, vector<4x1xf32>
    %cst_16 = arith.constant dense<0.000000e+00> : vector<1x256xf32>
    %18 = tpu.matmul %16, %10, %cst_16 {dimension_numbers = #tpu.dot_dimension_numbers<[1], [0], [0], [1], [0, 0, 1, 1], [], []>} : vector<1x4xf32>, vector<4x256xf32>, vector<1x256xf32> -> vector<1x256xf32>
    %cst_17 = arith.constant dense<0.000000e+00> : vector<4x256xf32>
    %19 = tpu.matmul %17, %18, %cst_17 {dimension_numbers = #tpu.dot_dimension_numbers<[1], [0], [0], [1], [0, 0, 1, 1], [], []>} : vector<4x1xf32>, vector<1x256xf32>, vector<4x256xf32> -> vector<4x256xf32>
    %20 = arith.subf %10, %19 : vector<4x256xf32>
    %21 = arith.mulf %20, %20 : vector<4x256xf32>
    %cst_18 = arith.constant dense<0.000000e+00> : vector<1x256xf32>
    %22 = tpu.matmul %16, %21, %cst_18 {dimension_numbers = #tpu.dot_dimension_numbers<[1], [0], [0], [1], [0, 0, 1, 1], [], []>} : vector<1x4xf32>, vector<4x256xf32>, vector<1x256xf32> -> vector<1x256xf32>
    %cst_19 = arith.constant 9.99999993E-9 : f32
    %23 = vector.broadcast %cst_19 : f32 to vector<1x256xf32>
    %24 = arith.addf %22, %23 : vector<1x256xf32>
    %25 = math.sqrt %24 : vector<1x256xf32>
    %cst_20 = arith.constant dense<0.000000e+00> : vector<1xf32>
    %26 = vector.multi_reduction <add>, %25, %cst_20 [1] : vector<1x256xf32> to vector<1xf32>
    %27 = vector.shape_cast %26 : vector<1xf32> to vector<1x1xf32>
    %cst_21 = arith.constant 2.560000e+02 : f32
    %28 = vector.broadcast %cst_21 : f32 to vector<1x1xf32>
    %29 = arith.divf %27, %28 : vector<1x1xf32>
    %cst_22 = arith.constant dense<0.000000e+00> : vector<4x1xf32>
    %30 = tpu.matmul %17, %29, %cst_22 {dimension_numbers = #tpu.dot_dimension_numbers<[1], [0], [0], [1], [0, 0, 1, 1], [], []>} : vector<4x1xf32>, vector<1x1xf32>, vector<4x1xf32> -> vector<4x1xf32>
    %c0_23 = arith.constant 0 : index
    %c0_24 = arith.constant 0 : index
    %31 = vector.load %arg5[%c0_23, %c0_24] : memref<1x256xf32, #tpu.memory_space<vmem>>, vector<1x256xf32>
    %32 = vector.broadcast %30 : vector<4x1xf32> to vector<4x256xf32>
    %33 = vector.broadcast %31 : vector<1x256xf32> to vector<4x256xf32>
    %34 = arith.mulf %32, %33 : vector<4x256xf32>
    %35 = arith.addf %15, %34 : vector<4x256xf32>
    %cst_25 = arith.constant 0.000000e+00 : f32
    %36 = vector.broadcast %cst_25 : f32 to vector<4x256xf32>
    %37 = arith.cmpf oge, %35, %36 : vector<4x256xf32>
    %cst_26 = arith.constant 2.000000e-01 : f32
    %38 = vector.broadcast %cst_26 : f32 to vector<4x256xf32>
    %39 = arith.mulf %38, %35 : vector<4x256xf32>
    %40 = arith.select %37, %35, %39 : vector<4x256xi1>, vector<4x256xf32>
    %c0_27 = arith.constant 0 : index
    %c0_28 = arith.constant 0 : index
    %41 = vector.load %arg8[%c0_27, %c0_28] : memref<256x32xf32, #tpu.memory_space<vmem>>, vector<256x32xf32>
    %cst_29 = arith.constant dense<0.000000e+00> : vector<4x32xf32>
    %42 = tpu.matmul %40, %41, %cst_29 {dimension_numbers = #tpu.dot_dimension_numbers<[1], [0], [0], [1], [0, 0, 1, 1], [], []>} : vector<4x256xf32>, vector<256x32xf32>, vector<4x32xf32> -> vector<4x32xf32>
    %c0_30 = arith.constant 0 : index
    %c0_31 = arith.constant 0 : index
    %43 = vector.load %arg9[%c0_30, %c0_31] : memref<1x32xf32, #tpu.memory_space<vmem>>, vector<1x32xf32>
    %44 = vector.broadcast %43 : vector<1x32xf32> to vector<4x32xf32>
    %45 = arith.addf %42, %44 : vector<4x32xf32>
    %cst_32 = arith.constant 0.000000e+00 : f32
    %46 = vector.broadcast %cst_32 : f32 to vector<4x32xf32>
    %47 = arith.cmpf oge, %45, %46 : vector<4x32xf32>
    %cst_33 = arith.constant 2.000000e-01 : f32
    %48 = vector.broadcast %cst_33 : f32 to vector<4x32xf32>
    %49 = arith.mulf %48, %45 : vector<4x32xf32>
    %50 = arith.select %47, %45, %49 : vector<4x32xi1>, vector<4x32xf32>
    %c0_34 = arith.constant 0 : index
    %c0_35 = arith.constant 0 : index
    %51 = vector.load %arg10[%c0_34, %c0_35] : memref<32x1xf32, #tpu.memory_space<vmem>>, vector<32x1xf32>
    %cst_36 = arith.constant dense<0.000000e+00> : vector<4x1xf32>
    %52 = tpu.matmul %50, %51, %cst_36 {dimension_numbers = #tpu.dot_dimension_numbers<[1], [0], [0], [1], [0, 0, 1, 1], [], []>} : vector<4x32xf32>, vector<32x1xf32>, vector<4x1xf32> -> vector<4x1xf32>
    %c0_37 = arith.constant 0 : index
    %c0_38 = arith.constant 0 : index
    %53 = vector.load %arg11[%c0_37, %c0_38] : memref<1x1xf32, #tpu.memory_space<vmem>>, vector<1x1xf32>
    %54 = vector.broadcast %53 : vector<1x1xf32> to vector<4x1xf32>
    %55 = arith.addf %52, %54 : vector<4x1xf32>
    %c0_39 = arith.constant 0 : index
    %c0_40 = arith.constant 0 : index
    %56 = vector.load %arg12[%c0_39, %c0_40] : memref<16x16xf32, #tpu.memory_space<vmem>>, vector<16x16xf32>
    %c0_41 = arith.constant 0 : index
    %c0_42 = arith.constant 0 : index
    %57 = vector.load %arg13[%c0_41, %c0_42] : memref<16x128xf32, #tpu.memory_space<vmem>>, vector<16x128xf32>
    %cst_43 = arith.constant dense<0.000000e+00> : vector<16x128xf32>
    %58 = tpu.matmul %56, %57, %cst_43 {dimension_numbers = #tpu.dot_dimension_numbers<[1], [0], [0], [1], [0, 0, 1, 1], [], []>} : vector<16x16xf32>, vector<16x128xf32>, vector<16x128xf32> -> vector<16x128xf32>
    %c0_44 = arith.constant 0 : index
    %c0_45 = arith.constant 0 : index
    %59 = vector.load %arg14[%c0_44, %c0_45] : memref<1x128xf32, #tpu.memory_space<vmem>>, vector<1x128xf32>
    %60 = vector.broadcast %59 : vector<1x128xf32> to vector<16x128xf32>
    %61 = arith.addf %58, %60 : vector<16x128xf32>
    %cst_46 = arith.constant 0.000000e+00 : f32
    %62 = vector.broadcast %cst_46 : f32 to vector<16x128xf32>
    %63 = arith.cmpf oge, %61, %62 : vector<16x128xf32>
    %cst_47 = arith.constant 2.000000e-01 : f32
    %64 = vector.broadcast %cst_47 : f32 to vector<16x128xf32>
    %65 = arith.mulf %64, %61 : vector<16x128xf32>
    %66 = arith.select %63, %61, %65 : vector<16x128xi1>, vector<16x128xf32>
    %c0_48 = arith.constant 0 : index
    %c0_49 = arith.constant 0 : index
    %67 = vector.load %arg15[%c0_48, %c0_49] : memref<128x128xf32, #tpu.memory_space<vmem>>, vector<128x128xf32>
    %cst_50 = arith.constant dense<0.000000e+00> : vector<16x128xf32>
    %68 = tpu.matmul %66, %67, %cst_50 {dimension_numbers = #tpu.dot_dimension_numbers<[1], [0], [0], [1], [0, 0, 1, 1], [], []>} : vector<16x128xf32>, vector<128x128xf32>, vector<16x128xf32> -> vector<16x128xf32>
    %c0_51 = arith.constant 0 : index
    %c0_52 = arith.constant 0 : index
    %69 = vector.load %arg16[%c0_51, %c0_52] : memref<1x128xf32, #tpu.memory_space<vmem>>, vector<1x128xf32>
    %70 = vector.broadcast %69 : vector<1x128xf32> to vector<16x128xf32>
    %71 = arith.addf %68, %70 : vector<16x128xf32>
    %c0_53 = arith.constant 0 : index
    %c0_54 = arith.constant 0 : index
    %72 = vector.load %arg18[%c0_53, %c0_54] : memref<4x16xf32, #tpu.memory_space<vmem>>, vector<4x16xf32>
    %c0_55 = arith.constant 0 : index
    %c0_56 = arith.constant 0 : index
    %73 = vector.load %arg19[%c0_55, %c0_56] : memref<16x4xf32, #tpu.memory_space<vmem>>, vector<16x4xf32>
    %cst_57 = arith.constant dense<0.000000e+00> : vector<4x128xf32>
    %74 = tpu.matmul %72, %66, %cst_57 {dimension_numbers = #tpu.dot_dimension_numbers<[1], [0], [0], [1], [0, 0, 1, 1], [], []>} : vector<4x16xf32>, vector<16x128xf32>, vector<4x128xf32> -> vector<4x128xf32>
    %cst_58 = arith.constant dense<0.000000e+00> : vector<16x128xf32>
    %75 = tpu.matmul %73, %74, %cst_58 {dimension_numbers = #tpu.dot_dimension_numbers<[1], [0], [0], [1], [0, 0, 1, 1], [], []>} : vector<16x4xf32>, vector<4x128xf32>, vector<16x128xf32> -> vector<16x128xf32>
    %76 = arith.subf %66, %75 : vector<16x128xf32>
    %77 = arith.mulf %76, %76 : vector<16x128xf32>
    %cst_59 = arith.constant dense<0.000000e+00> : vector<4x128xf32>
    %78 = tpu.matmul %72, %77, %cst_59 {dimension_numbers = #tpu.dot_dimension_numbers<[1], [0], [0], [1], [0, 0, 1, 1], [], []>} : vector<4x16xf32>, vector<16x128xf32>, vector<4x128xf32> -> vector<4x128xf32>
    %cst_60 = arith.constant 9.99999993E-9 : f32
    %79 = vector.broadcast %cst_60 : f32 to vector<4x128xf32>
    %80 = arith.addf %78, %79 : vector<4x128xf32>
    %81 = math.sqrt %80 : vector<4x128xf32>
    %cst_61 = arith.constant dense<0.000000e+00> : vector<4xf32>
    %82 = vector.multi_reduction <add>, %81, %cst_61 [1] : vector<4x128xf32> to vector<4xf32>
    %83 = vector.shape_cast %82 : vector<4xf32> to vector<4x1xf32>
    %cst_62 = arith.constant 1.280000e+02 : f32
    %84 = vector.broadcast %cst_62 : f32 to vector<4x1xf32>
    %85 = arith.divf %83, %84 : vector<4x1xf32>
    %cst_63 = arith.constant dense<0.000000e+00> : vector<16x1xf32>
    %86 = tpu.matmul %73, %85, %cst_63 {dimension_numbers = #tpu.dot_dimension_numbers<[1], [0], [0], [1], [0, 0, 1, 1], [], []>} : vector<16x4xf32>, vector<4x1xf32>, vector<16x1xf32> -> vector<16x1xf32>
    %c0_64 = arith.constant 0 : index
    %c0_65 = arith.constant 0 : index
    %87 = vector.load %arg17[%c0_64, %c0_65] : memref<1x128xf32, #tpu.memory_space<vmem>>, vector<1x128xf32>
    %88 = vector.broadcast %86 : vector<16x1xf32> to vector<16x128xf32>
    %89 = vector.broadcast %87 : vector<1x128xf32> to vector<16x128xf32>
    %90 = arith.mulf %88, %89 : vector<16x128xf32>
    %91 = arith.addf %71, %90 : vector<16x128xf32>
    %cst_66 = arith.constant 0.000000e+00 : f32
    %92 = vector.broadcast %cst_66 : f32 to vector<16x128xf32>
    %93 = arith.cmpf oge, %91, %92 : vector<16x128xf32>
    %cst_67 = arith.constant 2.000000e-01 : f32
    %94 = vector.broadcast %cst_67 : f32 to vector<16x128xf32>
    %95 = arith.mulf %94, %91 : vector<16x128xf32>
    %96 = arith.select %93, %91, %95 : vector<16x128xi1>, vector<16x128xf32>
    %c0_68 = arith.constant 0 : index
    %c0_69 = arith.constant 0 : index
    %97 = vector.load %arg20[%c0_68, %c0_69] : memref<128x16xf32, #tpu.memory_space<vmem>>, vector<128x16xf32>
    %cst_70 = arith.constant dense<0.000000e+00> : vector<16x16xf32>
    %98 = tpu.matmul %96, %97, %cst_70 {dimension_numbers = #tpu.dot_dimension_numbers<[1], [0], [0], [1], [0, 0, 1, 1], [], []>} : vector<16x128xf32>, vector<128x16xf32>, vector<16x16xf32> -> vector<16x16xf32>
    %c0_71 = arith.constant 0 : index
    %c0_72 = arith.constant 0 : index
    %99 = vector.load %arg21[%c0_71, %c0_72] : memref<1x16xf32, #tpu.memory_space<vmem>>, vector<1x16xf32>
    %100 = vector.broadcast %99 : vector<1x16xf32> to vector<16x16xf32>
    %101 = arith.addf %98, %100 : vector<16x16xf32>
    %cst_73 = arith.constant 0.000000e+00 : f32
    %102 = vector.broadcast %cst_73 : f32 to vector<16x16xf32>
    %103 = arith.cmpf oge, %101, %102 : vector<16x16xf32>
    %cst_74 = arith.constant 2.000000e-01 : f32
    %104 = vector.broadcast %cst_74 : f32 to vector<16x16xf32>
    %105 = arith.mulf %104, %101 : vector<16x16xf32>
    %106 = arith.select %103, %101, %105 : vector<16x16xi1>, vector<16x16xf32>
    %c0_75 = arith.constant 0 : index
    %c0_76 = arith.constant 0 : index
    %107 = vector.load %arg22[%c0_75, %c0_76] : memref<16x1xf32, #tpu.memory_space<vmem>>, vector<16x1xf32>
    %cst_77 = arith.constant dense<0.000000e+00> : vector<16x1xf32>
    %108 = tpu.matmul %106, %107, %cst_77 {dimension_numbers = #tpu.dot_dimension_numbers<[1], [0], [0], [1], [0, 0, 1, 1], [], []>} : vector<16x16xf32>, vector<16x1xf32>, vector<16x1xf32> -> vector<16x1xf32>
    %c0_78 = arith.constant 0 : index
    %c0_79 = arith.constant 0 : index
    %109 = vector.load %arg23[%c0_78, %c0_79] : memref<1x1xf32, #tpu.memory_space<vmem>>, vector<1x1xf32>
    %110 = vector.broadcast %109 : vector<1x1xf32> to vector<16x1xf32>
    %111 = arith.addf %108, %110 : vector<16x1xf32>
    %c0_80 = arith.constant 0 : index
    %c0_81 = arith.constant 0 : index
    %112 = vector.load %arg24[%c0_80, %c0_81] : memref<4x16xf32, #tpu.memory_space<vmem>>, vector<4x16xf32>
    %cst_82 = arith.constant dense<0.000000e+00> : vector<4x1xf32>
    %113 = tpu.matmul %112, %111, %cst_82 {dimension_numbers = #tpu.dot_dimension_numbers<[1], [0], [0], [1], [0, 0, 1, 1], [], []>} : vector<4x16xf32>, vector<16x1xf32>, vector<4x1xf32> -> vector<4x1xf32>
    %114 = arith.addf %55, %113 : vector<4x1xf32>
    %c0_83 = arith.constant 0 : index
    %c0_84 = arith.constant 0 : index
    %115 = vector.load %arg25[%c0_83, %c0_84] : memref<64x4xf32, #tpu.memory_space<vmem>>, vector<64x4xf32>
    %c0_85 = arith.constant 0 : index
    %c0_86 = arith.constant 0 : index
    %116 = vector.load %arg26[%c0_85, %c0_86] : memref<4x8xf32, #tpu.memory_space<vmem>>, vector<4x8xf32>
    %cst_87 = arith.constant dense<0.000000e+00> : vector<64x8xf32>
    %117 = tpu.matmul %115, %116, %cst_87 {dimension_numbers = #tpu.dot_dimension_numbers<[1], [0], [0], [1], [0, 0, 1, 1], [], []>} : vector<64x4xf32>, vector<4x8xf32>, vector<64x8xf32> -> vector<64x8xf32>
    %c0_88 = arith.constant 0 : index
    %c0_89 = arith.constant 0 : index
    %118 = vector.load %arg27[%c0_88, %c0_89] : memref<1x8xf32, #tpu.memory_space<vmem>>, vector<1x8xf32>
    %119 = vector.broadcast %118 : vector<1x8xf32> to vector<64x8xf32>
    %120 = arith.addf %117, %119 : vector<64x8xf32>
    %cst_90 = arith.constant 0.000000e+00 : f32
    %121 = vector.broadcast %cst_90 : f32 to vector<64x8xf32>
    %122 = arith.cmpf oge, %120, %121 : vector<64x8xf32>
    %cst_91 = arith.constant 2.000000e-01 : f32
    %123 = vector.broadcast %cst_91 : f32 to vector<64x8xf32>
    %124 = arith.mulf %123, %120 : vector<64x8xf32>
    %125 = arith.select %122, %120, %124 : vector<64x8xi1>, vector<64x8xf32>
    %c0_92 = arith.constant 0 : index
    %c0_93 = arith.constant 0 : index
    %126 = vector.load %arg28[%c0_92, %c0_93] : memref<8x8xf32, #tpu.memory_space<vmem>>, vector<8x8xf32>
    %cst_94 = arith.constant dense<0.000000e+00> : vector<64x8xf32>
    %127 = tpu.matmul %125, %126, %cst_94 {dimension_numbers = #tpu.dot_dimension_numbers<[1], [0], [0], [1], [0, 0, 1, 1], [], []>} : vector<64x8xf32>, vector<8x8xf32>, vector<64x8xf32> -> vector<64x8xf32>
    %c0_95 = arith.constant 0 : index
    %c0_96 = arith.constant 0 : index
    %128 = vector.load %arg29[%c0_95, %c0_96] : memref<1x8xf32, #tpu.memory_space<vmem>>, vector<1x8xf32>
    %129 = vector.broadcast %128 : vector<1x8xf32> to vector<64x8xf32>
    %130 = arith.addf %127, %129 : vector<64x8xf32>
    %cst_97 = arith.constant 0.000000e+00 : f32
    %131 = vector.broadcast %cst_97 : f32 to vector<64x8xf32>
    %132 = arith.cmpf oge, %130, %131 : vector<64x8xf32>
    %cst_98 = arith.constant 2.000000e-01 : f32
    %133 = vector.broadcast %cst_98 : f32 to vector<64x8xf32>
    %134 = arith.mulf %133, %130 : vector<64x8xf32>
    %135 = arith.select %132, %130, %134 : vector<64x8xi1>, vector<64x8xf32>
    %c0_99 = arith.constant 0 : index
    %c0_100 = arith.constant 0 : index
    %136 = vector.load %arg30[%c0_99, %c0_100] : memref<8x16xf32, #tpu.memory_space<vmem>>, vector<8x16xf32>
    %cst_101 = arith.constant dense<0.000000e+00> : vector<64x16xf32>
    %137 = tpu.matmul %135, %136, %cst_101 {dimension_numbers = #tpu.dot_dimension_numbers<[1], [0], [0], [1], [0, 0, 1, 1], [], []>} : vector<64x8xf32>, vector<8x16xf32>, vector<64x16xf32> -> vector<64x16xf32>
    %c0_102 = arith.constant 0 : index
    %c0_103 = arith.constant 0 : index
    %138 = vector.load %arg31[%c0_102, %c0_103] : memref<1x16xf32, #tpu.memory_space<vmem>>, vector<1x16xf32>
    %139 = vector.broadcast %138 : vector<1x16xf32> to vector<64x16xf32>
    %140 = arith.addf %137, %139 : vector<64x16xf32>
    %cst_104 = arith.constant 0.000000e+00 : f32
    %141 = vector.broadcast %cst_104 : f32 to vector<64x16xf32>
    %142 = arith.cmpf oge, %140, %141 : vector<64x16xf32>
    %cst_105 = arith.constant 2.000000e-01 : f32
    %143 = vector.broadcast %cst_105 : f32 to vector<64x16xf32>
    %144 = arith.mulf %143, %140 : vector<64x16xf32>
    %145 = arith.select %142, %140, %144 : vector<64x16xi1>, vector<64x16xf32>
    %c0_106 = arith.constant 0 : index
    %c0_107 = arith.constant 0 : index
    %146 = vector.load %arg32[%c0_106, %c0_107] : memref<16x1xf32, #tpu.memory_space<vmem>>, vector<16x1xf32>
    %cst_108 = arith.constant dense<0.000000e+00> : vector<64x1xf32>
    %147 = tpu.matmul %145, %146, %cst_108 {dimension_numbers = #tpu.dot_dimension_numbers<[1], [0], [0], [1], [0, 0, 1, 1], [], []>} : vector<64x16xf32>, vector<16x1xf32>, vector<64x1xf32> -> vector<64x1xf32>
    %c0_109 = arith.constant 0 : index
    %c0_110 = arith.constant 0 : index
    %148 = vector.load %arg33[%c0_109, %c0_110] : memref<1x1xf32, #tpu.memory_space<vmem>>, vector<1x1xf32>
    %149 = vector.broadcast %148 : vector<1x1xf32> to vector<64x1xf32>
    %150 = arith.addf %147, %149 : vector<64x1xf32>
    %c0_111 = arith.constant 0 : index
    %c0_112 = arith.constant 0 : index
    %151 = vector.load %arg34[%c0_111, %c0_112] : memref<4x64xf32, #tpu.memory_space<vmem>>, vector<4x64xf32>
    %cst_113 = arith.constant dense<0.000000e+00> : vector<4x1xf32>
    %152 = tpu.matmul %151, %150, %cst_113 {dimension_numbers = #tpu.dot_dimension_numbers<[1], [0], [0], [1], [0, 0, 1, 1], [], []>} : vector<4x64xf32>, vector<64x1xf32>, vector<4x1xf32> -> vector<4x1xf32>
    %153 = arith.addf %114, %152 : vector<4x1xf32>
    %c0_114 = arith.constant 0 : index
    %c0_115 = arith.constant 0 : index
    %154 = vector.load %arg35[%c0_114, %c0_115] : memref<4x1xf32, #tpu.memory_space<vmem>>, vector<4x1xf32>
    tpu.vector_store %arg35[%c0_114, %c0_115], %153 {strides = array<i32>} : memref<4x1xf32, #tpu.memory_space<vmem>>, vector<4x1xf32>,
    return
  }
}

</mosaic_0001>

<llo_original>
// kernel: tpu_custom_call.1
$region0: #{tpu_custom_call.1}
  #allocation0 [shape = 'u32[]', space=smem, size = 0x4, offset = 0x4, fixed_abs, tag = 'smem constant byte address 0x4 - core index']
  #allocation1 [shape = 'u32[144,128]{1,0:T(1,128)}', space=vmem, size = 0x12000, scoped, tag = 'internal scratch']
  #allocation2 [shape = 'f32[1,1]{1,0:T(1,128)S(1)}', space=vmem, size = 0x200, scoped, tag = 'scoped memory for tpu_custom_call.1']
  #allocation3 [shape = 'f32[1,1]{1,0:T(1,128)S(1)}', space=vmem, size = 0x200, scoped, tag = 'scoped memory for tpu_custom_call.1']
  #allocation4 [shape = 'f32[1,1]{1,0:T(1,128)S(1)}', space=vmem, size = 0x200, scoped, tag = 'scoped memory for tpu_custom_call.1']
  %s0 = inlined_call_operand.smem [shape: u32[36], index: -1, kind: input, shape index: {}]
  %s1 = sld [smem:[%s0]]
  %s2 = scalar_lea.smem %s0, 1
  %s3 = sld [smem:[%s2]]
  %s4 = scalar_lea.smem %s0, 2
  %s5 = sld [smem:[%s4]]
  %s6 = scalar_lea.smem %s0, 3
  %s7 = sld [smem:[%s6]]
  %s8 = scalar_lea.smem %s0, 4
  %s9 = sld [smem:[%s8]]
  %s10 = scalar_lea.smem %s0, 5
  %s11 = sld [smem:[%s10]]
  %s12 = scalar_lea.smem %s0, 6
  %s13 = sld [smem:[%s12]]
  %s14 = scalar_lea.smem %s0, 7
  %s15 = sld [smem:[%s14]]
  %s16 = scalar_lea.smem %s0, 8
  %s17 = sld [smem:[%s16]]
  %s18 = scalar_lea.smem %s0, 9
  %s19 = sld [smem:[%s18]]
  %s20 = scalar_lea.smem %s0, 10
  %s21 = sld [smem:[%s20]]
  %s22 = scalar_lea.smem %s0, 11
  %s23 = sld [smem:[%s22]]
  %s24 = scalar_lea.smem %s0, 12
  %s25 = sld [smem:[%s24]]
  %s26 = scalar_lea.smem %s0, 13
  %s27 = sld [smem:[%s26]]
  %s28 = scalar_lea.smem %s0, 14
  %s29 = sld [smem:[%s28]]
  %s30 = scalar_lea.smem %s0, 15
  %s31 = sld [smem:[%s30]]
  %s32 = scalar_lea.smem %s0, 16
  %s33 = sld [smem:[%s32]]
  %s34 = scalar_lea.smem %s0, 17
  %s35 = sld [smem:[%s34]]
  %s36 = scalar_lea.smem %s0, 18
  %s37 = sld [smem:[%s36]]
  %s38 = scalar_lea.smem %s0, 19
  %s39 = sld [smem:[%s38]]
  %s40 = scalar_lea.smem %s0, 20
  %s41 = sld [smem:[%s40]]
  %s42 = scalar_lea.smem %s0, 21
  %s43 = sld [smem:[%s42]]
  %s44 = scalar_lea.smem %s0, 22
  %s45 = sld [smem:[%s44]]
  %s46 = scalar_lea.smem %s0, 23
  %s47 = sld [smem:[%s46]]
  %s48 = scalar_lea.smem %s0, 24
  %s49 = sld [smem:[%s48]]
  %s50 = scalar_lea.smem %s0, 25
  %s51 = sld [smem:[%s50]]
  %s52 = scalar_lea.smem %s0, 26
  %s53 = sld [smem:[%s52]]
  %s54 = scalar_lea.smem %s0, 27
  %s55 = sld [smem:[%s54]]
  %s56 = scalar_lea.smem %s0, 28
  %s57 = sld [smem:[%s56]]
  %s58 = scalar_lea.smem %s0, 29
  %s59 = sld [smem:[%s58]]
  %s60 = scalar_lea.smem %s0, 30
  %s61 = sld [smem:[%s60]]
  %s62 = scalar_lea.smem %s0, 31
  %s63 = sld [smem:[%s62]]
  %s64 = scalar_lea.smem %s0, 32
  %s65 = sld [smem:[%s64]]
  %s66 = scalar_lea.smem %s0, 33
  %s67 = sld [smem:[%s66]]
  %s68 = scalar_lea.smem %s0, 34
  %s69 = sld [smem:[%s68]]
  %s70 = scalar_lea.smem %s0, 35
  %s71 = sld [smem:[%s70]]
  %s72 = sld [smem:[#allocation0]]
  $region198: #{tpu_custom_call.1} parent=0
    _
  %s74 = ssub.s32 1, %s72
  %s75 = scalar_select 0, %s74, %s72
  %v76 = vstv %s23
  %77 = vst [vmem:[#allocation2] sm:$0x1] %v76
  %v78 = vstv %s47
  %79 = vst [vmem:[#allocation3] sm:$0x1] %v78
  %v80 = vstv %s67
  %81 = vst [vmem:[#allocation4] sm:$0x1] %v80
  $region1: #{tpu_custom_call.1} parent=0
    #allocation5 [shape = 'u8[2048]{0}', space=vmem, size = 0x800, scoped, tag = 'input window, operand 0, single buffered']
    #allocation6 [shape = 's32[1]{0}', space=sflag, size = 0x4, scoped, tag = 'scoped memory for tpu_custom_call.1']
    #allocation7 [shape = 'u8[1024]{0}', space=vmem, size = 0x400, scoped, tag = 'input window, operand 2, single buffered']
    #allocation8 [shape = 's32[1]{0}', space=sflag, size = 0x4, scoped, tag = 'scoped memory for tpu_custom_call.1']
    #allocation9 [shape = 'u8[1024]{0}', space=vmem, size = 0x400, scoped, tag = 'input window, operand 4, single buffered']
    #allocation10 [shape = 'u8[1024]{0}', space=vmem, size = 0x400, scoped, tag = 'input window, operand 5, single buffered']
    #allocation11 [shape = 's32[1]{0}', space=sflag, size = 0x4, scoped, tag = 'scoped memory for tpu_custom_call.1']
    #allocation12 [shape = 'u8[512]{0}', space=vmem, size = 0x400, scoped, tag = 'input window, operand 6, single buffered']
    #allocation13 [shape = 'u8[512]{0}', space=vmem, size = 0x400, scoped, tag = 'input window, operand 9, single buffered']
    #allocation14 [shape = 's32[1]{0}', space=sflag, size = 0x4, scoped, tag = 'scoped memory for tpu_custom_call.1']
    #allocation15 [shape = 'u8[512]{0}', space=vmem, size = 0x400, scoped, tag = 'input window, operand 14, single buffered']
    #allocation16 [shape = 'u8[65536]{0}', space=vmem, size = 0x10000, scoped, tag = 'input window, operand 15, single buffered']
    #allocation17 [shape = 's32[1]{0}', space=sflag, size = 0x4, scoped, tag = 'scoped memory for tpu_custom_call.1']
    #allocation18 [shape = 'u8[512]{0}', space=vmem, size = 0x400, scoped, tag = 'input window, operand 16, single buffered']
    #allocation19 [shape = 'u8[512]{0}', space=vmem, size = 0x400, scoped, tag = 'input window, operand 17, single buffered']
    #allocation20 [shape = 's32[1]{0}', space=sflag, size = 0x4, scoped, tag = 'scoped memory for tpu_custom_call.1']
    #allocation21 [shape = 'u8[512]{0}', space=vmem, size = 0x400, scoped, tag = 'input window, operand 21, single buffered']
    #allocation22 [shape = 'u8[512]{0}', space=vmem, size = 0x400, scoped, tag = 'input window, operand 27, single buffered']
    #allocation23 [shape = 's32[1]{0}', space=sflag, size = 0x4, scoped, tag = 'scoped memory for tpu_custom_call.1']
    %82 = vsyncpa [#allocation6], 0
    %83 = vsyncpa [#allocation8], 0
    %84 = vsyncpa [#allocation11], 0
    %85 = vsyncpa [#allocation14], 0
    %86 = vsyncpa [#allocation17], 0
    %87 = vsyncpa [#allocation20], 0
    %88 = vsyncpa [#allocation23], 0
    // Predicated region
    $region2: #{tpu_custom_call.1} parent=1 // pred_check
      _
    $region3: #{tpu_custom_call.1} parent=1 // pred_check_branch
      %90 = sbr.rel (0) target = $region5
    $region4: #{tpu_custom_call.1} parent=1 // pred_region
      %s92 = ssub.s32 64, 64
      %93 = vsyncadd [#allocation6], %s92
      %s95 = sshll.u32 [#allocation5], 4
      %s96 = int_to_ptr.vmem [resolvable:$true] %s95
      %98 = dma.hbm_to_vmem [thread:$0]  %s1, 64, %s96, [#allocation6]
    $region5: #{tpu_custom_call.1} parent=1 // pred_fallthru
      _
    // Predicated region
    $region6: #{tpu_custom_call.1} parent=1 // pred_check
      _
    $region7: #{tpu_custom_call.1} parent=1 // pred_check_branch
      %100 = sbr.rel (0) target = $region9
    $region8: #{tpu_custom_call.1} parent=1 // pred_region
      _
    $region9: #{tpu_custom_call.1} parent=1 // pred_fallthru
      _
    // Predicated region
    $region10: #{tpu_custom_call.1} parent=1 // pred_check
      _
    $region11: #{tpu_custom_call.1} parent=1 // pred_check_branch
      %102 = sbr.rel (0) target = $region13
    $region12: #{tpu_custom_call.1} parent=1 // pred_region
      %s104 = ssub.s32 32, 32
      %105 = vsyncadd [#allocation8], %s104
      %s107 = sshll.u32 [#allocation7], 4
      %s108 = int_to_ptr.vmem [resolvable:$true] %s107
      %110 = dma.hbm_to_vmem [thread:$0]  %s5, 32, %s108, [#allocation8]
    $region13: #{tpu_custom_call.1} parent=1 // pred_fallthru
      _
    // Predicated region
    $region14: #{tpu_custom_call.1} parent=1 // pred_check
      _
    $region15: #{tpu_custom_call.1} parent=1 // pred_check_branch
      %112 = sbr.rel (0) target = $region17
    $region16: #{tpu_custom_call.1} parent=1 // pred_region
      _
    $region17: #{tpu_custom_call.1} parent=1 // pred_fallthru
      _
    // Predicated region
    $region18: #{tpu_custom_call.1} parent=1 // pred_check
      _
    $region19: #{tpu_custom_call.1} parent=1 // pred_check_branch
      %114 = sbr.rel (0) target = $region21
    $region20: #{tpu_custom_call.1} parent=1 // pred_region
      %s116 = ssub.s32 32, 32
      %117 = vsyncadd [#allocation8], %s116
      %s119 = sshll.u32 [#allocation9], 4
      %s120 = int_to_ptr.vmem [resolvable:$true] %s119
      %122 = dma.hbm_to_vmem [thread:$0]  %s9, 32, %s120, [#allocation8]
    $region21: #{tpu_custom_call.1} parent=1 // pred_fallthru
      _
    // Predicated region
    $region22: #{tpu_custom_call.1} parent=1 // pred_check
      _
    $region23: #{tpu_custom_call.1} parent=1 // pred_check_branch
      %124 = sbr.rel (0) target = $region25
    $region24: #{tpu_custom_call.1} parent=1 // pred_region
      %s126 = ssub.s32 32, 32
      %127 = vsyncadd [#allocation11], %s126
      %s129 = sshll.u32 [#allocation10], 4
      %s130 = int_to_ptr.vmem [resolvable:$true] %s129
      %132 = dma.hbm_to_vmem [thread:$0]  %s11, 32, %s130, [#allocation11]
    $region25: #{tpu_custom_call.1} parent=1 // pred_fallthru
      _
    // Predicated region
    $region26: #{tpu_custom_call.1} parent=1 // pred_check
      _
    $region27: #{tpu_custom_call.1} parent=1 // pred_check_branch
      %134 = sbr.rel (0) target = $region29
    $region28: #{tpu_custom_call.1} parent=1 // pred_region
      %s136 = ssub.s32 16, 16
      %137 = vsyncadd [#allocation11], %s136
      %s139 = sshll.u32 [#allocation12], 4
      %s140 = int_to_ptr.vmem [resolvable:$true] %s139
      %142 = dma.hbm_to_vmem [thread:$0]  %s13, 16, %s140, [#allocation11]
    $region29: #{tpu_custom_call.1} parent=1 // pred_fallthru
      _
    // Predicated region
    $region30: #{tpu_custom_call.1} parent=1 // pred_check
      _
    $region31: #{tpu_custom_call.1} parent=1 // pred_check_branch
      %144 = sbr.rel (0) target = $region33
    $region32: #{tpu_custom_call.1} parent=1 // pred_region
      _
    $region33: #{tpu_custom_call.1} parent=1 // pred_fallthru
      _
    // Predicated region
    $region34: #{tpu_custom_call.1} parent=1 // pred_check
      _
    $region35: #{tpu_custom_call.1} parent=1 // pred_check_branch
      %146 = sbr.rel (0) target = $region37
    $region36: #{tpu_custom_call.1} parent=1 // pred_region
      _
    $region37: #{tpu_custom_call.1} parent=1 // pred_fallthru
      _
    // Predicated region
    $region38: #{tpu_custom_call.1} parent=1 // pred_check
      _
    $region39: #{tpu_custom_call.1} parent=1 // pred_check_branch
      %148 = sbr.rel (0) target = $region41
    $region40: #{tpu_custom_call.1} parent=1 // pred_region
      %s150 = ssub.s32 16, 16
      %151 = vsyncadd [#allocation14], %s150
      %s153 = sshll.u32 [#allocation13], 4
      %s154 = int_to_ptr.vmem [resolvable:$true] %s153
      %156 = dma.hbm_to_vmem [thread:$0]  %s19, 16, %s154, [#allocation14]
    $region41: #{tpu_custom_call.1} parent=1 // pred_fallthru
      _
    // Predicated region
    $region42: #{tpu_custom_call.1} parent=1 // pred_check
      _
    $region43: #{tpu_custom_call.1} parent=1 // pred_check_branch
      %158 = sbr.rel (0) target = $region45
    $region44: #{tpu_custom_call.1} parent=1 // pred_region
      _
    $region45: #{tpu_custom_call.1} parent=1 // pred_fallthru
      _
    // Predicated region
    $region46: #{tpu_custom_call.1} parent=1 // pred_check
      _
    $region47: #{tpu_custom_call.1} parent=1 // pred_check_branch
      %160 = sbr.rel (0) target = $region49
    $region48: #{tpu_custom_call.1} parent=1 // pred_region
      _
    $region49: #{tpu_custom_call.1} parent=1 // pred_fallthru
      _
    // Predicated region
    $region50: #{tpu_custom_call.1} parent=1 // pred_check
      _
    $region51: #{tpu_custom_call.1} parent=1 // pred_check_branch
      %162 = sbr.rel (0) target = $region53
    $region52: #{tpu_custom_call.1} parent=1 // pred_region
      _
    $region53: #{tpu_custom_call.1} parent=1 // pred_fallthru
      _
    // Predicated region
    $region54: #{tpu_custom_call.1} parent=1 // pred_check
      _
    $region55: #{tpu_custom_call.1} parent=1 // pred_check_branch
      %164 = sbr.rel (0) target = $region57
    $region56: #{tpu_custom_call.1} parent=1 // pred_region
      _
    $region57: #{tpu_custom_call.1} parent=1 // pred_fallthru
      _
    // Predicated region
    $region58: #{tpu_custom_call.1} parent=1 // pred_check
      _
    $region59: #{tpu_custom_call.1} parent=1 // pred_check_branch
      %166 = sbr.rel (0) target = $region61
    $region60: #{tpu_custom_call.1} parent=1 // pred_region
      %s168 = ssub.s32 16, 16
      %169 = vsyncadd [#allocation14], %s168
      %s171 = sshll.u32 [#allocation15], 4
      %s172 = int_to_ptr.vmem [resolvable:$true] %s171
      %174 = dma.hbm_to_vmem [thread:$0]  %s29, 16, %s172, [#allocation14]
    $region61: #{tpu_custom_call.1} parent=1 // pred_fallthru
      _
    // Predicated region
    $region62: #{tpu_custom_call.1} parent=1 // pred_check
      _
    $region63: #{tpu_custom_call.1} parent=1 // pred_check_branch
      %176 = sbr.rel (0) target = $region65
    $region64: #{tpu_custom_call.1} parent=1 // pred_region
      %s178 = ssub.s32 2048, 2048
      %179 = vsyncadd [#allocation17], %s178
      %s180 = sshll.u32 [#allocation16], 4
      %s181 = int_to_ptr.vmem [resolvable:$true] %s180
      %186 = dma.hbm_to_vmem [thread:$0]  %s31, 2048, %s181, [#allocation17], 128, 128, 8
    $region65: #{tpu_custom_call.1} parent=1 // pred_fallthru
      _
    // Predicated region
    $region66: #{tpu_custom_call.1} parent=1 // pred_check
      _
    $region67: #{tpu_custom_call.1} parent=1 // pred_check_branch
      %188 = sbr.rel (0) target = $region69
    $region68: #{tpu_custom_call.1} parent=1 // pred_region
      %s190 = ssub.s32 16, 16
      %191 = vsyncadd [#allocation17], %s190
      %s193 = sshll.u32 [#allocation18], 4
      %s194 = int_to_ptr.vmem [resolvable:$true] %s193
      %196 = dma.hbm_to_vmem [thread:$0]  %s33, 16, %s194, [#allocation17]
    $region69: #{tpu_custom_call.1} parent=1 // pred_fallthru
      _
    // Predicated region
    $region70: #{tpu_custom_call.1} parent=1 // pred_check
      _
    $region71: #{tpu_custom_call.1} parent=1 // pred_check_branch
      %198 = sbr.rel (0) target = $region73
    $region72: #{tpu_custom_call.1} parent=1 // pred_region
      %s200 = ssub.s32 16, 16
      %201 = vsyncadd [#allocation20], %s200
      %s203 = sshll.u32 [#allocation19], 4
      %s204 = int_to_ptr.vmem [resolvable:$true] %s203
      %206 = dma.hbm_to_vmem [thread:$0]  %s35, 16, %s204, [#allocation20]
    $region73: #{tpu_custom_call.1} parent=1 // pred_fallthru
      _
    // Predicated region
    $region74: #{tpu_custom_call.1} parent=1 // pred_check
      _
    $region75: #{tpu_custom_call.1} parent=1 // pred_check_branch
      %208 = sbr.rel (0) target = $region77
    $region76: #{tpu_custom_call.1} parent=1 // pred_region
      _
    $region77: #{tpu_custom_call.1} parent=1 // pred_fallthru
      _
    // Predicated region
    $region78: #{tpu_custom_call.1} parent=1 // pred_check
      _
    $region79: #{tpu_custom_call.1} parent=1 // pred_check_branch
      %210 = sbr.rel (0) target = $region81
    $region80: #{tpu_custom_call.1} parent=1 // pred_region
      _
    $region81: #{tpu_custom_call.1} parent=1 // pred_fallthru
      _
    // Predicated region
    $region82: #{tpu_custom_call.1} parent=1 // pred_check
      _
    $region83: #{tpu_custom_call.1} parent=1 // pred_check_branch
      %212 = sbr.rel (0) target = $region85
    $region84: #{tpu_custom_call.1} parent=1 // pred_region
      _
    $region85: #{tpu_custom_call.1} parent=1 // pred_fallthru
      _
    // Predicated region
    $region86: #{tpu_custom_call.1} parent=1 // pred_check
      _
    $region87: #{tpu_custom_call.1} parent=1 // pred_check_branch
      %214 = sbr.rel (0) target = $region89
    $region88: #{tpu_custom_call.1} parent=1 // pred_region
      %s216 = ssub.s32 16, 16
      %217 = vsyncadd [#allocation20], %s216
      %s219 = sshll.u32 [#allocation21], 4
      %s220 = int_to_ptr.vmem [resolvable:$true] %s219
      %222 = dma.hbm_to_vmem [thread:$0]  %s43, 16, %s220, [#allocation20]
    $region89: #{tpu_custom_call.1} parent=1 // pred_fallthru
      _
    // Predicated region
    $region90: #{tpu_custom_call.1} parent=1 // pred_check
      _
    $region91: #{tpu_custom_call.1} parent=1 // pred_check_branch
      %224 = sbr.rel (0) target = $region93
    $region92: #{tpu_custom_call.1} parent=1 // pred_region
      _
    $region93: #{tpu_custom_call.1} parent=1 // pred_fallthru
      _
    // Predicated region
    $region94: #{tpu_custom_call.1} parent=1 // pred_check
      _
    $region95: #{tpu_custom_call.1} parent=1 // pred_check_branch
      %226 = sbr.rel (0) target = $region97
    $region96: #{tpu_custom_call.1} parent=1 // pred_region
      _
    $region97: #{tpu_custom_call.1} parent=1 // pred_fallthru
      _
    // Predicated region
    $region98: #{tpu_custom_call.1} parent=1 // pred_check
      _
    $region99: #{tpu_custom_call.1} parent=1 // pred_check_branch
      %228 = sbr.rel (0) target = $region101
    $region100: #{tpu_custom_call.1} parent=1 // pred_region
      _
    $region101: #{tpu_custom_call.1} parent=1 // pred_fallthru
      _
    // Predicated region
    $region102: #{tpu_custom_call.1} parent=1 // pred_check
      _
    $region103: #{tpu_custom_call.1} parent=1 // pred_check_branch
      %230 = sbr.rel (0) target = $region105
    $region104: #{tpu_custom_call.1} parent=1 // pred_region
      _
    $region105: #{tpu_custom_call.1} parent=1 // pred_fallthru
      _
    // Predicated region
    $region106: #{tpu_custom_call.1} parent=1 // pred_check
      _
    $region107: #{tpu_custom_call.1} parent=1 // pred_check_branch
      %232 = sbr.rel (0) target = $region109
    $region108: #{tpu_custom_call.1} parent=1 // pred_region
      _
    $region109: #{tpu_custom_call.1} parent=1 // pred_fallthru
      _
    // Predicated region
    $region110: #{tpu_custom_call.1} parent=1 // pred_check
      _
    $region111: #{tpu_custom_call.1} parent=1 // pred_check_branch
      %234 = sbr.rel (0) target = $region113
    $region112: #{tpu_custom_call.1} parent=1 // pred_region
      %s236 = ssub.s32 16, 16
      %237 = vsyncadd [#allocation23], %s236
      %s239 = sshll.u32 [#allocation22], 4
      %s240 = int_to_ptr.vmem [resolvable:$true] %s239
      %242 = dma.hbm_to_vmem [thread:$0]  %s55, 16, %s240, [#allocation23]
    $region113: #{tpu_custom_call.1} parent=1 // pred_fallthru
      _
    // Predicated region
    $region114: #{tpu_custom_call.1} parent=1 // pred_check
      _
    $region115: #{tpu_custom_call.1} parent=1 // pred_check_branch
      %244 = sbr.rel (0) target = $region117
    $region116: #{tpu_custom_call.1} parent=1 // pred_region
      _
    $region117: #{tpu_custom_call.1} parent=1 // pred_fallthru
      _
    // Predicated region
    $region118: #{tpu_custom_call.1} parent=1 // pred_check
      _
    $region119: #{tpu_custom_call.1} parent=1 // pred_check_branch
      %246 = sbr.rel (0) target = $region121
    $region120: #{tpu_custom_call.1} parent=1 // pred_region
      _
    $region121: #{tpu_custom_call.1} parent=1 // pred_fallthru
      _
    // Predicated region
    $region122: #{tpu_custom_call.1} parent=1 // pred_check
      _
    $region123: #{tpu_custom_call.1} parent=1 // pred_check_branch
      %248 = sbr.rel (0) target = $region125
    $region124: #{tpu_custom_call.1} parent=1 // pred_region
      _
    $region125: #{tpu_custom_call.1} parent=1 // pred_fallthru
      _
    // Predicated region
    $region126: #{tpu_custom_call.1} parent=1 // pred_check
      _
    $region127: #{tpu_custom_call.1} parent=1 // pred_check_branch
      %250 = sbr.rel (0) target = $region129
    $region128: #{tpu_custom_call.1} parent=1 // pred_region
      _
    $region129: #{tpu_custom_call.1} parent=1 // pred_fallthru
      _
    // Predicated region
    $region130: #{tpu_custom_call.1} parent=1 // pred_check
      _
    $region131: #{tpu_custom_call.1} parent=1 // pred_check_branch
      %252 = sbr.rel (0) target = $region133
    $region132: #{tpu_custom_call.1} parent=1 // pred_region
      _
    $region133: #{tpu_custom_call.1} parent=1 // pred_fallthru
      _
    // Predicated region
    $region134: #{tpu_custom_call.1} parent=1 // pred_check
      _
    $region135: #{tpu_custom_call.1} parent=1 // pred_check_branch
      %254 = sbr.rel (0) target = $region137
    $region136: #{tpu_custom_call.1} parent=1 // pred_region
      _
    $region137: #{tpu_custom_call.1} parent=1 // pred_fallthru
      _
    // Predicated region
    $region138: #{tpu_custom_call.1} parent=1 // pred_check
      _
    $region139: #{tpu_custom_call.1} parent=1 // pred_check_branch
      %256 = sbr.rel (0) target = $region141
    $region140: #{tpu_custom_call.1} parent=1 // pred_region
      _
    $region141: #{tpu_custom_call.1} parent=1 // pred_fallthru
      _
    // Predicated region
    $region142: #{tpu_custom_call.1} parent=1 // pred_check
      _
    $region143: #{tpu_custom_call.1} parent=1 // pred_check_branch
      %258 = sbr.rel (0) target = $region145
    $region144: #{tpu_custom_call.1} parent=1 // pred_region
      %259 = dma.done [#allocation6], 64
    $region145: #{tpu_custom_call.1} parent=1 // pred_fallthru
      _
    // Predicated region
    $region146: #{tpu_custom_call.1} parent=1 // pred_check
      _
    $region147: #{tpu_custom_call.1} parent=1 // pred_check_branch
      %261 = sbr.rel (0) target = $region149
    $region148: #{tpu_custom_call.1} parent=1 // pred_region
      %262 = dma.done [#allocation8], 32
    $region149: #{tpu_custom_call.1} parent=1 // pred_fallthru
      _
    // Predicated region
    $region150: #{tpu_custom_call.1} parent=1 // pred_check
      _
    $region151: #{tpu_custom_call.1} parent=1 // pred_check_branch
      %264 = sbr.rel (0) target = $region153
    $region152: #{tpu_custom_call.1} parent=1 // pred_region
      %265 = dma.done [#allocation8], 32
    $region153: #{tpu_custom_call.1} parent=1 // pred_fallthru
      _
    // Predicated region
    $region154: #{tpu_custom_call.1} parent=1 // pred_check
      _
    $region155: #{tpu_custom_call.1} parent=1 // pred_check_branch
      %267 = sbr.rel (0) target = $region157
    $region156: #{tpu_custom_call.1} parent=1 // pred_region
      %268 = dma.done [#allocation11], 32
    $region157: #{tpu_custom_call.1} parent=1 // pred_fallthru
      _
    // Predicated region
    $region158: #{tpu_custom_call.1} parent=1 // pred_check
      _
    $region159: #{tpu_custom_call.1} parent=1 // pred_check_branch
      %270 = sbr.rel (0) target = $region161
    $region160: #{tpu_custom_call.1} parent=1 // pred_region
      %271 = dma.done [#allocation11], 16
    $region161: #{tpu_custom_call.1} parent=1 // pred_fallthru
      _
    // Predicated region
    $region162: #{tpu_custom_call.1} parent=1 // pred_check
      _
    $region163: #{tpu_custom_call.1} parent=1 // pred_check_branch
      %273 = sbr.rel (0) target = $region165
    $region164: #{tpu_custom_call.1} parent=1 // pred_region
      %274 = dma.done [#allocation14], 16
    $region165: #{tpu_custom_call.1} parent=1 // pred_fallthru
      _
    // Predicated region
    $region166: #{tpu_custom_call.1} parent=1 // pred_check
      _
    $region167: #{tpu_custom_call.1} parent=1 // pred_check_branch
      %276 = sbr.rel (0) target = $region169
    $region168: #{tpu_custom_call.1} parent=1 // pred_region
      %277 = dma.done [#allocation14], 16
    $region169: #{tpu_custom_call.1} parent=1 // pred_fallthru
      _
    // Predicated region
    $region170: #{tpu_custom_call.1} parent=1 // pred_check
      _
    $region171: #{tpu_custom_call.1} parent=1 // pred_check_branch
      %279 = sbr.rel (0) target = $region173
    $region172: #{tpu_custom_call.1} parent=1 // pred_region
      %280 = dma.done [#allocation17], 2048
    $region173: #{tpu_custom_call.1} parent=1 // pred_fallthru
      _
    // Predicated region
    $region174: #{tpu_custom_call.1} parent=1 // pred_check
      _
    $region175: #{tpu_custom_call.1} parent=1 // pred_check_branch
      %282 = sbr.rel (0) target = $region177
    $region176: #{tpu_custom_call.1} parent=1 // pred_region
      %283 = dma.done [#allocation17], 16
    $region177: #{tpu_custom_call.1} parent=1 // pred_fallthru
      _
    // Predicated region
    $region178: #{tpu_custom_call.1} parent=1 // pred_check
      _
    $region179: #{tpu_custom_call.1} parent=1 // pred_check_branch
      %285 = sbr.rel (0) target = $region181
    $region180: #{tpu_custom_call.1} parent=1 // pred_region
      %286 = dma.done [#allocation20], 16
    $region181: #{tpu_custom_call.1} parent=1 // pred_fallthru
      _
    // Predicated region
    $region182: #{tpu_custom_call.1} parent=1 // pred_check
      _
    $region183: #{tpu_custom_call.1} parent=1 // pred_check_branch
      %288 = sbr.rel (0) target = $region185
    $region184: #{tpu_custom_call.1} parent=1 // pred_region
      %289 = dma.done [#allocation20], 16
    $region185: #{tpu_custom_call.1} parent=1 // pred_fallthru
      _
    // Predicated region
    $region186: #{tpu_custom_call.1} parent=1 // pred_check
      _
    $region187: #{tpu_custom_call.1} parent=1 // pred_check_branch
      %291 = sbr.rel (0) target = $region189
    $region188: #{tpu_custom_call.1} parent=1 // pred_region
      %292 = dma.done [#allocation23], 16
    $region189: #{tpu_custom_call.1} parent=1 // pred_fallthru
      _
    %v293 = vld [vmem:[#allocation5] sm:$0xf]
    %v294 = vld [vmem:[%s3] sm:$0xff]
    %v295 = vld [vmem:[%s3 + $0x8] sm:$0xff]
    %v296 = vld [vmem:[%s3 + $0x10] sm:$0xff]
    %v297 = vld [vmem:[%s3 + $0x18] sm:$0xff]
    %v298 = vld [vmem:[%s3 + $0x20] sm:$0xff]
    %v299 = vld [vmem:[%s3 + $0x28] sm:$0xff]
    %v300 = vld [vmem:[%s3 + $0x30] sm:$0xff]
    %v301 = vld [vmem:[%s3 + $0x38] sm:$0xff]
    %v302 = vld [vmem:[%s3 + $0x40] sm:$0xff]
    %v303 = vld [vmem:[%s3 + $0x48] sm:$0xff]
    %v304 = vld [vmem:[%s3 + $0x50] sm:$0xff]
    %v305 = vld [vmem:[%s3 + $0x58] sm:$0xff]
    %v306 = vld [vmem:[%s3 + $0x60] sm:$0xff]
    %v307 = vld [vmem:[%s3 + $0x68] sm:$0xff]
    %v308 = vld [vmem:[%s3 + $0x70] sm:$0xff]
    %v309 = vld [vmem:[%s3 + $0x78] sm:$0xff]
    %v310 = vld [vmem:[#allocation7] sm:$0x3]
    %v312 = vlaneseq
    %v313 = vshrl.u32 %v312, 7
    %v314 = vsub.s32 0, %v313
    %v315 = vrot.slane %v310, %v314
    %v316 = vlaneseq
    %v317 = vshrl.u32 %v316, 7
    %v318 = vsub.s32 1, %v317
    %v319 = vrot.slane %v310, %v318
    %vm322 = vcmask 523264
    %v324 = vsel %vm322, %v293, 0
    %326 = vmatprep.subr.mxu0 %v295
    %327 = vmatpush1.msra.mxu0 %v294
    %328 = vmatprep.subr.mxu0 %v297
    %329 = vmatpush1.msra.mxu0 %v296
    %330 = vmatprep.subr.mxu0 %v299
    %331 = vmatpush1.msra.mxu0 %v298
    %332 = vmatprep.subr.mxu0 %v301
    %333 = vmatpush1.msra.mxu0 %v300
    %334 = vmatprep.subr.mxu0 %v303
    %335 = vmatpush1.msra.mxu0 %v302
    %336 = vmatprep.subr.mxu0 %v305
    %337 = vmatpush1.msra.mxu0 %v304
    %338 = vmatprep.subr.mxu0 %v307
    %339 = vmatpush1.msra.mxu0 %v306
    %340 = vmatprep.subr.mxu0 %v309
    %341 = vmatpush1.msra.mxu0 %v308
    %342 = vmatprep.subr.mxu0 0.0
    %343 = vmatpush1.msra.mxu0 0.0
    %344 = vmatprep.subr.mxu0 0.0
    %345 = vmatpush1.msra.mxu0 0.0
    %346 = vmatprep.subr.mxu0 0.0
    %347 = vmatpush1.msra.mxu0 0.0
    %348 = vmatprep.subr.mxu0 0.0
    %349 = vmatpush1.msra.mxu0 0.0
    %350 = vmatprep.subr.mxu0 0.0
    %351 = vmatpush1.msra.mxu0 0.0
    %352 = vmatprep.subr.mxu0 0.0
    %353 = vmatpush1.msra.mxu0 0.0
    %354 = vmatprep.subr.mxu0 0.0
    %355 = vmatpush1.msra.mxu0 0.0
    %356 = vmatprep.subr.mxu0 0.0
    %357 = vmatpush1.msra.mxu0 0.0
    %358 = vmatprep.subr.mxu0 0.0
    %359 = vmatpush1.msra.mxu0 0.0
    %360 = vmatprep.subr.mxu0 0.0
    %361 = vmatpush1.msra.mxu0 0.0
    %362 = vmatprep.subr.mxu0 0.0
    %363 = vmatpush1.msra.mxu0 0.0
    %364 = vmatprep.subr.mxu0 0.0
    %365 = vmatpush1.msra.mxu0 0.0
    %366 = vmatprep.subr.mxu0 0.0
    %367 = vmatpush1.msra.mxu0 0.0
    %368 = vmatprep.subr.mxu0 0.0
    %369 = vmatpush1.msra.mxu0 0.0
    %370 = vmatprep.subr.mxu0 0.0
    %371 = vmatpush1.msra.mxu0 0.0
    %372 = vmatprep.subr.mxu0 0.0
    %373 = vmatpush1.msra.mxu0 0.0
    %374 = vmatprep.subr.mxu0 0.0
    %375 = vmatpush1.msra.mxu0 0.0
    %376 = vmatprep.subr.mxu0 0.0
    %377 = vmatpush1.msra.mxu0 0.0
    %378 = vmatprep.subr.mxu0 0.0
    %379 = vmatpush1.msra.mxu0 0.0
    %380 = vmatprep.subr.mxu0 0.0
    %381 = vmatpush1.msra.mxu0 0.0
    %382 = vmatprep.subr.mxu0 0.0
    %383 = vmatpush1.msra.mxu0 0.0
    %384 = vmatprep.subr.mxu0 0.0
    %385 = vmatpush1.msra.mxu0 0.0
    %386 = vmatprep.subr.mxu0 0.0
    %387 = vmatpush1.msra.mxu0 0.0
    %388 = vmatprep.subr.mxu0 0.0
    %389 = vmatpush1.msra.mxu0 0.0
    %390 = vmatprep.mubr.f32.mxu0 0.0
    %391 = vmatmul.mubr.f32.gmra.mrb[0].mxu0 %v324
    %v392 = vpop.f32.mrb[0].mxu0
    %v393 = vadd.f32 %v315, %v392
    %v394 = vpop.f32.mrb[0].mxu0
    %v395 = vadd.f32 %v319, %v394
    %396 = vdwg.mxu0
    %vm397 = vcmp.ge.f32.partialorder %v393, 0.0
    %vm398 = vcmp.ge.f32.partialorder %v395, 0.0
    %v399 = vmul.f32 %v393, 0.2
    %v400 = vmul.f32 %v395, 0.2
    %v401 = vsel %vm397, %v393, %v399
    %v402 = vsel %vm398, %v395, %v400
    %v403 = vld [vmem:[%s7] sm:$0xff]
    %v404 = vld [vmem:[%s7 + $0x8] sm:$0xff]
    %v405 = vld [vmem:[%s7 + $0x10] sm:$0xff]
    %v406 = vld [vmem:[%s7 + $0x18] sm:$0xff]
    %v407 = vld [vmem:[%s7 + $0x20] sm:$0xff]
    %v408 = vld [vmem:[%s7 + $0x28] sm:$0xff]
    %v409 = vld [vmem:[%s7 + $0x30] sm:$0xff]
    %v410 = vld [vmem:[%s7 + $0x38] sm:$0xff]
    %v411 = vld [vmem:[%s7 + $0x40] sm:$0xff]
    %v412 = vld [vmem:[%s7 + $0x48] sm:$0xff]
    %v413 = vld [vmem:[%s7 + $0x50] sm:$0xff]
    %v414 = vld [vmem:[%s7 + $0x58] sm:$0xff]
    %v415 = vld [vmem:[%s7 + $0x60] sm:$0xff]
    %v416 = vld [vmem:[%s7 + $0x68] sm:$0xff]
    %v417 = vld [vmem:[%s7 + $0x70] sm:$0xff]
    %v418 = vld [vmem:[%s7 + $0x78] sm:$0xff]
    %v419 = vld [vmem:[%s7 + $0x80] sm:$0xff]
    %v420 = vld [vmem:[%s7 + $0x88] sm:$0xff]
    %v421 = vld [vmem:[%s7 + $0x90] sm:$0xff]
    %v422 = vld [vmem:[%s7 + $0x98] sm:$0xff]
    %v423 = vld [vmem:[%s7 + $0xa0] sm:$0xff]
    %v424 = vld [vmem:[%s7 + $0xa8] sm:$0xff]
    %v425 = vld [vmem:[%s7 + $0xb0] sm:$0xff]
    %v426 = vld [vmem:[%s7 + $0xb8] sm:$0xff]
    %v427 = vld [vmem:[%s7 + $0xc0] sm:$0xff]
    %v428 = vld [vmem:[%s7 + $0xc8] sm:$0xff]
    %v429 = vld [vmem:[%s7 + $0xd0] sm:$0xff]
    %v430 = vld [vmem:[%s7 + $0xd8] sm:$0xff]
    %v431 = vld [vmem:[%s7 + $0xe0] sm:$0xff]
    %v432 = vld [vmem:[%s7 + $0xe8] sm:$0xff]
    %v433 = vld [vmem:[%s7 + $0xf0] sm:$0xff]
    %v434 = vld [vmem:[%s7 + $0xf8] sm:$0xff]
    %v435 = vld [vmem:[%s7 + $0x100] sm:$0xff]
    %v436 = vld [vmem:[%s7 + $0x108] sm:$0xff]
    %v437 = vld [vmem:[%s7 + $0x110] sm:$0xff]
    %v438 = vld [vmem:[%s7 + $0x118] sm:$0xff]
    %v439 = vld [vmem:[%s7 + $0x120] sm:$0xff]
    %v440 = vld [vmem:[%s7 + $0x128] sm:$0xff]
    %v441 = vld [vmem:[%s7 + $0x130] sm:$0xff]
    %v442 = vld [vmem:[%s7 + $0x138] sm:$0xff]
    %v443 = vld [vmem:[%s7 + $0x140] sm:$0xff]
    %v444 = vld [vmem:[%s7 + $0x148] sm:$0xff]
    %v445 = vld [vmem:[%s7 + $0x150] sm:$0xff]
    %v446 = vld [vmem:[%s7 + $0x158] sm:$0xff]
    %v447 = vld [vmem:[%s7 + $0x160] sm:$0xff]
    %v448 = vld [vmem:[%s7 + $0x168] sm:$0xff]
    %v449 = vld [vmem:[%s7 + $0x170] sm:$0xff]
    %v450 = vld [vmem:[%s7 + $0x178] sm:$0xff]
    %v451 = vld [vmem:[%s7 + $0x180] sm:$0xff]
    %v452 = vld [vmem:[%s7 + $0x188] sm:$0xff]
    %v453 = vld [vmem:[%s7 + $0x190] sm:$0xff]
    %v454 = vld [vmem:[%s7 + $0x198] sm:$0xff]
    %v455 = vld [vmem:[%s7 + $0x1a0] sm:$0xff]
    %v456 = vld [vmem:[%s7 + $0x1a8] sm:$0xff]
    %v457 = vld [vmem:[%s7 + $0x1b0] sm:$0xff]
    %v458 = vld [vmem:[%s7 + $0x1b8] sm:$0xff]
    %v459 = vld [vmem:[%s7 + $0x1c0] sm:$0xff]
    %v460 = vld [vmem:[%s7 + $0x1c8] sm:$0xff]
    %v461 = vld [vmem:[%s7 + $0x1d0] sm:$0xff]
    %v462 = vld [vmem:[%s7 + $0x1d8] sm:$0xff]
    %v463 = vld [vmem:[%s7 + $0x1e0] sm:$0xff]
    %v464 = vld [vmem:[%s7 + $0x1e8] sm:$0xff]
    %v465 = vld [vmem:[%s7 + $0x1f0] sm:$0xff]
    %v466 = vld [vmem:[%s7 + $0x1f8] sm:$0xff]
    %v467 = vld [vmem:[#allocation9] sm:$0x3]
    %v469 = vlaneseq
    %v470 = vshrl.u32 %v469, 7
    %v471 = vsub.s32 0, %v470
    %v472 = vrot.slane %v467, %v471
    %v473 = vlaneseq
    %v474 = vshrl.u32 %v473, 7
    %v475 = vsub.s32 1, %v474
    %v476 = vrot.slane %v467, %v475
    %479 = vmatprep.subr.mxu0 %v404
    %480 = vmatpush1.msra.mxu0 %v403
    %481 = vmatprep.subr.mxu0 %v406
    %482 = vmatpush1.msra.mxu0 %v405
    %483 = vmatprep.subr.mxu0 %v408
    %484 = vmatpush1.msra.mxu0 %v407
    %485 = vmatprep.subr.mxu0 %v410
    %486 = vmatpush1.msra.mxu0 %v409
    %487 = vmatprep.subr.mxu0 %v412
    %488 = vmatpush1.msra.mxu0 %v411
    %489 = vmatprep.subr.mxu0 %v414
    %490 = vmatpush1.msra.mxu0 %v413
    %491 = vmatprep.subr.mxu0 %v416
    %492 = vmatpush1.msra.mxu0 %v415
    %493 = vmatprep.subr.mxu0 %v418
    %494 = vmatpush1.msra.mxu0 %v417
    %495 = vmatprep.subr.mxu0 %v420
    %496 = vmatpush1.msra.mxu0 %v419
    %497 = vmatprep.subr.mxu0 %v422
    %498 = vmatpush1.msra.mxu0 %v421
    %499 = vmatprep.subr.mxu0 %v424
    %500 = vmatpush1.msra.mxu0 %v423
    %501 = vmatprep.subr.mxu0 %v426
    %502 = vmatpush1.msra.mxu0 %v425
    %503 = vmatprep.subr.mxu0 %v428
    %504 = vmatpush1.msra.mxu0 %v427
    %505 = vmatprep.subr.mxu0 %v430
    %506 = vmatpush1.msra.mxu0 %v429
    %507 = vmatprep.subr.mxu0 %v432
    %508 = vmatpush1.msra.mxu0 %v431
    %509 = vmatprep.subr.mxu0 %v434
    %510 = vmatpush1.msra.mxu0 %v433
    %511 = vmatprep.subr.mxu0 %v436
    %512 = vmatpush1.msra.mxu0 %v435
    %513 = vmatprep.subr.mxu0 %v438
    %514 = vmatpush1.msra.mxu0 %v437
    %515 = vmatprep.subr.mxu0 %v440
    %516 = vmatpush1.msra.mxu0 %v439
    %517 = vmatprep.subr.mxu0 %v442
    %518 = vmatpush1.msra.mxu0 %v441
    %519 = vmatprep.subr.mxu0 %v444
    %520 = vmatpush1.msra.mxu0 %v443
    %521 = vmatprep.subr.mxu0 %v446
    %522 = vmatpush1.msra.mxu0 %v445
    %523 = vmatprep.subr.mxu0 %v448
    %524 = vmatpush1.msra.mxu0 %v447
    %525 = vmatprep.subr.mxu0 %v450
    %526 = vmatpush1.msra.mxu0 %v449
    %527 = vmatprep.subr.mxu0 %v452
    %528 = vmatpush1.msra.mxu0 %v451
    %529 = vmatprep.subr.mxu0 %v454
    %530 = vmatpush1.msra.mxu0 %v453
    %531 = vmatprep.subr.mxu0 %v456
    %532 = vmatpush1.msra.mxu0 %v455
    %533 = vmatprep.subr.mxu0 %v458
    %534 = vmatpush1.msra.mxu0 %v457
    %535 = vmatprep.subr.mxu0 %v460
    %536 = vmatpush1.msra.mxu0 %v459
    %537 = vmatprep.subr.mxu0 %v462
    %538 = vmatpush1.msra.mxu0 %v461
    %539 = vmatprep.subr.mxu0 %v464
    %540 = vmatpush1.msra.mxu0 %v463
    %541 = vmatprep.subr.mxu0 %v466
    %542 = vmatpush1.msra.mxu0 %v465
    %543 = vmatprep.mubr.f32.mxu0 %v402
    %544 = vmatmul.mubr.f32.gmra.mrb[0].mxu0 %v401
    %v545 = vpop.f32.mrb[0].mxu0
    %v546 = vadd.f32 %v472, %v545
    %v547 = vpop.f32.mrb[0].mxu0
    %v548 = vadd.f32 %v476, %v547
    %549 = vdwg.mxu0
    %v550 = vld [vmem:[#allocation12] sm:$0x1]
    %v551 = vld [vmem:[%s15] sm:$0xf]
    %vm552 = vcmask 31744
    %v554 = vsel %vm552, %v550, 0
    %vm556 = vcmask 1043456
    %v558 = vsel %vm556, %v401, 0
    %v561 = vsel %vm556, %v402, 0
    %563 = vmatprep.subr.mxu0 %v561
    %564 = vmatpush1.msra.mxu0 %v558
    %565 = vmatprep.subr.mxu0 0.0
    %566 = vmatpush1.msra.mxu0 0.0
    %567 = vmatprep.subr.mxu0 0.0
    %568 = vmatpush1.msra.mxu0 0.0
    %569 = vmatprep.subr.mxu0 0.0
    %570 = vmatpush1.msra.mxu0 0.0
    %571 = vmatprep.subr.mxu0 0.0
    %572 = vmatpush1.msra.mxu0 0.0
    %573 = vmatprep.subr.mxu0 0.0
    %574 = vmatpush1.msra.mxu0 0.0
    %575 = vmatprep.subr.mxu0 0.0
    %576 = vmatpush1.msra.mxu0 0.0
    %577 = vmatprep.subr.mxu0 0.0
    %578 = vmatpush1.msra.mxu0 0.0
    %579 = vmatprep.subr.mxu0 0.0
    %580 = vmatpush1.msra.mxu0 0.0
    %581 = vmatprep.subr.mxu0 0.0
    %582 = vmatpush1.msra.mxu0 0.0
    %583 = vmatprep.subr.mxu0 0.0
    %584 = vmatpush1.msra.mxu0 0.0
    %585 = vmatprep.subr.mxu0 0.0
    %586 = vmatpush1.msra.mxu0 0.0
    %587 = vmatprep.subr.mxu0 0.0
    %588 = vmatpush1.msra.mxu0 0.0
    %589 = vmatprep.subr.mxu0 0.0
    %590 = vmatpush1.msra.mxu0 0.0
    %591 = vmatprep.subr.mxu0 0.0
    %592 = vmatpush1.msra.mxu0 0.0
    %593 = vmatprep.subr.mxu0 0.0
    %594 = vmatpush1.msra.mxu0 0.0
    %595 = vmatprep.subr.mxu0 0.0
    %596 = vmatpush1.msra.mxu0 0.0
    %597 = vmatprep.subr.mxu0 0.0
    %598 = vmatpush1.msra.mxu0 0.0
    %599 = vmatprep.subr.mxu0 0.0
    %600 = vmatpush1.msra.mxu0 0.0
    %601 = vmatprep.subr.mxu0 0.0
    %602 = vmatpush1.msra.mxu0 0.0
    %603 = vmatprep.subr.mxu0 0.0
    %604 = vmatpush1.msra.mxu0 0.0
    %605 = vmatprep.subr.mxu0 0.0
    %606 = vmatpush1.msra.mxu0 0.0
    %607 = vmatprep.subr.mxu0 0.0
    %608 = vmatpush1.msra.mxu0 0.0
    %609 = vmatprep.subr.mxu0 0.0
    %610 = vmatpush1.msra.mxu0 0.0
    %611 = vmatprep.subr.mxu0 0.0
    %612 = vmatpush1.msra.mxu0 0.0
    %613 = vmatprep.subr.mxu0 0.0
    %614 = vmatpush1.msra.mxu0 0.0
    %615 = vmatprep.subr.mxu0 0.0
    %616 = vmatpush1.msra.mxu0 0.0
    %617 = vmatprep.subr.mxu0 0.0
    %618 = vmatpush1.msra.mxu0 0.0
    %619 = vmatprep.subr.mxu0 0.0
    %620 = vmatpush1.msra.mxu0 0.0
    %621 = vmatprep.subr.mxu0 0.0
    %622 = vmatpush1.msra.mxu0 0.0
    %623 = vmatprep.subr.mxu0 0.0
    %624 = vmatpush1.msra.mxu0 0.0
    %625 = vmatprep.subr.mxu0 0.0
    %626 = vmatpush1.msra.mxu0 0.0
    %627 = vmatprep.mubr.f32.mxu0 0.0
    %628 = vmatmul.mubr.f32.gmra.mrb[0].mxu0 %v554
    %v629 = vpop.f32.mrb[0].mxu0
    %v630 = vadd.f32 0.0, %v629
    %v631 = vpop.f32.mrb[0].mxu0
    %v632 = vadd.f32 0.0, %v631
    %633 = vdwg.mxu0
    %vm634 = vcmask 7168
    %v636 = vsel %vm634, %v551, 0
    %vm638 = vcmask 1040384
    %v640 = vsel %vm638, %v630, 0
    %v643 = vsel %vm638, %v632, 0
    %645 = vmatprep.subr.mxu0 %v643
    %646 = vmatpush1.msra.mxu0 %v640
    %647 = vmatprep.subr.mxu0 0.0
    %648 = vmatpush1.msra.mxu0 0.0
    %649 = vmatprep.subr.mxu0 0.0
    %650 = vmatpush1.msra.mxu0 0.0
    %651 = vmatprep.subr.mxu0 0.0
    %652 = vmatpush1.msra.mxu0 0.0
    %653 = vmatprep.subr.mxu0 0.0
    %654 = vmatpush1.msra.mxu0 0.0
    %655 = vmatprep.subr.mxu0 0.0
    %656 = vmatpush1.msra.mxu0 0.0
    %657 = vmatprep.subr.mxu0 0.0
    %658 = vmatpush1.msra.mxu0 0.0
    %659 = vmatprep.subr.mxu0 0.0
    %660 = vmatpush1.msra.mxu0 0.0
    %661 = vmatprep.subr.mxu0 0.0
    %662 = vmatpush1.msra.mxu0 0.0
    %663 = vmatprep.subr.mxu0 0.0
    %664 = vmatpush1.msra.mxu0 0.0
    %665 = vmatprep.subr.mxu0 0.0
    %666 = vmatpush1.msra.mxu0 0.0
    %667 = vmatprep.subr.mxu0 0.0
    %668 = vmatpush1.msra.mxu0 0.0
    %669 = vmatprep.subr.mxu0 0.0
    %670 = vmatpush1.msra.mxu0 0.0
    %671 = vmatprep.subr.mxu0 0.0
    %672 = vmatpush1.msra.mxu0 0.0
    %673 = vmatprep.subr.mxu0 0.0
    %674 = vmatpush1.msra.mxu0 0.0
    %675 = vmatprep.subr.mxu0 0.0
    %676 = vmatpush1.msra.mxu0 0.0
    %677 = vmatprep.subr.mxu0 0.0
    %678 = vmatpush1.msra.mxu0 0.0
    %679 = vmatprep.subr.mxu0 0.0
    %680 = vmatpush1.msra.mxu0 0.0
    %681 = vmatprep.subr.mxu0 0.0
    %682 = vmatpush1.msra.mxu0 0.0
    %683 = vmatprep.subr.mxu0 0.0
    %684 = vmatpush1.msra.mxu0 0.0
    %685 = vmatprep.subr.mxu0 0.0
    %686 = vmatpush1.msra.mxu0 0.0
    %687 = vmatprep.subr.mxu0 0.0
    %688 = vmatpush1.msra.mxu0 0.0
    %689 = vmatprep.subr.mxu0 0.0
    %690 = vmatpush1.msra.mxu0 0.0
    %691 = vmatprep.subr.mxu0 0.0
    %692 = vmatpush1.msra.mxu0 0.0
    %693 = vmatprep.subr.mxu0 0.0
    %694 = vmatpush1.msra.mxu0 0.0
    %695 = vmatprep.subr.mxu0 0.0
    %696 = vmatpush1.msra.mxu0 0.0
    %697 = vmatprep.subr.mxu0 0.0
    %698 = vmatpush1.msra.mxu0 0.0
    %699 = vmatprep.subr.mxu0 0.0
    %700 = vmatpush1.msra.mxu0 0.0
    %701 = vmatprep.subr.mxu0 0.0
    %702 = vmatpush1.msra.mxu0 0.0
    %703 = vmatprep.subr.mxu0 0.0
    %704 = vmatpush1.msra.mxu0 0.0
    %705 = vmatprep.subr.mxu0 0.0
    %706 = vmatpush1.msra.mxu0 0.0
    %707 = vmatprep.subr.mxu0 0.0
    %708 = vmatpush1.msra.mxu0 0.0
    %709 = vmatprep.mubr.f32.mxu0 0.0
    %710 = vmatmul.mubr.f32.gmra.mrb[0].mxu0 %v636
    %v711 = vpop.f32.mrb[0].mxu0
    %v712 = vadd.f32 0.0, %v711
    %v713 = vpop.f32.mrb[0].mxu0
    %v714 = vadd.f32 0.0, %v713
    %715 = vdwg.mxu0
    %v716 = vsub.f32 %v401, %v712
    %v717 = vsub.f32 %v402, %v714
    %v718 = vmul.f32 %v716, %v716
    %v719 = vmul.f32 %v717, %v717
    %v721 = vsel %vm556, %v718, 0
    %v724 = vsel %vm556, %v719, 0
    %726 = vmatprep.subr.mxu0 %v724
    %727 = vmatpush1.msra.mxu0 %v721
    %728 = vmatprep.subr.mxu0 0.0
    %729 = vmatpush1.msra.mxu0 0.0
    %730 = vmatprep.subr.mxu0 0.0
    %731 = vmatpush1.msra.mxu0 0.0
    %732 = vmatprep.subr.mxu0 0.0
    %733 = vmatpush1.msra.mxu0 0.0
    %734 = vmatprep.subr.mxu0 0.0
    %735 = vmatpush1.msra.mxu0 0.0
    %736 = vmatprep.subr.mxu0 0.0
    %737 = vmatpush1.msra.mxu0 0.0
    %738 = vmatprep.subr.mxu0 0.0
    %739 = vmatpush1.msra.mxu0 0.0
    %740 = vmatprep.subr.mxu0 0.0
    %741 = vmatpush1.msra.mxu0 0.0
    %742 = vmatprep.subr.mxu0 0.0
    %743 = vmatpush1.msra.mxu0 0.0
    %744 = vmatprep.subr.mxu0 0.0
    %745 = vmatpush1.msra.mxu0 0.0
    %746 = vmatprep.subr.mxu0 0.0
    %747 = vmatpush1.msra.mxu0 0.0
    %748 = vmatprep.subr.mxu0 0.0
    %749 = vmatpush1.msra.mxu0 0.0
    %750 = vmatprep.subr.mxu0 0.0
    %751 = vmatpush1.msra.mxu0 0.0
    %752 = vmatprep.subr.mxu0 0.0
    %753 = vmatpush1.msra.mxu0 0.0
    %754 = vmatprep.subr.mxu0 0.0
    %755 = vmatpush1.msra.mxu0 0.0
    %756 = vmatprep.subr.mxu0 0.0
    %757 = vmatpush1.msra.mxu0 0.0
    %758 = vmatprep.subr.mxu0 0.0
    %759 = vmatpush1.msra.mxu0 0.0
    %760 = vmatprep.subr.mxu0 0.0
    %761 = vmatpush1.msra.mxu0 0.0
    %762 = vmatprep.subr.mxu0 0.0
    %763 = vmatpush1.msra.mxu0 0.0
    %764 = vmatprep.subr.mxu0 0.0
    %765 = vmatpush1.msra.mxu0 0.0
    %766 = vmatprep.subr.mxu0 0.0
    %767 = vmatpush1.msra.mxu0 0.0
    %768 = vmatprep.subr.mxu0 0.0
    %769 = vmatpush1.msra.mxu0 0.0
    %770 = vmatprep.subr.mxu0 0.0
    %771 = vmatpush1.msra.mxu0 0.0
    %772 = vmatprep.subr.mxu0 0.0
    %773 = vmatpush1.msra.mxu0 0.0
    %774 = vmatprep.subr.mxu0 0.0
    %775 = vmatpush1.msra.mxu0 0.0
    %776 = vmatprep.subr.mxu0 0.0
    %777 = vmatpush1.msra.mxu0 0.0
    %778 = vmatprep.subr.mxu0 0.0
    %779 = vmatpush1.msra.mxu0 0.0
    %780 = vmatprep.subr.mxu0 0.0
    %781 = vmatpush1.msra.mxu0 0.0
    %782 = vmatprep.subr.mxu0 0.0
    %783 = vmatpush1.msra.mxu0 0.0
    %784 = vmatprep.subr.mxu0 0.0
    %785 = vmatpush1.msra.mxu0 0.0
    %786 = vmatprep.subr.mxu0 0.0
    %787 = vmatpush1.msra.mxu0 0.0
    %788 = vmatprep.subr.mxu0 0.0
    %789 = vmatpush1.msra.mxu0 0.0
    %790 = vmatprep.mubr.f32.mxu0 0.0
    %791 = vmatmul.mubr.f32.gmra.mrb[0].mxu0 %v554
    %v792 = vpop.f32.mrb[0].mxu0
    %v793 = vadd.f32 1e-08, %v792
    %v794 = vpop.f32.mrb[0].mxu0
    %v795 = vadd.f32 1e-08, %v794
    %796 = vdwg.mxu0
    %v797 = vrsqrt.pop %v793
    %v798 = vmul.f32 %v793, %v797
    %vm799 = vcmp.eq.f32.partialorder %v793, inf
    %v800 = vsel %vm799, %v793, %v798
    %vm801 = vcmp.eq.f32.partialorder %v793, 0.0
    %v802 = vand.u32 %v793, 2147483648
    %v803 = vsel %vm801, %v802, %v800
    %v804 = vrsqrt.pop %v795
    %v805 = vmul.f32 %v795, %v804
    %vm806 = vcmp.eq.f32.partialorder %v795, inf
    %v807 = vsel %vm806, %v795, %v805
    %vm808 = vcmp.eq.f32.partialorder %v795, 0.0
    %v809 = vand.u32 %v795, 2147483648
    %v810 = vsel %vm808, %v809, %v807
    %v811 = vsel %vm638, %v803, 0.0
    %v812 = vsel %vm638, %v810, 0.0
    %v813 = vadd.f32 %v811, %v812
    %814 = vadd.xlane.f32.xlu0 %v813
    %v815 = vpop.xlane.xlu0 %814
    %v816 = vrcp.pop 256.0
    %v817 = vmul.f32 %v815, %v816
    %v819 = vsel %vm638, %v817, 0
    %821 = vmatprep.subr.mxu0 0.0
    %822 = vmatpush1.msra.mxu0 %v819
    %823 = vmatprep.subr.mxu0 0.0
    %824 = vmatpush1.msra.mxu0 0.0
    %825 = vmatprep.subr.mxu0 0.0
    %826 = vmatpush1.msra.mxu0 0.0
    %827 = vmatprep.subr.mxu0 0.0
    %828 = vmatpush1.msra.mxu0 0.0
    %829 = vmatprep.subr.mxu0 0.0
    %830 = vmatpush1.msra.mxu0 0.0
    %831 = vmatprep.subr.mxu0 0.0
    %832 = vmatpush1.msra.mxu0 0.0
    %833 = vmatprep.subr.mxu0 0.0
    %834 = vmatpush1.msra.mxu0 0.0
    %835 = vmatprep.subr.mxu0 0.0
    %836 = vmatpush1.msra.mxu0 0.0
    %837 = vmatprep.subr.mxu0 0.0
    %838 = vmatpush1.msra.mxu0 0.0
    %839 = vmatprep.subr.mxu0 0.0
    %840 = vmatpush1.msra.mxu0 0.0
    %841 = vmatprep.subr.mxu0 0.0
    %842 = vmatpush1.msra.mxu0 0.0
    %843 = vmatprep.subr.mxu0 0.0
    %844 = vmatpush1.msra.mxu0 0.0
    %845 = vmatprep.subr.mxu0 0.0
    %846 = vmatpush1.msra.mxu0 0.0
    %847 = vmatprep.subr.mxu0 0.0
    %848 = vmatpush1.msra.mxu0 0.0
    %849 = vmatprep.subr.mxu0 0.0
    %850 = vmatpush1.msra.mxu0 0.0
    %851 = vmatprep.subr.mxu0 0.0
    %852 = vmatpush1.msra.mxu0 0.0
    %853 = vmatprep.subr.mxu0 0.0
    %854 = vmatpush1.msra.mxu0 0.0
    %855 = vmatprep.subr.mxu0 0.0
    %856 = vmatpush1.msra.mxu0 0.0
    %857 = vmatprep.subr.mxu0 0.0
    %858 = vmatpush1.msra.mxu0 0.0
    %859 = vmatprep.subr.mxu0 0.0
    %860 = vmatpush1.msra.mxu0 0.0
    %861 = vmatprep.subr.mxu0 0.0
    %862 = vmatpush1.msra.mxu0 0.0
    %863 = vmatprep.subr.mxu0 0.0
    %864 = vmatpush1.msra.mxu0 0.0
    %865 = vmatprep.subr.mxu0 0.0
    %866 = vmatpush1.msra.mxu0 0.0
    %867 = vmatprep.subr.mxu0 0.0
    %868 = vmatpush1.msra.mxu0 0.0
    %869 = vmatprep.subr.mxu0 0.0
    %870 = vmatpush1.msra.mxu0 0.0
    %871 = vmatprep.subr.mxu0 0.0
    %872 = vmatpush1.msra.mxu0 0.0
    %873 = vmatprep.subr.mxu0 0.0
    %874 = vmatpush1.msra.mxu0 0.0
    %875 = vmatprep.subr.mxu0 0.0
    %876 = vmatpush1.msra.mxu0 0.0
    %877 = vmatprep.subr.mxu0 0.0
    %878 = vmatpush1.msra.mxu0 0.0
    %879 = vmatprep.subr.mxu0 0.0
    %880 = vmatpush1.msra.mxu0 0.0
    %881 = vmatprep.subr.mxu0 0.0
    %882 = vmatpush1.msra.mxu0 0.0
    %883 = vmatprep.subr.mxu0 0.0
    %884 = vmatpush1.msra.mxu0 0.0
    %885 = vmatprep.mubr.f32.mxu0 0.0
    %886 = vmatmul.mubr.f32.gmra.mrb[0].mxu0 %v636
    %v887 = vpop.f32.mrb[0].mxu0
    %v888 = vadd.f32 0.0, %v887
    %v889 = vpop.f32.mrb[0].mxu0
    %890 = vdwg.mxu0
    %v891 = vld [vmem:[#allocation10] sm:$0x3]
    %893 = vset.pattern.permute.xlu0 0
    %894 = vperm.xlu0 %893, %v888
    %v895 = vpop.permute.xlu0 %894
    %v898 = vlaneseq
    %v899 = vshrl.u32 %v898, 7
    %v900 = vsub.s32 0, %v899
    %v901 = vrot.slane %v891, %v900
    %v902 = vlaneseq
    %v903 = vshrl.u32 %v902, 7
    %v904 = vsub.s32 1, %v903
    %v905 = vrot.slane %v891, %v904
    %v908 = vmul.f32 %v895, %v901
    %v909 = vmul.f32 %v895, %v905
    %v910 = vadd.f32 %v546, %v908
    %v911 = vadd.f32 %v548, %v909
    %vm912 = vcmp.ge.f32.partialorder %v910, 0.0
    %vm913 = vcmp.ge.f32.partialorder %v911, 0.0
    %v914 = vmul.f32 %v910, 0.2
    %v915 = vmul.f32 %v911, 0.2
    %v916 = vsel %vm912, %v910, %v914
    %v917 = vsel %vm913, %v911, %v915
    %v918 = vld [vmem:[%s17] sm:$0xff]
    %v919 = vld [vmem:[%s17 + $0x8] sm:$0xff]
    %v920 = vld [vmem:[%s17 + $0x10] sm:$0xff]
    %v921 = vld [vmem:[%s17 + $0x18] sm:$0xff]
    %v922 = vld [vmem:[%s17 + $0x20] sm:$0xff]
    %v923 = vld [vmem:[%s17 + $0x28] sm:$0xff]
    %v924 = vld [vmem:[%s17 + $0x30] sm:$0xff]
    %v925 = vld [vmem:[%s17 + $0x38] sm:$0xff]
    %v926 = vld [vmem:[%s17 + $0x40] sm:$0xff]
    %v927 = vld [vmem:[%s17 + $0x48] sm:$0xff]
    %v928 = vld [vmem:[%s17 + $0x50] sm:$0xff]
    %v929 = vld [vmem:[%s17 + $0x58] sm:$0xff]
    %v930 = vld [vmem:[%s17 + $0x60] sm:$0xff]
    %v931 = vld [vmem:[%s17 + $0x68] sm:$0xff]
    %v932 = vld [vmem:[%s17 + $0x70] sm:$0xff]
    %v933 = vld [vmem:[%s17 + $0x78] sm:$0xff]
    %v934 = vld [vmem:[%s17 + $0x80] sm:$0xff]
    %v935 = vld [vmem:[%s17 + $0x88] sm:$0xff]
    %v936 = vld [vmem:[%s17 + $0x90] sm:$0xff]
    %v937 = vld [vmem:[%s17 + $0x98] sm:$0xff]
    %v938 = vld [vmem:[%s17 + $0xa0] sm:$0xff]
    %v939 = vld [vmem:[%s17 + $0xa8] sm:$0xff]
    %v940 = vld [vmem:[%s17 + $0xb0] sm:$0xff]
    %v941 = vld [vmem:[%s17 + $0xb8] sm:$0xff]
    %v942 = vld [vmem:[%s17 + $0xc0] sm:$0xff]
    %v943 = vld [vmem:[%s17 + $0xc8] sm:$0xff]
    %v944 = vld [vmem:[%s17 + $0xd0] sm:$0xff]
    %v945 = vld [vmem:[%s17 + $0xd8] sm:$0xff]
    %v946 = vld [vmem:[%s17 + $0xe0] sm:$0xff]
    %v947 = vld [vmem:[%s17 + $0xe8] sm:$0xff]
    %v948 = vld [vmem:[%s17 + $0xf0] sm:$0xff]
    %v949 = vld [vmem:[%s17 + $0xf8] sm:$0xff]
    %v950 = vld [vmem:[#allocation13] sm:$0x1]
    %v952 = vlaneseq
    %v953 = vshrl.u32 %v952, 7
    %v954 = vsub.s32 0, %v953
    %v955 = vrot.slane %v950, %v954
    %957 = vmatprep.subr.mxu0 0.0
    %958 = vmatpush1.msra.mxu0 %v918
    %959 = vmatprep.subr.mxu0 0.0
    %960 = vmatpush1.msra.mxu0 %v919
    %961 = vmatprep.subr.mxu0 0.0
    %962 = vmatpush1.msra.mxu0 %v920
    %963 = vmatprep.subr.mxu0 0.0
    %964 = vmatpush1.msra.mxu0 %v921
    %965 = vmatprep.subr.mxu0 0.0
    %966 = vmatpush1.msra.mxu0 %v922
    %967 = vmatprep.subr.mxu0 0.0
    %968 = vmatpush1.msra.mxu0 %v923
    %969 = vmatprep.subr.mxu0 0.0
    %970 = vmatpush1.msra.mxu0 %v924
    %971 = vmatprep.subr.mxu0 0.0
    %972 = vmatpush1.msra.mxu0 %v925
    %973 = vmatprep.subr.mxu0 0.0
    %974 = vmatpush1.msra.mxu0 %v926
    %975 = vmatprep.subr.mxu0 0.0
    %976 = vmatpush1.msra.mxu0 %v927
    %977 = vmatprep.subr.mxu0 0.0
    %978 = vmatpush1.msra.mxu0 %v928
    %979 = vmatprep.subr.mxu0 0.0
    %980 = vmatpush1.msra.mxu0 %v929
    %981 = vmatprep.subr.mxu0 0.0
    %982 = vmatpush1.msra.mxu0 %v930
    %983 = vmatprep.subr.mxu0 0.0
    %984 = vmatpush1.msra.mxu0 %v931
    %985 = vmatprep.subr.mxu0 0.0
    %986 = vmatpush1.msra.mxu0 %v932
    %987 = vmatprep.subr.mxu0 0.0
    %988 = vmatpush1.msra.mxu0 %v933
    %989 = vmatprep.subr.mxu0 0.0
    %990 = vmatpush1.msra.mxu0 %v934
    %991 = vmatprep.subr.mxu0 0.0
    %992 = vmatpush1.msra.mxu0 %v935
    %993 = vmatprep.subr.mxu0 0.0
    %994 = vmatpush1.msra.mxu0 %v936
    %995 = vmatprep.subr.mxu0 0.0
    %996 = vmatpush1.msra.mxu0 %v937
    %997 = vmatprep.subr.mxu0 0.0
    %998 = vmatpush1.msra.mxu0 %v938
    %999 = vmatprep.subr.mxu0 0.0
    %1000 = vmatpush1.msra.mxu0 %v939
    %1001 = vmatprep.subr.mxu0 0.0
    %1002 = vmatpush1.msra.mxu0 %v940
    %1003 = vmatprep.subr.mxu0 0.0
    %1004 = vmatpush1.msra.mxu0 %v941
    %1005 = vmatprep.subr.mxu0 0.0
    %1006 = vmatpush1.msra.mxu0 %v942
    %1007 = vmatprep.subr.mxu0 0.0
    %1008 = vmatpush1.msra.mxu0 %v943
    %1009 = vmatprep.subr.mxu0 0.0
    %1010 = vmatpush1.msra.mxu0 %v944
    %1011 = vmatprep.subr.mxu0 0.0
    %1012 = vmatpush1.msra.mxu0 %v945
    %1013 = vmatprep.subr.mxu0 0.0
    %1014 = vmatpush1.msra.mxu0 %v946
    %1015 = vmatprep.subr.mxu0 0.0
    %1016 = vmatpush1.msra.mxu0 %v947
    %1017 = vmatprep.subr.mxu0 0.0
    %1018 = vmatpush1.msra.mxu0 %v948
    %1019 = vmatprep.subr.mxu0 0.0
    %1020 = vmatpush1.msra.mxu0 %v949
    %1021 = vmatprep.mubr.f32.mxu0 %v917
    %1022 = vmatmul.mubr.f32.gmra.mrb[0].mxu0 %v916
    %v1023 = vpop.f32.mrb[0].mxu0
    %v1024 = vadd.f32 %v955, %v1023
    %v1025 = vpop.f32.mrb[0].mxu0
    %1026 = vdwg.mxu0
    %vm1027 = vcmp.ge.f32.partialorder %v1024, 0.0
    %v1028 = vmul.f32 %v1024, 0.2
    %v1029 = vsel %vm1027, %v1024, %v1028
    %v1030 = vld [vmem:[%s21] sm:$0xff]
    %v1031 = vld [vmem:[%s21 + $0x8] sm:$0xff]
    %v1032 = vld [vmem:[%s21 + $0x10] sm:$0xff]
    %v1033 = vld [vmem:[%s21 + $0x18] sm:$0xff]
    %v1034 = vld [vmem:[#allocation2] sm:$0x1]
    %v1036 = vlaneseq
    %v1037 = vshrl.u32 %v1036, 7
    %v1038 = vsub.s32 0, %v1037
    %v1039 = vrot.slane %v1034, %v1038
    %vm1041 = vcmask 261120
    %v1043 = vsel %vm1041, %v1029, 0
    %1045 = vmatprep.subr.mxu0 0.0
    %1046 = vmatpush1.msra.mxu0 %v1030
    %1047 = vmatprep.subr.mxu0 0.0
    %1048 = vmatpush1.msra.mxu0 %v1031
    %1049 = vmatprep.subr.mxu0 0.0
    %1050 = vmatpush1.msra.mxu0 %v1032
    %1051 = vmatprep.subr.mxu0 0.0
    %1052 = vmatpush1.msra.mxu0 %v1033
    %1053 = vmatprep.subr.mxu0 0.0
    %1054 = vmatpush1.msra.mxu0 0.0
    %1055 = vmatprep.subr.mxu0 0.0
    %1056 = vmatpush1.msra.mxu0 0.0
    %1057 = vmatprep.subr.mxu0 0.0
    %1058 = vmatpush1.msra.mxu0 0.0
    %1059 = vmatprep.subr.mxu0 0.0
    %1060 = vmatpush1.msra.mxu0 0.0
    %1061 = vmatprep.subr.mxu0 0.0
    %1062 = vmatpush1.msra.mxu0 0.0
    %1063 = vmatprep.subr.mxu0 0.0
    %1064 = vmatpush1.msra.mxu0 0.0
    %1065 = vmatprep.subr.mxu0 0.0
    %1066 = vmatpush1.msra.mxu0 0.0
    %1067 = vmatprep.subr.mxu0 0.0
    %1068 = vmatpush1.msra.mxu0 0.0
    %1069 = vmatprep.subr.mxu0 0.0
    %1070 = vmatpush1.msra.mxu0 0.0
    %1071 = vmatprep.subr.mxu0 0.0
    %1072 = vmatpush1.msra.mxu0 0.0
    %1073 = vmatprep.subr.mxu0 0.0
    %1074 = vmatpush1.msra.mxu0 0.0
    %1075 = vmatprep.subr.mxu0 0.0
    %1076 = vmatpush1.msra.mxu0 0.0
    %1077 = vmatprep.subr.mxu0 0.0
    %1078 = vmatpush1.msra.mxu0 0.0
    %1079 = vmatprep.subr.mxu0 0.0
    %1080 = vmatpush1.msra.mxu0 0.0
    %1081 = vmatprep.subr.mxu0 0.0
    %1082 = vmatpush1.msra.mxu0 0.0
    %1083 = vmatprep.subr.mxu0 0.0
    %1084 = vmatpush1.msra.mxu0 0.0
    %1085 = vmatprep.subr.mxu0 0.0
    %1086 = vmatpush1.msra.mxu0 0.0
    %1087 = vmatprep.subr.mxu0 0.0
    %1088 = vmatpush1.msra.mxu0 0.0
    %1089 = vmatprep.subr.mxu0 0.0
    %1090 = vmatpush1.msra.mxu0 0.0
    %1091 = vmatprep.subr.mxu0 0.0
    %1092 = vmatpush1.msra.mxu0 0.0
    %1093 = vmatprep.subr.mxu0 0.0
    %1094 = vmatpush1.msra.mxu0 0.0
    %1095 = vmatprep.subr.mxu0 0.0
    %1096 = vmatpush1.msra.mxu0 0.0
    %1097 = vmatprep.subr.mxu0 0.0
    %1098 = vmatpush1.msra.mxu0 0.0
    %1099 = vmatprep.subr.mxu0 0.0
    %1100 = vmatpush1.msra.mxu0 0.0
    %1101 = vmatprep.subr.mxu0 0.0
    %1102 = vmatpush1.msra.mxu0 0.0
    %1103 = vmatprep.subr.mxu0 0.0
    %1104 = vmatpush1.msra.mxu0 0.0
    %1105 = vmatprep.subr.mxu0 0.0
    %1106 = vmatpush1.msra.mxu0 0.0
    %1107 = vmatprep.subr.mxu0 0.0
    %1108 = vmatpush1.msra.mxu0 0.0
    %1109 = vmatprep.mubr.f32.mxu0 0.0
    %1110 = vmatmul.mubr.f32.gmra.mrb[0].mxu0 %v1043
    %v1111 = vpop.f32.mrb[0].mxu0
    %v1112 = vadd.f32 %v1039, %v1111
    %v1113 = vpop.f32.mrb[0].mxu0
    %1114 = vdwg.mxu0
    %v1115 = vld [vmem:[%s25] sm:$0xff]
    %v1116 = vld [vmem:[%s25 + $0x8] sm:$0xff]
    %v1117 = vld [vmem:[%s27] sm:$0xff]
    %v1118 = vld [vmem:[%s27 + $0x8] sm:$0xff]
    %v1119 = vld [vmem:[#allocation15] sm:$0x1]
    %v1121 = vlaneseq
    %v1122 = vshrl.u32 %v1121, 7
    %v1123 = vsub.s32 0, %v1122
    %v1124 = vrot.slane %v1119, %v1123
    %vm1126 = vcmask 130048
    %v1128 = vsel %vm1126, %v1115, 0
    %v1131 = vsel %vm1126, %v1116, 0
    %1133 = vmatprep.subr.mxu0 0.0
    %1134 = vmatpush1.msra.mxu0 %v1117
    %1135 = vmatprep.subr.mxu0 0.0
    %1136 = vmatpush1.msra.mxu0 %v1118
    %1137 = vmatprep.subr.mxu0 0.0
    %1138 = vmatpush1.msra.mxu0 0.0
    %1139 = vmatprep.subr.mxu0 0.0
    %1140 = vmatpush1.msra.mxu0 0.0
    %1141 = vmatprep.subr.mxu0 0.0
    %1142 = vmatpush1.msra.mxu0 0.0
    %1143 = vmatprep.subr.mxu0 0.0
    %1144 = vmatpush1.msra.mxu0 0.0
    %1145 = vmatprep.subr.mxu0 0.0
    %1146 = vmatpush1.msra.mxu0 0.0
    %1147 = vmatprep.subr.mxu0 0.0
    %1148 = vmatpush1.msra.mxu0 0.0
    %1149 = vmatprep.subr.mxu0 0.0
    %1150 = vmatpush1.msra.mxu0 0.0
    %1151 = vmatprep.subr.mxu0 0.0
    %1152 = vmatpush1.msra.mxu0 0.0
    %1153 = vmatprep.subr.mxu0 0.0
    %1154 = vmatpush1.msra.mxu0 0.0
    %1155 = vmatprep.subr.mxu0 0.0
    %1156 = vmatpush1.msra.mxu0 0.0
    %1157 = vmatprep.subr.mxu0 0.0
    %1158 = vmatpush1.msra.mxu0 0.0
    %1159 = vmatprep.subr.mxu0 0.0
    %1160 = vmatpush1.msra.mxu0 0.0
    %1161 = vmatprep.subr.mxu0 0.0
    %1162 = vmatpush1.msra.mxu0 0.0
    %1163 = vmatprep.subr.mxu0 0.0
    %1164 = vmatpush1.msra.mxu0 0.0
    %1165 = vmatprep.subr.mxu0 0.0
    %1166 = vmatpush1.msra.mxu0 0.0
    %1167 = vmatprep.subr.mxu0 0.0
    %1168 = vmatpush1.msra.mxu0 0.0
    %1169 = vmatprep.subr.mxu0 0.0
    %1170 = vmatpush1.msra.mxu0 0.0
    %1171 = vmatprep.subr.mxu0 0.0
    %1172 = vmatpush1.msra.mxu0 0.0
    %1173 = vmatprep.subr.mxu0 0.0
    %1174 = vmatpush1.msra.mxu0 0.0
    %1175 = vmatprep.subr.mxu0 0.0
    %1176 = vmatpush1.msra.mxu0 0.0
    %1177 = vmatprep.subr.mxu0 0.0
    %1178 = vmatpush1.msra.mxu0 0.0
    %1179 = vmatprep.subr.mxu0 0.0
    %1180 = vmatpush1.msra.mxu0 0.0
    %1181 = vmatprep.subr.mxu0 0.0
    %1182 = vmatpush1.msra.mxu0 0.0
    %1183 = vmatprep.subr.mxu0 0.0
    %1184 = vmatpush1.msra.mxu0 0.0
    %1185 = vmatprep.subr.mxu0 0.0
    %1186 = vmatpush1.msra.mxu0 0.0
    %1187 = vmatprep.subr.mxu0 0.0
    %1188 = vmatpush1.msra.mxu0 0.0
    %1189 = vmatprep.subr.mxu0 0.0
    %1190 = vmatpush1.msra.mxu0 0.0
    %1191 = vmatprep.subr.mxu0 0.0
    %1192 = vmatpush1.msra.mxu0 0.0
    %1193 = vmatprep.subr.mxu0 0.0
    %1194 = vmatpush1.msra.mxu0 0.0
    %1195 = vmatprep.subr.mxu0 0.0
    %1196 = vmatpush1.msra.mxu0 0.0
    %1197 = vmatprep.mubr.f32.mxu0 0.0
    %1198 = vmatmul.mubr.f32.gmra.mrb[0].mxu0 %v1128
    %v1199 = vpop.f32.mrb[0].mxu0
    %v1200 = vadd.f32 %v1124, %v1199
    %v1201 = vpop.f32.mrb[0].mxu0
    %1202 = vmatprep.mubr.f32.mxu0 0.0
    %1203 = vmatmul.mubr.f32.gmra.mrb[0].mxu0 %v1131
    %v1204 = vpop.f32.mrb[0].mxu0
    %v1205 = vadd.f32 %v1124, %v1204
    %v1206 = vpop.f32.mrb[0].mxu0
    %1207 = vdwg.mxu0
    %vm1208 = vcmp.ge.f32.partialorder %v1200, 0.0
    %vm1209 = vcmp.ge.f32.partialorder %v1205, 0.0
    %v1210 = vmul.f32 %v1200, 0.2
    %v1211 = vmul.f32 %v1205, 0.2
    %v1212 = vsel %vm1208, %v1200, %v1210
    %v1213 = vsel %vm1209, %v1205, %v1211
    %v1214 = vld [vmem:[#allocation16] sm:$0xff]
    %v1215 = vld [vmem:[#allocation16 + $0x8] sm:$0xff]
    %v1216 = vld [vmem:[#allocation16 + $0x10] sm:$0xff]
    %v1217 = vld [vmem:[#allocation16 + $0x18] sm:$0xff]
    %v1218 = vld [vmem:[#allocation16 + $0x20] sm:$0xff]
    %v1219 = vld [vmem:[#allocation16 + $0x28] sm:$0xff]
    %v1220 = vld [vmem:[#allocation16 + $0x30] sm:$0xff]
    %v1221 = vld [vmem:[#allocation16 + $0x38] sm:$0xff]
    %v1222 = vld [vmem:[#allocation16 + $0x40] sm:$0xff]
    %v1223 = vld [vmem:[#allocation16 + $0x48] sm:$0xff]
    %v1224 = vld [vmem:[#allocation16 + $0x50] sm:$0xff]
    %v1225 = vld [vmem:[#allocation16 + $0x58] sm:$0xff]
    %v1226 = vld [vmem:[#allocation16 + $0x60] sm:$0xff]
    %v1227 = vld [vmem:[#allocation16 + $0x68] sm:$0xff]
    %v1228 = vld [vmem:[#allocation16 + $0x70] sm:$0xff]
    %v1229 = vld [vmem:[#allocation16 + $0x78] sm:$0xff]
    %v1230 = vld [vmem:[#allocation18] sm:$0x1]
    %v1232 = vlaneseq
    %v1233 = vshrl.u32 %v1232, 7
    %v1234 = vsub.s32 0, %v1233
    %v1235 = vrot.slane %v1230, %v1234
    %1237 = vmatprep.subr.mxu0 0.0
    %1238 = vmatpush1.msra.mxu0 %v1214
    %1239 = vmatprep.subr.mxu0 0.0
    %1240 = vmatpush1.msra.mxu0 %v1215
    %1241 = vmatprep.subr.mxu0 0.0
    %1242 = vmatpush1.msra.mxu0 %v1216
    %1243 = vmatprep.subr.mxu0 0.0
    %1244 = vmatpush1.msra.mxu0 %v1217
    %1245 = vmatprep.subr.mxu0 0.0
    %1246 = vmatpush1.msra.mxu0 %v1218
    %1247 = vmatprep.subr.mxu0 0.0
    %1248 = vmatpush1.msra.mxu0 %v1219
    %1249 = vmatprep.subr.mxu0 0.0
    %1250 = vmatpush1.msra.mxu0 %v1220
    %1251 = vmatprep.subr.mxu0 0.0
    %1252 = vmatpush1.msra.mxu0 %v1221
    %1253 = vmatprep.subr.mxu0 0.0
    %1254 = vmatpush1.msra.mxu0 %v1222
    %1255 = vmatprep.subr.mxu0 0.0
    %1256 = vmatpush1.msra.mxu0 %v1223
    %1257 = vmatprep.subr.mxu0 0.0
    %1258 = vmatpush1.msra.mxu0 %v1224
    %1259 = vmatprep.subr.mxu0 0.0
    %1260 = vmatpush1.msra.mxu0 %v1225
    %1261 = vmatprep.subr.mxu0 0.0
    %1262 = vmatpush1.msra.mxu0 %v1226
    %1263 = vmatprep.subr.mxu0 0.0
    %1264 = vmatpush1.msra.mxu0 %v1227
    %1265 = vmatprep.subr.mxu0 0.0
    %1266 = vmatpush1.msra.mxu0 %v1228
    %1267 = vmatprep.subr.mxu0 0.0
    %1268 = vmatpush1.msra.mxu0 %v1229
    %1269 = vmatprep.subr.mxu0 0.0
    %1270 = vmatpush1.msra.mxu0 0.0
    %1271 = vmatprep.subr.mxu0 0.0
    %1272 = vmatpush1.msra.mxu0 0.0
    %1273 = vmatprep.subr.mxu0 0.0
    %1274 = vmatpush1.msra.mxu0 0.0
    %1275 = vmatprep.subr.mxu0 0.0
    %1276 = vmatpush1.msra.mxu0 0.0
    %1277 = vmatprep.subr.mxu0 0.0
    %1278 = vmatpush1.msra.mxu0 0.0
    %1279 = vmatprep.subr.mxu0 0.0
    %1280 = vmatpush1.msra.mxu0 0.0
    %1281 = vmatprep.subr.mxu0 0.0
    %1282 = vmatpush1.msra.mxu0 0.0
    %1283 = vmatprep.subr.mxu0 0.0
    %1284 = vmatpush1.msra.mxu0 0.0
    %1285 = vmatprep.subr.mxu0 0.0
    %1286 = vmatpush1.msra.mxu0 0.0
    %1287 = vmatprep.subr.mxu0 0.0
    %1288 = vmatpush1.msra.mxu0 0.0
    %1289 = vmatprep.subr.mxu0 0.0
    %1290 = vmatpush1.msra.mxu0 0.0
    %1291 = vmatprep.subr.mxu0 0.0
    %1292 = vmatpush1.msra.mxu0 0.0
    %1293 = vmatprep.subr.mxu0 0.0
    %1294 = vmatpush1.msra.mxu0 0.0
    %1295 = vmatprep.subr.mxu0 0.0
    %1296 = vmatpush1.msra.mxu0 0.0
    %1297 = vmatprep.subr.mxu0 0.0
    %1298 = vmatpush1.msra.mxu0 0.0
    %1299 = vmatprep.subr.mxu0 0.0
    %1300 = vmatpush1.msra.mxu0 0.0
    %1301 = vmatprep.mubr.f32.mxu0 0.0
    %1302 = vmatmul.mubr.f32.gmra.mrb[0].mxu0 %v1212
    %v1303 = vpop.f32.mrb[0].mxu0
    %v1304 = vadd.f32 %v1235, %v1303
    %v1305 = vpop.f32.mrb[0].mxu0
    %1306 = vmatprep.mubr.f32.mxu0 0.0
    %1307 = vmatmul.mubr.f32.gmra.mrb[0].mxu0 %v1213
    %v1308 = vpop.f32.mrb[0].mxu0
    %v1309 = vadd.f32 %v1235, %v1308
    %v1310 = vpop.f32.mrb[0].mxu0
    %1311 = vdwg.mxu0
    %v1312 = vld [vmem:[%s37] sm:$0xf]
    %v1313 = vld [vmem:[%s39] sm:$0xff]
    %v1314 = vld [vmem:[%s39 + $0x8] sm:$0xff]
    %v1316 = vsel %vm1126, %v1312, 0
    %1318 = vmatprep.subr.mxu0 0.0
    %1319 = vmatpush1.msra.mxu0 %v1212
    %1320 = vmatprep.subr.mxu0 0.0
    %1321 = vmatpush1.msra.mxu0 %v1213
    %1322 = vmatprep.subr.mxu0 0.0
    %1323 = vmatpush1.msra.mxu0 0.0
    %1324 = vmatprep.subr.mxu0 0.0
    %1325 = vmatpush1.msra.mxu0 0.0
    %1326 = vmatprep.subr.mxu0 0.0
    %1327 = vmatpush1.msra.mxu0 0.0
    %1328 = vmatprep.subr.mxu0 0.0
    %1329 = vmatpush1.msra.mxu0 0.0
    %1330 = vmatprep.subr.mxu0 0.0
    %1331 = vmatpush1.msra.mxu0 0.0
    %1332 = vmatprep.subr.mxu0 0.0
    %1333 = vmatpush1.msra.mxu0 0.0
    %1334 = vmatprep.subr.mxu0 0.0
    %1335 = vmatpush1.msra.mxu0 0.0
    %1336 = vmatprep.subr.mxu0 0.0
    %1337 = vmatpush1.msra.mxu0 0.0
    %1338 = vmatprep.subr.mxu0 0.0
    %1339 = vmatpush1.msra.mxu0 0.0
    %1340 = vmatprep.subr.mxu0 0.0
    %1341 = vmatpush1.msra.mxu0 0.0
    %1342 = vmatprep.subr.mxu0 0.0
    %1343 = vmatpush1.msra.mxu0 0.0
    %1344 = vmatprep.subr.mxu0 0.0
    %1345 = vmatpush1.msra.mxu0 0.0
    %1346 = vmatprep.subr.mxu0 0.0
    %1347 = vmatpush1.msra.mxu0 0.0
    %1348 = vmatprep.subr.mxu0 0.0
    %1349 = vmatpush1.msra.mxu0 0.0
    %1350 = vmatprep.subr.mxu0 0.0
    %1351 = vmatpush1.msra.mxu0 0.0
    %1352 = vmatprep.subr.mxu0 0.0
    %1353 = vmatpush1.msra.mxu0 0.0
    %1354 = vmatprep.subr.mxu0 0.0
    %1355 = vmatpush1.msra.mxu0 0.0
    %1356 = vmatprep.subr.mxu0 0.0
    %1357 = vmatpush1.msra.mxu0 0.0
    %1358 = vmatprep.subr.mxu0 0.0
    %1359 = vmatpush1.msra.mxu0 0.0
    %1360 = vmatprep.subr.mxu0 0.0
    %1361 = vmatpush1.msra.mxu0 0.0
    %1362 = vmatprep.subr.mxu0 0.0
    %1363 = vmatpush1.msra.mxu0 0.0
    %1364 = vmatprep.subr.mxu0 0.0
    %1365 = vmatpush1.msra.mxu0 0.0
    %1366 = vmatprep.subr.mxu0 0.0
    %1367 = vmatpush1.msra.mxu0 0.0
    %1368 = vmatprep.subr.mxu0 0.0
    %1369 = vmatpush1.msra.mxu0 0.0
    %1370 = vmatprep.subr.mxu0 0.0
    %1371 = vmatpush1.msra.mxu0 0.0
    %1372 = vmatprep.subr.mxu0 0.0
    %1373 = vmatpush1.msra.mxu0 0.0
    %1374 = vmatprep.subr.mxu0 0.0
    %1375 = vmatpush1.msra.mxu0 0.0
    %1376 = vmatprep.subr.mxu0 0.0
    %1377 = vmatpush1.msra.mxu0 0.0
    %1378 = vmatprep.subr.mxu0 0.0
    %1379 = vmatpush1.msra.mxu0 0.0
    %1380 = vmatprep.subr.mxu0 0.0
    %1381 = vmatpush1.msra.mxu0 0.0
    %1382 = vmatprep.mubr.f32.mxu0 0.0
    %1383 = vmatmul.mubr.f32.gmra.mrb[0].mxu0 %v1316
    %v1384 = vpop.f32.mrb[0].mxu0
    %v1385 = vadd.f32 0.0, %v1384
    %v1386 = vpop.f32.mrb[0].mxu0
    %1387 = vdwg.mxu0
    %v1389 = vsel %vm552, %v1313, 0
    %v1392 = vsel %vm552, %v1314, 0
    %v1395 = vsel %vm556, %v1385, 0
    %1397 = vmatprep.subr.mxu0 0.0
    %1398 = vmatpush1.msra.mxu0 %v1395
    %1399 = vmatprep.subr.mxu0 0.0
    %1400 = vmatpush1.msra.mxu0 0.0
    %1401 = vmatprep.subr.mxu0 0.0
    %1402 = vmatpush1.msra.mxu0 0.0
    %1403 = vmatprep.subr.mxu0 0.0
    %1404 = vmatpush1.msra.mxu0 0.0
    %1405 = vmatprep.subr.mxu0 0.0
    %1406 = vmatpush1.msra.mxu0 0.0
    %1407 = vmatprep.subr.mxu0 0.0
    %1408 = vmatpush1.msra.mxu0 0.0
    %1409 = vmatprep.subr.mxu0 0.0
    %1410 = vmatpush1.msra.mxu0 0.0
    %1411 = vmatprep.subr.mxu0 0.0
    %1412 = vmatpush1.msra.mxu0 0.0
    %1413 = vmatprep.subr.mxu0 0.0
    %1414 = vmatpush1.msra.mxu0 0.0
    %1415 = vmatprep.subr.mxu0 0.0
    %1416 = vmatpush1.msra.mxu0 0.0
    %1417 = vmatprep.subr.mxu0 0.0
    %1418 = vmatpush1.msra.mxu0 0.0
    %1419 = vmatprep.subr.mxu0 0.0
    %1420 = vmatpush1.msra.mxu0 0.0
    %1421 = vmatprep.subr.mxu0 0.0
    %1422 = vmatpush1.msra.mxu0 0.0
    %1423 = vmatprep.subr.mxu0 0.0
    %1424 = vmatpush1.msra.mxu0 0.0
    %1425 = vmatprep.subr.mxu0 0.0
    %1426 = vmatpush1.msra.mxu0 0.0
    %1427 = vmatprep.subr.mxu0 0.0
    %1428 = vmatpush1.msra.mxu0 0.0
    %1429 = vmatprep.subr.mxu0 0.0
    %1430 = vmatpush1.msra.mxu0 0.0
    %1431 = vmatprep.subr.mxu0 0.0
    %1432 = vmatpush1.msra.mxu0 0.0
    %1433 = vmatprep.subr.mxu0 0.0
    %1434 = vmatpush1.msra.mxu0 0.0
    %1435 = vmatprep.subr.mxu0 0.0
    %1436 = vmatpush1.msra.mxu0 0.0
    %1437 = vmatprep.subr.mxu0 0.0
    %1438 = vmatpush1.msra.mxu0 0.0
    %1439 = vmatprep.subr.mxu0 0.0
    %1440 = vmatpush1.msra.mxu0 0.0
    %1441 = vmatprep.subr.mxu0 0.0
    %1442 = vmatpush1.msra.mxu0 0.0
    %1443 = vmatprep.subr.mxu0 0.0
    %1444 = vmatpush1.msra.mxu0 0.0
    %1445 = vmatprep.subr.mxu0 0.0
    %1446 = vmatpush1.msra.mxu0 0.0
    %1447 = vmatprep.subr.mxu0 0.0
    %1448 = vmatpush1.msra.mxu0 0.0
    %1449 = vmatprep.subr.mxu0 0.0
    %1450 = vmatpush1.msra.mxu0 0.0
    %1451 = vmatprep.subr.mxu0 0.0
    %1452 = vmatpush1.msra.mxu0 0.0
    %1453 = vmatprep.subr.mxu0 0.0
    %1454 = vmatpush1.msra.mxu0 0.0
    %1455 = vmatprep.subr.mxu0 0.0
    %1456 = vmatpush1.msra.mxu0 0.0
    %1457 = vmatprep.subr.mxu0 0.0
    %1458 = vmatpush1.msra.mxu0 0.0
    %1459 = vmatprep.subr.mxu0 0.0
    %1460 = vmatpush1.msra.mxu0 0.0
    %1461 = vmatprep.mubr.f32.mxu0 0.0
    %1462 = vmatmul.mubr.f32.gmra.mrb[0].mxu0 %v1389
    %v1463 = vpop.f32.mrb[0].mxu0
    %v1464 = vadd.f32 0.0, %v1463
    %v1465 = vpop.f32.mrb[0].mxu0
    %1466 = vmatprep.mubr.f32.mxu0 0.0
    %1467 = vmatmul.mubr.f32.gmra.mrb[0].mxu0 %v1392
    %v1468 = vpop.f32.mrb[0].mxu0
    %v1469 = vadd.f32 0.0, %v1468
    %v1470 = vpop.f32.mrb[0].mxu0
    %1471 = vdwg.mxu0
    %v1472 = vsub.f32 %v1212, %v1464
    %v1473 = vsub.f32 %v1213, %v1469
    %v1474 = vmul.f32 %v1472, %v1472
    %v1475 = vmul.f32 %v1473, %v1473
    %1476 = vmatprep.subr.mxu0 0.0
    %1477 = vmatpush1.msra.mxu0 %v1474
    %1478 = vmatprep.subr.mxu0 0.0
    %1479 = vmatpush1.msra.mxu0 %v1475
    %1480 = vmatprep.subr.mxu0 0.0
    %1481 = vmatpush1.msra.mxu0 0.0
    %1482 = vmatprep.subr.mxu0 0.0
    %1483 = vmatpush1.msra.mxu0 0.0
    %1484 = vmatprep.subr.mxu0 0.0
    %1485 = vmatpush1.msra.mxu0 0.0
    %1486 = vmatprep.subr.mxu0 0.0
    %1487 = vmatpush1.msra.mxu0 0.0
    %1488 = vmatprep.subr.mxu0 0.0
    %1489 = vmatpush1.msra.mxu0 0.0
    %1490 = vmatprep.subr.mxu0 0.0
    %1491 = vmatpush1.msra.mxu0 0.0
    %1492 = vmatprep.subr.mxu0 0.0
    %1493 = vmatpush1.msra.mxu0 0.0
    %1494 = vmatprep.subr.mxu0 0.0
    %1495 = vmatpush1.msra.mxu0 0.0
    %1496 = vmatprep.subr.mxu0 0.0
    %1497 = vmatpush1.msra.mxu0 0.0
    %1498 = vmatprep.subr.mxu0 0.0
    %1499 = vmatpush1.msra.mxu0 0.0
    %1500 = vmatprep.subr.mxu0 0.0
    %1501 = vmatpush1.msra.mxu0 0.0
    %1502 = vmatprep.subr.mxu0 0.0
    %1503 = vmatpush1.msra.mxu0 0.0
    %1504 = vmatprep.subr.mxu0 0.0
    %1505 = vmatpush1.msra.mxu0 0.0
    %1506 = vmatprep.subr.mxu0 0.0
    %1507 = vmatpush1.msra.mxu0 0.0
    %1508 = vmatprep.subr.mxu0 0.0
    %1509 = vmatpush1.msra.mxu0 0.0
    %1510 = vmatprep.subr.mxu0 0.0
    %1511 = vmatpush1.msra.mxu0 0.0
    %1512 = vmatprep.subr.mxu0 0.0
    %1513 = vmatpush1.msra.mxu0 0.0
    %1514 = vmatprep.subr.mxu0 0.0
    %1515 = vmatpush1.msra.mxu0 0.0
    %1516 = vmatprep.subr.mxu0 0.0
    %1517 = vmatpush1.msra.mxu0 0.0
    %1518 = vmatprep.subr.mxu0 0.0
    %1519 = vmatpush1.msra.mxu0 0.0
    %1520 = vmatprep.subr.mxu0 0.0
    %1521 = vmatpush1.msra.mxu0 0.0
    %1522 = vmatprep.subr.mxu0 0.0
    %1523 = vmatpush1.msra.mxu0 0.0
    %1524 = vmatprep.subr.mxu0 0.0
    %1525 = vmatpush1.msra.mxu0 0.0
    %1526 = vmatprep.subr.mxu0 0.0
    %1527 = vmatpush1.msra.mxu0 0.0
    %1528 = vmatprep.subr.mxu0 0.0
    %1529 = vmatpush1.msra.mxu0 0.0
    %1530 = vmatprep.subr.mxu0 0.0
    %1531 = vmatpush1.msra.mxu0 0.0
    %1532 = vmatprep.subr.mxu0 0.0
    %1533 = vmatpush1.msra.mxu0 0.0
    %1534 = vmatprep.subr.mxu0 0.0
    %1535 = vmatpush1.msra.mxu0 0.0
    %1536 = vmatprep.subr.mxu0 0.0
    %1537 = vmatpush1.msra.mxu0 0.0
    %1538 = vmatprep.subr.mxu0 0.0
    %1539 = vmatpush1.msra.mxu0 0.0
    %1540 = vmatprep.mubr.f32.mxu0 0.0
    %1541 = vmatmul.mubr.f32.gmra.mrb[0].mxu0 %v1316
    %v1542 = vpop.f32.mrb[0].mxu0
    %v1543 = vadd.f32 1e-08, %v1542
    %v1544 = vpop.f32.mrb[0].mxu0
    %1545 = vdwg.mxu0
    %v1546 = vrsqrt.pop %v1543
    %v1547 = vmul.f32 %v1543, %v1546
    %vm1548 = vcmp.eq.f32.partialorder %v1543, inf
    %v1549 = vsel %vm1548, %v1543, %v1547
    %vm1550 = vcmp.eq.f32.partialorder %v1543, 0.0
    %v1551 = vand.u32 %v1543, 2147483648
    %v1552 = vsel %vm1550, %v1551, %v1549
    %v1553 = vsel %vm556, %v1552, 0.0
    %1554 = vadd.xlane.f32.xlu0 %v1553
    %v1555 = vpop.xlane.xlu0 %1554
    %v1556 = vrcp.pop 128.0
    %v1557 = vmul.f32 %v1555, %v1556
    %v1559 = vsel %vm556, %v1557, 0
    %1561 = vmatprep.subr.mxu0 0.0
    %1562 = vmatpush1.msra.mxu0 %v1559
    %1563 = vmatprep.subr.mxu0 0.0
    %1564 = vmatpush1.msra.mxu0 0.0
    %1565 = vmatprep.subr.mxu0 0.0
    %1566 = vmatpush1.msra.mxu0 0.0
    %1567 = vmatprep.subr.mxu0 0.0
    %1568 = vmatpush1.msra.mxu0 0.0
    %1569 = vmatprep.subr.mxu0 0.0
    %1570 = vmatpush1.msra.mxu0 0.0
    %1571 = vmatprep.subr.mxu0 0.0
    %1572 = vmatpush1.msra.mxu0 0.0
    %1573 = vmatprep.subr.mxu0 0.0
    %1574 = vmatpush1.msra.mxu0 0.0
    %1575 = vmatprep.subr.mxu0 0.0
    %1576 = vmatpush1.msra.mxu0 0.0
    %1577 = vmatprep.subr.mxu0 0.0
    %1578 = vmatpush1.msra.mxu0 0.0
    %1579 = vmatprep.subr.mxu0 0.0
    %1580 = vmatpush1.msra.mxu0 0.0
    %1581 = vmatprep.subr.mxu0 0.0
    %1582 = vmatpush1.msra.mxu0 0.0
    %1583 = vmatprep.subr.mxu0 0.0
    %1584 = vmatpush1.msra.mxu0 0.0
    %1585 = vmatprep.subr.mxu0 0.0
    %1586 = vmatpush1.msra.mxu0 0.0
    %1587 = vmatprep.subr.mxu0 0.0
    %1588 = vmatpush1.msra.mxu0 0.0
    %1589 = vmatprep.subr.mxu0 0.0
    %1590 = vmatpush1.msra.mxu0 0.0
    %1591 = vmatprep.subr.mxu0 0.0
    %1592 = vmatpush1.msra.mxu0 0.0
    %1593 = vmatprep.subr.mxu0 0.0
    %1594 = vmatpush1.msra.mxu0 0.0
    %1595 = vmatprep.subr.mxu0 0.0
    %1596 = vmatpush1.msra.mxu0 0.0
    %1597 = vmatprep.subr.mxu0 0.0
    %1598 = vmatpush1.msra.mxu0 0.0
    %1599 = vmatprep.subr.mxu0 0.0
    %1600 = vmatpush1.msra.mxu0 0.0
    %1601 = vmatprep.subr.mxu0 0.0
    %1602 = vmatpush1.msra.mxu0 0.0
    %1603 = vmatprep.subr.mxu0 0.0
    %1604 = vmatpush1.msra.mxu0 0.0
    %1605 = vmatprep.subr.mxu0 0.0
    %1606 = vmatpush1.msra.mxu0 0.0
    %1607 = vmatprep.subr.mxu0 0.0
    %1608 = vmatpush1.msra.mxu0 0.0
    %1609 = vmatprep.subr.mxu0 0.0
    %1610 = vmatpush1.msra.mxu0 0.0
    %1611 = vmatprep.subr.mxu0 0.0
    %1612 = vmatpush1.msra.mxu0 0.0
    %1613 = vmatprep.subr.mxu0 0.0
    %1614 = vmatpush1.msra.mxu0 0.0
    %1615 = vmatprep.subr.mxu0 0.0
    %1616 = vmatpush1.msra.mxu0 0.0
    %1617 = vmatprep.subr.mxu0 0.0
    %1618 = vmatpush1.msra.mxu0 0.0
    %1619 = vmatprep.subr.mxu0 0.0
    %1620 = vmatpush1.msra.mxu0 0.0
    %1621 = vmatprep.subr.mxu0 0.0
    %1622 = vmatpush1.msra.mxu0 0.0
    %1623 = vmatprep.subr.mxu0 0.0
    %1624 = vmatpush1.msra.mxu0 0.0
    %1625 = vmatprep.mubr.f32.mxu0 0.0
    %1626 = vmatmul.mubr.f32.gmra.mrb[0].mxu0 %v1389
    %v1627 = vpop.f32.mrb[0].mxu0
    %v1628 = vadd.f32 0.0, %v1627
    %v1629 = vpop.f32.mrb[0].mxu0
    %1630 = vmatprep.mubr.f32.mxu0 0.0
    %1631 = vmatmul.mubr.f32.gmra.mrb[0].mxu0 %v1392
    %v1632 = vpop.f32.mrb[0].mxu0
    %v1633 = vadd.f32 0.0, %v1632
    %v1634 = vpop.f32.mrb[0].mxu0
    %1635 = vdwg.mxu0
    %v1636 = vld [vmem:[#allocation19] sm:$0x1]
    %1638 = vset.pattern.permute.xlu0 0
    %1639 = vperm.xlu0 %1638, %v1628
    %v1640 = vpop.permute.xlu0 %1639
    %1643 = vset.pattern.permute.xlu0 0
    %1644 = vperm.xlu0 %1643, %v1633
    %v1645 = vpop.permute.xlu0 %1644
    %v1648 = vlaneseq
    %v1649 = vshrl.u32 %v1648, 7
    %v1650 = vsub.s32 0, %v1649
    %v1651 = vrot.slane %v1636, %v1650
    %v1653 = vmul.f32 %v1640, %v1651
    %v1654 = vmul.f32 %v1645, %v1651
    %v1655 = vadd.f32 %v1304, %v1653
    %v1656 = vadd.f32 %v1309, %v1654
    %vm1657 = vcmp.ge.f32.partialorder %v1655, 0.0
    %vm1658 = vcmp.ge.f32.partialorder %v1656, 0.0
    %v1659 = vmul.f32 %v1655, 0.2
    %v1660 = vmul.f32 %v1656, 0.2
    %v1661 = vsel %vm1657, %v1655, %v1659
    %v1662 = vsel %vm1658, %v1656, %v1660
    %v1663 = vld [vmem:[%s41] sm:$0xff]
    %v1664 = vld [vmem:[%s41 + $0x8] sm:$0xff]
    %v1665 = vld [vmem:[%s41 + $0x10] sm:$0xff]
    %v1666 = vld [vmem:[%s41 + $0x18] sm:$0xff]
    %v1667 = vld [vmem:[%s41 + $0x20] sm:$0xff]
    %v1668 = vld [vmem:[%s41 + $0x28] sm:$0xff]
    %v1669 = vld [vmem:[%s41 + $0x30] sm:$0xff]
    %v1670 = vld [vmem:[%s41 + $0x38] sm:$0xff]
    %v1671 = vld [vmem:[%s41 + $0x40] sm:$0xff]
    %v1672 = vld [vmem:[%s41 + $0x48] sm:$0xff]
    %v1673 = vld [vmem:[%s41 + $0x50] sm:$0xff]
    %v1674 = vld [vmem:[%s41 + $0x58] sm:$0xff]
    %v1675 = vld [vmem:[%s41 + $0x60] sm:$0xff]
    %v1676 = vld [vmem:[%s41 + $0x68] sm:$0xff]
    %v1677 = vld [vmem:[%s41 + $0x70] sm:$0xff]
    %v1678 = vld [vmem:[%s41 + $0x78] sm:$0xff]
    %v1679 = vld [vmem:[#allocation21] sm:$0x1]
    %v1681 = vlaneseq
    %v1682 = vshrl.u32 %v1681, 7
    %v1683 = vsub.s32 0, %v1682
    %v1684 = vrot.slane %v1679, %v1683
    %1686 = vmatprep.subr.mxu0 0.0
    %1687 = vmatpush1.msra.mxu0 %v1663
    %1688 = vmatprep.subr.mxu0 0.0
    %1689 = vmatpush1.msra.mxu0 %v1664
    %1690 = vmatprep.subr.mxu0 0.0
    %1691 = vmatpush1.msra.mxu0 %v1665
    %1692 = vmatprep.subr.mxu0 0.0
    %1693 = vmatpush1.msra.mxu0 %v1666
    %1694 = vmatprep.subr.mxu0 0.0
    %1695 = vmatpush1.msra.mxu0 %v1667
    %1696 = vmatprep.subr.mxu0 0.0
    %1697 = vmatpush1.msra.mxu0 %v1668
    %1698 = vmatprep.subr.mxu0 0.0
    %1699 = vmatpush1.msra.mxu0 %v1669
    %1700 = vmatprep.subr.mxu0 0.0
    %1701 = vmatpush1.msra.mxu0 %v1670
    %1702 = vmatprep.subr.mxu0 0.0
    %1703 = vmatpush1.msra.mxu0 %v1671
    %1704 = vmatprep.subr.mxu0 0.0
    %1705 = vmatpush1.msra.mxu0 %v1672
    %1706 = vmatprep.subr.mxu0 0.0
    %1707 = vmatpush1.msra.mxu0 %v1673
    %1708 = vmatprep.subr.mxu0 0.0
    %1709 = vmatpush1.msra.mxu0 %v1674
    %1710 = vmatprep.subr.mxu0 0.0
    %1711 = vmatpush1.msra.mxu0 %v1675
    %1712 = vmatprep.subr.mxu0 0.0
    %1713 = vmatpush1.msra.mxu0 %v1676
    %1714 = vmatprep.subr.mxu0 0.0
    %1715 = vmatpush1.msra.mxu0 %v1677
    %1716 = vmatprep.subr.mxu0 0.0
    %1717 = vmatpush1.msra.mxu0 %v1678
    %1718 = vmatprep.subr.mxu0 0.0
    %1719 = vmatpush1.msra.mxu0 0.0
    %1720 = vmatprep.subr.mxu0 0.0
    %1721 = vmatpush1.msra.mxu0 0.0
    %1722 = vmatprep.subr.mxu0 0.0
    %1723 = vmatpush1.msra.mxu0 0.0
    %1724 = vmatprep.subr.mxu0 0.0
    %1725 = vmatpush1.msra.mxu0 0.0
    %1726 = vmatprep.subr.mxu0 0.0
    %1727 = vmatpush1.msra.mxu0 0.0
    %1728 = vmatprep.subr.mxu0 0.0
    %1729 = vmatpush1.msra.mxu0 0.0
    %1730 = vmatprep.subr.mxu0 0.0
    %1731 = vmatpush1.msra.mxu0 0.0
    %1732 = vmatprep.subr.mxu0 0.0
    %1733 = vmatpush1.msra.mxu0 0.0
    %1734 = vmatprep.subr.mxu0 0.0
    %1735 = vmatpush1.msra.mxu0 0.0
    %1736 = vmatprep.subr.mxu0 0.0
    %1737 = vmatpush1.msra.mxu0 0.0
    %1738 = vmatprep.subr.mxu0 0.0
    %1739 = vmatpush1.msra.mxu0 0.0
    %1740 = vmatprep.subr.mxu0 0.0
    %1741 = vmatpush1.msra.mxu0 0.0
    %1742 = vmatprep.subr.mxu0 0.0
    %1743 = vmatpush1.msra.mxu0 0.0
    %1744 = vmatprep.subr.mxu0 0.0
    %1745 = vmatpush1.msra.mxu0 0.0
    %1746 = vmatprep.subr.mxu0 0.0
    %1747 = vmatpush1.msra.mxu0 0.0
    %1748 = vmatprep.subr.mxu0 0.0
    %1749 = vmatpush1.msra.mxu0 0.0
    %1750 = vmatprep.mubr.f32.mxu0 0.0
    %1751 = vmatmul.mubr.f32.gmra.mrb[0].mxu0 %v1661
    %v1752 = vpop.f32.mrb[0].mxu0
    %v1753 = vadd.f32 %v1684, %v1752
    %v1754 = vpop.f32.mrb[0].mxu0
    %1755 = vmatprep.mubr.f32.mxu0 0.0
    %1756 = vmatmul.mubr.f32.gmra.mrb[0].mxu0 %v1662
    %v1757 = vpop.f32.mrb[0].mxu0
    %v1758 = vadd.f32 %v1684, %v1757
    %v1759 = vpop.f32.mrb[0].mxu0
    %1760 = vdwg.mxu0
    %vm1761 = vcmp.ge.f32.partialorder %v1753, 0.0
    %vm1762 = vcmp.ge.f32.partialorder %v1758, 0.0
    %v1763 = vmul.f32 %v1753, 0.2
    %v1764 = vmul.f32 %v1758, 0.2
    %v1765 = vsel %vm1761, %v1753, %v1763
    %v1766 = vsel %vm1762, %v1758, %v1764
    %v1767 = vld [vmem:[%s45] sm:$0xff]
    %v1768 = vld [vmem:[%s45 + $0x8] sm:$0xff]
    %v1769 = vld [vmem:[#allocation3] sm:$0x1]
    %v1771 = vlaneseq
    %v1772 = vshrl.u32 %v1771, 7
    %v1773 = vsub.s32 0, %v1772
    %v1774 = vrot.slane %v1769, %v1773
    %v1777 = vsel %vm1126, %v1765, 0
    %v1780 = vsel %vm1126, %v1766, 0
    %1782 = vmatprep.subr.mxu0 0.0
    %1783 = vmatpush1.msra.mxu0 %v1767
    %1784 = vmatprep.subr.mxu0 0.0
    %1785 = vmatpush1.msra.mxu0 %v1768
    %1786 = vmatprep.subr.mxu0 0.0
    %1787 = vmatpush1.msra.mxu0 0.0
    %1788 = vmatprep.subr.mxu0 0.0
    %1789 = vmatpush1.msra.mxu0 0.0
    %1790 = vmatprep.subr.mxu0 0.0
    %1791 = vmatpush1.msra.mxu0 0.0
    %1792 = vmatprep.subr.mxu0 0.0
    %1793 = vmatpush1.msra.mxu0 0.0
    %1794 = vmatprep.subr.mxu0 0.0
    %1795 = vmatpush1.msra.mxu0 0.0
    %1796 = vmatprep.subr.mxu0 0.0
    %1797 = vmatpush1.msra.mxu0 0.0
    %1798 = vmatprep.subr.mxu0 0.0
    %1799 = vmatpush1.msra.mxu0 0.0
    %1800 = vmatprep.subr.mxu0 0.0
    %1801 = vmatpush1.msra.mxu0 0.0
    %1802 = vmatprep.subr.mxu0 0.0
    %1803 = vmatpush1.msra.mxu0 0.0
    %1804 = vmatprep.subr.mxu0 0.0
    %1805 = vmatpush1.msra.mxu0 0.0
    %1806 = vmatprep.subr.mxu0 0.0
    %1807 = vmatpush1.msra.mxu0 0.0
    %1808 = vmatprep.subr.mxu0 0.0
    %1809 = vmatpush1.msra.mxu0 0.0
    %1810 = vmatprep.subr.mxu0 0.0
    %1811 = vmatpush1.msra.mxu0 0.0
    %1812 = vmatprep.subr.mxu0 0.0
    %1813 = vmatpush1.msra.mxu0 0.0
    %1814 = vmatprep.subr.mxu0 0.0
    %1815 = vmatpush1.msra.mxu0 0.0
    %1816 = vmatprep.subr.mxu0 0.0
    %1817 = vmatpush1.msra.mxu0 0.0
    %1818 = vmatprep.subr.mxu0 0.0
    %1819 = vmatpush1.msra.mxu0 0.0
    %1820 = vmatprep.subr.mxu0 0.0
    %1821 = vmatpush1.msra.mxu0 0.0
    %1822 = vmatprep.subr.mxu0 0.0
    %1823 = vmatpush1.msra.mxu0 0.0
    %1824 = vmatprep.subr.mxu0 0.0
    %1825 = vmatpush1.msra.mxu0 0.0
    %1826 = vmatprep.subr.mxu0 0.0
    %1827 = vmatpush1.msra.mxu0 0.0
    %1828 = vmatprep.subr.mxu0 0.0
    %1829 = vmatpush1.msra.mxu0 0.0
    %1830 = vmatprep.subr.mxu0 0.0
    %1831 = vmatpush1.msra.mxu0 0.0
    %1832 = vmatprep.subr.mxu0 0.0
    %1833 = vmatpush1.msra.mxu0 0.0
    %1834 = vmatprep.subr.mxu0 0.0
    %1835 = vmatpush1.msra.mxu0 0.0
    %1836 = vmatprep.subr.mxu0 0.0
    %1837 = vmatpush1.msra.mxu0 0.0
    %1838 = vmatprep.subr.mxu0 0.0
    %1839 = vmatpush1.msra.mxu0 0.0
    %1840 = vmatprep.subr.mxu0 0.0
    %1841 = vmatpush1.msra.mxu0 0.0
    %1842 = vmatprep.subr.mxu0 0.0
    %1843 = vmatpush1.msra.mxu0 0.0
    %1844 = vmatprep.subr.mxu0 0.0
    %1845 = vmatpush1.msra.mxu0 0.0
    %1846 = vmatprep.mubr.f32.mxu0 0.0
    %1847 = vmatmul.mubr.f32.gmra.mrb[0].mxu0 %v1777
    %v1848 = vpop.f32.mrb[0].mxu0
    %v1849 = vadd.f32 %v1774, %v1848
    %v1850 = vpop.f32.mrb[0].mxu0
    %1851 = vmatprep.mubr.f32.mxu0 0.0
    %1852 = vmatmul.mubr.f32.gmra.mrb[0].mxu0 %v1780
    %v1853 = vpop.f32.mrb[0].mxu0
    %v1854 = vadd.f32 %v1774, %v1853
    %v1855 = vpop.f32.mrb[0].mxu0
    %1856 = vdwg.mxu0
    %v1857 = vld [vmem:[%s49] sm:$0xf]
    %v1859 = vsel %vm1126, %v1857, 0
    %1861 = vmatprep.subr.mxu0 0.0
    %1862 = vmatpush1.msra.mxu0 %v1849
    %1863 = vmatprep.subr.mxu0 0.0
    %1864 = vmatpush1.msra.mxu0 %v1854
    %1865 = vmatprep.subr.mxu0 0.0
    %1866 = vmatpush1.msra.mxu0 0.0
    %1867 = vmatprep.subr.mxu0 0.0
    %1868 = vmatpush1.msra.mxu0 0.0
    %1869 = vmatprep.subr.mxu0 0.0
    %1870 = vmatpush1.msra.mxu0 0.0
    %1871 = vmatprep.subr.mxu0 0.0
    %1872 = vmatpush1.msra.mxu0 0.0
    %1873 = vmatprep.subr.mxu0 0.0
    %1874 = vmatpush1.msra.mxu0 0.0
    %1875 = vmatprep.subr.mxu0 0.0
    %1876 = vmatpush1.msra.mxu0 0.0
    %1877 = vmatprep.subr.mxu0 0.0
    %1878 = vmatpush1.msra.mxu0 0.0
    %1879 = vmatprep.subr.mxu0 0.0
    %1880 = vmatpush1.msra.mxu0 0.0
    %1881 = vmatprep.subr.mxu0 0.0
    %1882 = vmatpush1.msra.mxu0 0.0
    %1883 = vmatprep.subr.mxu0 0.0
    %1884 = vmatpush1.msra.mxu0 0.0
    %1885 = vmatprep.subr.mxu0 0.0
    %1886 = vmatpush1.msra.mxu0 0.0
    %1887 = vmatprep.subr.mxu0 0.0
    %1888 = vmatpush1.msra.mxu0 0.0
    %1889 = vmatprep.subr.mxu0 0.0
    %1890 = vmatpush1.msra.mxu0 0.0
    %1891 = vmatprep.subr.mxu0 0.0
    %1892 = vmatpush1.msra.mxu0 0.0
    %1893 = vmatprep.subr.mxu0 0.0
    %1894 = vmatpush1.msra.mxu0 0.0
    %1895 = vmatprep.subr.mxu0 0.0
    %1896 = vmatpush1.msra.mxu0 0.0
    %1897 = vmatprep.subr.mxu0 0.0
    %1898 = vmatpush1.msra.mxu0 0.0
    %1899 = vmatprep.subr.mxu0 0.0
    %1900 = vmatpush1.msra.mxu0 0.0
    %1901 = vmatprep.subr.mxu0 0.0
    %1902 = vmatpush1.msra.mxu0 0.0
    %1903 = vmatprep.subr.mxu0 0.0
    %1904 = vmatpush1.msra.mxu0 0.0
    %1905 = vmatprep.subr.mxu0 0.0
    %1906 = vmatpush1.msra.mxu0 0.0
    %1907 = vmatprep.subr.mxu0 0.0
    %1908 = vmatpush1.msra.mxu0 0.0
    %1909 = vmatprep.subr.mxu0 0.0
    %1910 = vmatpush1.msra.mxu0 0.0
    %1911 = vmatprep.subr.mxu0 0.0
    %1912 = vmatpush1.msra.mxu0 0.0
    %1913 = vmatprep.subr.mxu0 0.0
    %1914 = vmatpush1.msra.mxu0 0.0
    %1915 = vmatprep.subr.mxu0 0.0
    %1916 = vmatpush1.msra.mxu0 0.0
    %1917 = vmatprep.subr.mxu0 0.0
    %1918 = vmatpush1.msra.mxu0 0.0
    %1919 = vmatprep.subr.mxu0 0.0
    %1920 = vmatpush1.msra.mxu0 0.0
    %1921 = vmatprep.subr.mxu0 0.0
    %1922 = vmatpush1.msra.mxu0 0.0
    %1923 = vmatprep.subr.mxu0 0.0
    %1924 = vmatpush1.msra.mxu0 0.0
    %1925 = vmatprep.mubr.f32.mxu0 0.0
    %1926 = vmatmul.mubr.f32.gmra.mrb[0].mxu0 %v1859
    %v1927 = vpop.f32.mrb[0].mxu0
    %v1928 = vadd.f32 0.0, %v1927
    %v1929 = vpop.f32.mrb[0].mxu0
    %1930 = vdwg.mxu0
    %v1931 = vadd.f32 %v1112, %v1928
    %v1932 = vld [vmem:[%s51] sm:$0xff]
    %v1933 = vld [vmem:[%s51 + $0x8] sm:$0xff]
    %v1934 = vld [vmem:[%s51 + $0x10] sm:$0xff]
    %v1935 = vld [vmem:[%s51 + $0x18] sm:$0xff]
    %v1936 = vld [vmem:[%s51 + $0x20] sm:$0xff]
    %v1937 = vld [vmem:[%s51 + $0x28] sm:$0xff]
    %v1938 = vld [vmem:[%s51 + $0x30] sm:$0xff]
    %v1939 = vld [vmem:[%s51 + $0x38] sm:$0xff]
    %v1940 = vld [vmem:[%s53] sm:$0xf]
    %v1941 = vld [vmem:[#allocation22] sm:$0x1]
    %v1943 = vlaneseq
    %v1944 = vshrl.u32 %v1943, 7
    %v1945 = vsub.s32 0, %v1944
    %v1946 = vrot.slane %v1941, %v1945
    %v1949 = vsel %vm552, %v1932, 0
    %v1952 = vsel %vm552, %v1933, 0
    %v1955 = vsel %vm552, %v1934, 0
    %v1958 = vsel %vm552, %v1935, 0
    %v1961 = vsel %vm552, %v1936, 0
    %v1964 = vsel %vm552, %v1937, 0
    %v1967 = vsel %vm552, %v1938, 0
    %v1970 = vsel %vm552, %v1939, 0
    %v1973 = vsel %vm556, %v1940, 0
    %1975 = vmatprep.subr.mxu0 0.0
    %1976 = vmatpush1.msra.mxu0 %v1973
    %1977 = vmatprep.subr.mxu0 0.0
    %1978 = vmatpush1.msra.mxu0 0.0
    %1979 = vmatprep.subr.mxu0 0.0
    %1980 = vmatpush1.msra.mxu0 0.0
    %1981 = vmatprep.subr.mxu0 0.0
    %1982 = vmatpush1.msra.mxu0 0.0
    %1983 = vmatprep.subr.mxu0 0.0
    %1984 = vmatpush1.msra.mxu0 0.0
    %1985 = vmatprep.subr.mxu0 0.0
    %1986 = vmatpush1.msra.mxu0 0.0
    %1987 = vmatprep.subr.mxu0 0.0
    %1988 = vmatpush1.msra.mxu0 0.0
    %1989 = vmatprep.subr.mxu0 0.0
    %1990 = vmatpush1.msra.mxu0 0.0
    %1991 = vmatprep.subr.mxu0 0.0
    %1992 = vmatpush1.msra.mxu0 0.0
    %1993 = vmatprep.subr.mxu0 0.0
    %1994 = vmatpush1.msra.mxu0 0.0
    %1995 = vmatprep.subr.mxu0 0.0
    %1996 = vmatpush1.msra.mxu0 0.0
    %1997 = vmatprep.subr.mxu0 0.0
    %1998 = vmatpush1.msra.mxu0 0.0
    %1999 = vmatprep.subr.mxu0 0.0
    %2000 = vmatpush1.msra.mxu0 0.0
    %2001 = vmatprep.subr.mxu0 0.0
    %2002 = vmatpush1.msra.mxu0 0.0
    %2003 = vmatprep.subr.mxu0 0.0
    %2004 = vmatpush1.msra.mxu0 0.0
    %2005 = vmatprep.subr.mxu0 0.0
    %2006 = vmatpush1.msra.mxu0 0.0
    %2007 = vmatprep.subr.mxu0 0.0
    %2008 = vmatpush1.msra.mxu0 0.0
    %2009 = vmatprep.subr.mxu0 0.0
    %2010 = vmatpush1.msra.mxu0 0.0
    %2011 = vmatprep.subr.mxu0 0.0
    %2012 = vmatpush1.msra.mxu0 0.0
    %2013 = vmatprep.subr.mxu0 0.0
    %2014 = vmatpush1.msra.mxu0 0.0
    %2015 = vmatprep.subr.mxu0 0.0
    %2016 = vmatpush1.msra.mxu0 0.0
    %2017 = vmatprep.subr.mxu0 0.0
    %2018 = vmatpush1.msra.mxu0 0.0
    %2019 = vmatprep.subr.mxu0 0.0
    %2020 = vmatpush1.msra.mxu0 0.0
    %2021 = vmatprep.subr.mxu0 0.0
    %2022 = vmatpush1.msra.mxu0 0.0
    %2023 = vmatprep.subr.mxu0 0.0
    %2024 = vmatpush1.msra.mxu0 0.0
    %2025 = vmatprep.subr.mxu0 0.0
    %2026 = vmatpush1.msra.mxu0 0.0
    %2027 = vmatprep.subr.mxu0 0.0
    %2028 = vmatpush1.msra.mxu0 0.0
    %2029 = vmatprep.subr.mxu0 0.0
    %2030 = vmatpush1.msra.mxu0 0.0
    %2031 = vmatprep.subr.mxu0 0.0
    %2032 = vmatpush1.msra.mxu0 0.0
    %2033 = vmatprep.subr.mxu0 0.0
    %2034 = vmatpush1.msra.mxu0 0.0
    %2035 = vmatprep.subr.mxu0 0.0
    %2036 = vmatpush1.msra.mxu0 0.0
    %2037 = vmatprep.subr.mxu0 0.0
    %2038 = vmatpush1.msra.mxu0 0.0
    %2039 = vmatprep.mubr.f32.mxu0 0.0
    %2040 = vmatmul.mubr.f32.gmra.mrb[0].mxu0 %v1949
    %v2041 = vpop.f32.mrb[0].mxu0
    %v2042 = vadd.f32 %v1946, %v2041
    %v2043 = vpop.f32.mrb[0].mxu0
    %2044 = vmatprep.mubr.f32.mxu0 0.0
    %2045 = vmatmul.mubr.f32.gmra.mrb[0].mxu0 %v1952
    %v2046 = vpop.f32.mrb[0].mxu0
    %v2047 = vadd.f32 %v1946, %v2046
    %v2048 = vpop.f32.mrb[0].mxu0
    %2049 = vmatprep.mubr.f32.mxu0 0.0
    %2050 = vmatmul.mubr.f32.gmra.mrb[0].mxu0 %v1955
    %v2051 = vpop.f32.mrb[0].mxu0
    %v2052 = vadd.f32 %v1946, %v2051
    %v2053 = vpop.f32.mrb[0].mxu0
    %2054 = vmatprep.mubr.f32.mxu0 0.0
    %2055 = vmatmul.mubr.f32.gmra.mrb[0].mxu0 %v1958
    %v2056 = vpop.f32.mrb[0].mxu0
    %v2057 = vadd.f32 %v1946, %v2056
    %v2058 = vpop.f32.mrb[0].mxu0
    %2059 = vmatprep.mubr.f32.mxu0 0.0
    %2060 = vmatmul.mubr.f32.gmra.mrb[0].mxu0 %v1961
    %v2061 = vpop.f32.mrb[0].mxu0
    %v2062 = vadd.f32 %v1946, %v2061
    %v2063 = vpop.f32.mrb[0].mxu0
    %2064 = vmatprep.mubr.f32.mxu0 0.0
    %2065 = vmatmul.mubr.f32.gmra.mrb[0].mxu0 %v1964
    %v2066 = vpop.f32.mrb[0].mxu0
    %v2067 = vadd.f32 %v1946, %v2066
    %v2068 = vpop.f32.mrb[0].mxu0
    %2069 = vmatprep.mubr.f32.mxu0 0.0
    %2070 = vmatmul.mubr.f32.gmra.mrb[0].mxu0 %v1967
    %v2071 = vpop.f32.mrb[0].mxu0
    %v2072 = vadd.f32 %v1946, %v2071
    %v2073 = vpop.f32.mrb[0].mxu0
    %2074 = vmatprep.mubr.f32.mxu0 0.0
    %2075 = vmatmul.mubr.f32.gmra.mrb[0].mxu0 %v1970
    %v2076 = vpop.f32.mrb[0].mxu0
    %v2077 = vadd.f32 %v1946, %v2076
    %v2078 = vpop.f32.mrb[0].mxu0
    %2079 = vdwg.mxu0
    %vm2080 = vcmp.ge.f32.partialorder %v2042, 0.0
    %vm2081 = vcmp.ge.f32.partialorder %v2047, 0.0
    %vm2082 = vcmp.ge.f32.partialorder %v2052, 0.0
    %vm2083 = vcmp.ge.f32.partialorder %v2057, 0.0
    %vm2084 = vcmp.ge.f32.partialorder %v2062, 0.0
    %vm2085 = vcmp.ge.f32.partialorder %v2067, 0.0
    %vm2086 = vcmp.ge.f32.partialorder %v2072, 0.0
    %vm2087 = vcmp.ge.f32.partialorder %v2077, 0.0
    %v2088 = vmul.f32 %v2042, 0.2
    %v2089 = vmul.f32 %v2047, 0.2
    %v2090 = vmul.f32 %v2052, 0.2
    %v2091 = vmul.f32 %v2057, 0.2
    %v2092 = vmul.f32 %v2062, 0.2
    %v2093 = vmul.f32 %v2067, 0.2
    %v2094 = vmul.f32 %v2072, 0.2
    %v2095 = vmul.f32 %v2077, 0.2
    %v2096 = vsel %vm2080, %v2042, %v2088
    %v2097 = vsel %vm2081, %v2047, %v2089
    %v2098 = vsel %vm2082, %v2052, %v2090
    %v2099 = vsel %vm2083, %v2057, %v2091
    %v2100 = vsel %vm2084, %v2062, %v2092
    %v2101 = vsel %vm2085, %v2067, %v2093
    %v2102 = vsel %vm2086, %v2072, %v2094
    %v2103 = vsel %vm2087, %v2077, %v2095
    %v2104 = vld [vmem:[%s57] sm:$0xff]
    %v2105 = vld [vmem:[%s59] sm:$0x1]
    %v2107 = vlaneseq
    %v2108 = vshrl.u32 %v2107, 7
    %v2109 = vsub.s32 0, %v2108
    %v2110 = vrot.slane %v2105, %v2109
    %vm2112 = vcmask 64512
    %v2114 = vsel %vm2112, %v2096, 0
    %v2117 = vsel %vm2112, %v2097, 0
    %v2120 = vsel %vm2112, %v2098, 0
    %v2123 = vsel %vm2112, %v2099, 0
    %v2126 = vsel %vm2112, %v2100, 0
    %v2129 = vsel %vm2112, %v2101, 0
    %v2132 = vsel %vm2112, %v2102, 0
    %v2135 = vsel %vm2112, %v2103, 0
    %2137 = vmatprep.subr.mxu0 0.0
    %2138 = vmatpush1.msra.mxu0 %v2104
    %2139 = vmatprep.subr.mxu0 0.0
    %2140 = vmatpush1.msra.mxu0 0.0
    %2141 = vmatprep.subr.mxu0 0.0
    %2142 = vmatpush1.msra.mxu0 0.0
    %2143 = vmatprep.subr.mxu0 0.0
    %2144 = vmatpush1.msra.mxu0 0.0
    %2145 = vmatprep.subr.mxu0 0.0
    %2146 = vmatpush1.msra.mxu0 0.0
    %2147 = vmatprep.subr.mxu0 0.0
    %2148 = vmatpush1.msra.mxu0 0.0
    %2149 = vmatprep.subr.mxu0 0.0
    %2150 = vmatpush1.msra.mxu0 0.0
    %2151 = vmatprep.subr.mxu0 0.0
    %2152 = vmatpush1.msra.mxu0 0.0
    %2153 = vmatprep.subr.mxu0 0.0
    %2154 = vmatpush1.msra.mxu0 0.0
    %2155 = vmatprep.subr.mxu0 0.0
    %2156 = vmatpush1.msra.mxu0 0.0
    %2157 = vmatprep.subr.mxu0 0.0
    %2158 = vmatpush1.msra.mxu0 0.0
    %2159 = vmatprep.subr.mxu0 0.0
    %2160 = vmatpush1.msra.mxu0 0.0
    %2161 = vmatprep.subr.mxu0 0.0
    %2162 = vmatpush1.msra.mxu0 0.0
    %2163 = vmatprep.subr.mxu0 0.0
    %2164 = vmatpush1.msra.mxu0 0.0
    %2165 = vmatprep.subr.mxu0 0.0
    %2166 = vmatpush1.msra.mxu0 0.0
    %2167 = vmatprep.subr.mxu0 0.0
    %2168 = vmatpush1.msra.mxu0 0.0
    %2169 = vmatprep.subr.mxu0 0.0
    %2170 = vmatpush1.msra.mxu0 0.0
    %2171 = vmatprep.subr.mxu0 0.0
    %2172 = vmatpush1.msra.mxu0 0.0
    %2173 = vmatprep.subr.mxu0 0.0
    %2174 = vmatpush1.msra.mxu0 0.0
    %2175 = vmatprep.subr.mxu0 0.0
    %2176 = vmatpush1.msra.mxu0 0.0
    %2177 = vmatprep.subr.mxu0 0.0
    %2178 = vmatpush1.msra.mxu0 0.0
    %2179 = vmatprep.subr.mxu0 0.0
    %2180 = vmatpush1.msra.mxu0 0.0
    %2181 = vmatprep.subr.mxu0 0.0
    %2182 = vmatpush1.msra.mxu0 0.0
    %2183 = vmatprep.subr.mxu0 0.0
    %2184 = vmatpush1.msra.mxu0 0.0
    %2185 = vmatprep.subr.mxu0 0.0
    %2186 = vmatpush1.msra.mxu0 0.0
    %2187 = vmatprep.subr.mxu0 0.0
    %2188 = vmatpush1.msra.mxu0 0.0
    %2189 = vmatprep.subr.mxu0 0.0
    %2190 = vmatpush1.msra.mxu0 0.0
    %2191 = vmatprep.subr.mxu0 0.0
    %2192 = vmatpush1.msra.mxu0 0.0
    %2193 = vmatprep.subr.mxu0 0.0
    %2194 = vmatpush1.msra.mxu0 0.0
    %2195 = vmatprep.subr.mxu0 0.0
    %2196 = vmatpush1.msra.mxu0 0.0
    %2197 = vmatprep.subr.mxu0 0.0
    %2198 = vmatpush1.msra.mxu0 0.0
    %2199 = vmatprep.subr.mxu0 0.0
    %2200 = vmatpush1.msra.mxu0 0.0
    %2201 = vmatprep.mubr.f32.mxu0 0.0
    %2202 = vmatmul.mubr.f32.gmra.mrb[0].mxu0 %v2114
    %v2203 = vpop.f32.mrb[0].mxu0
    %v2204 = vadd.f32 %v2110, %v2203
    %v2205 = vpop.f32.mrb[0].mxu0
    %2206 = vmatprep.mubr.f32.mxu0 0.0
    %2207 = vmatmul.mubr.f32.gmra.mrb[0].mxu0 %v2117
    %v2208 = vpop.f32.mrb[0].mxu0
    %v2209 = vadd.f32 %v2110, %v2208
    %v2210 = vpop.f32.mrb[0].mxu0
    %2211 = vmatprep.mubr.f32.mxu0 0.0
    %2212 = vmatmul.mubr.f32.gmra.mrb[0].mxu0 %v2120
    %v2213 = vpop.f32.mrb[0].mxu0
    %v2214 = vadd.f32 %v2110, %v2213
    %v2215 = vpop.f32.mrb[0].mxu0
    %2216 = vmatprep.mubr.f32.mxu0 0.0
    %2217 = vmatmul.mubr.f32.gmra.mrb[0].mxu0 %v2123
    %v2218 = vpop.f32.mrb[0].mxu0
    %v2219 = vadd.f32 %v2110, %v2218
    %v2220 = vpop.f32.mrb[0].mxu0
    %2221 = vmatprep.mubr.f32.mxu0 0.0
    %2222 = vmatmul.mubr.f32.gmra.mrb[0].mxu0 %v2126
    %v2223 = vpop.f32.mrb[0].mxu0
    %v2224 = vadd.f32 %v2110, %v2223
    %v2225 = vpop.f32.mrb[0].mxu0
    %2226 = vmatprep.mubr.f32.mxu0 0.0
    %2227 = vmatmul.mubr.f32.gmra.mrb[0].mxu0 %v2129
    %v2228 = vpop.f32.mrb[0].mxu0
    %v2229 = vadd.f32 %v2110, %v2228
    %v2230 = vpop.f32.mrb[0].mxu0
    %2231 = vmatprep.mubr.f32.mxu0 0.0
    %2232 = vmatmul.mubr.f32.gmra.mrb[0].mxu0 %v2132
    %v2233 = vpop.f32.mrb[0].mxu0
    %v2234 = vadd.f32 %v2110, %v2233
    %v2235 = vpop.f32.mrb[0].mxu0
    %2236 = vmatprep.mubr.f32.mxu0 0.0
    %2237 = vmatmul.mubr.f32.gmra.mrb[0].mxu0 %v2135
    %v2238 = vpop.f32.mrb[0].mxu0
    %v2239 = vadd.f32 %v2110, %v2238
    %v2240 = vpop.f32.mrb[0].mxu0
    %2241 = vdwg.mxu0
    %vm2242 = vcmp.ge.f32.partialorder %v2204, 0.0
    %vm2243 = vcmp.ge.f32.partialorder %v2209, 0.0
    %vm2244 = vcmp.ge.f32.partialorder %v2214, 0.0
    %vm2245 = vcmp.ge.f32.partialorder %v2219, 0.0
    %vm2246 = vcmp.ge.f32.partialorder %v2224, 0.0
    %vm2247 = vcmp.ge.f32.partialorder %v2229, 0.0
    %vm2248 = vcmp.ge.f32.partialorder %v2234, 0.0
    %vm2249 = vcmp.ge.f32.partialorder %v2239, 0.0
    %v2250 = vmul.f32 %v2204, 0.2
    %v2251 = vmul.f32 %v2209, 0.2
    %v2252 = vmul.f32 %v2214, 0.2
    %v2253 = vmul.f32 %v2219, 0.2
    %v2254 = vmul.f32 %v2224, 0.2
    %v2255 = vmul.f32 %v2229, 0.2
    %v2256 = vmul.f32 %v2234, 0.2
    %v2257 = vmul.f32 %v2239, 0.2
    %v2258 = vsel %vm2242, %v2204, %v2250
    %v2259 = vsel %vm2243, %v2209, %v2251
    %v2260 = vsel %vm2244, %v2214, %v2252
    %v2261 = vsel %vm2245, %v2219, %v2253
    %v2262 = vsel %vm2246, %v2224, %v2254
    %v2263 = vsel %vm2247, %v2229, %v2255
    %v2264 = vsel %vm2248, %v2234, %v2256
    %v2265 = vsel %vm2249, %v2239, %v2257
    %v2266 = vld [vmem:[%s61] sm:$0xff]
    %v2267 = vld [vmem:[%s63] sm:$0x1]
    %v2269 = vlaneseq
    %v2270 = vshrl.u32 %v2269, 7
    %v2271 = vsub.s32 0, %v2270
    %v2272 = vrot.slane %v2267, %v2271
    %v2275 = vsel %vm2112, %v2258, 0
    %v2278 = vsel %vm2112, %v2259, 0
    %v2281 = vsel %vm2112, %v2260, 0
    %v2284 = vsel %vm2112, %v2261, 0
    %v2287 = vsel %vm2112, %v2262, 0
    %v2290 = vsel %vm2112, %v2263, 0
    %v2293 = vsel %vm2112, %v2264, 0
    %v2296 = vsel %vm2112, %v2265, 0
    %2298 = vmatprep.subr.mxu0 0.0
    %2299 = vmatpush1.msra.mxu0 %v2266
    %2300 = vmatprep.subr.mxu0 0.0
    %2301 = vmatpush1.msra.mxu0 0.0
    %2302 = vmatprep.subr.mxu0 0.0
    %2303 = vmatpush1.msra.mxu0 0.0
    %2304 = vmatprep.subr.mxu0 0.0
    %2305 = vmatpush1.msra.mxu0 0.0
    %2306 = vmatprep.subr.mxu0 0.0
    %2307 = vmatpush1.msra.mxu0 0.0
    %2308 = vmatprep.subr.mxu0 0.0
    %2309 = vmatpush1.msra.mxu0 0.0
    %2310 = vmatprep.subr.mxu0 0.0
    %2311 = vmatpush1.msra.mxu0 0.0
    %2312 = vmatprep.subr.mxu0 0.0
    %2313 = vmatpush1.msra.mxu0 0.0
    %2314 = vmatprep.subr.mxu0 0.0
    %2315 = vmatpush1.msra.mxu0 0.0
    %2316 = vmatprep.subr.mxu0 0.0
    %2317 = vmatpush1.msra.mxu0 0.0
    %2318 = vmatprep.subr.mxu0 0.0
    %2319 = vmatpush1.msra.mxu0 0.0
    %2320 = vmatprep.subr.mxu0 0.0
    %2321 = vmatpush1.msra.mxu0 0.0
    %2322 = vmatprep.subr.mxu0 0.0
    %2323 = vmatpush1.msra.mxu0 0.0
    %2324 = vmatprep.subr.mxu0 0.0
    %2325 = vmatpush1.msra.mxu0 0.0
    %2326 = vmatprep.subr.mxu0 0.0
    %2327 = vmatpush1.msra.mxu0 0.0
    %2328 = vmatprep.subr.mxu0 0.0
    %2329 = vmatpush1.msra.mxu0 0.0
    %2330 = vmatprep.subr.mxu0 0.0
    %2331 = vmatpush1.msra.mxu0 0.0
    %2332 = vmatprep.subr.mxu0 0.0
    %2333 = vmatpush1.msra.mxu0 0.0
    %2334 = vmatprep.subr.mxu0 0.0
    %2335 = vmatpush1.msra.mxu0 0.0
    %2336 = vmatprep.subr.mxu0 0.0
    %2337 = vmatpush1.msra.mxu0 0.0
    %2338 = vmatprep.subr.mxu0 0.0
    %2339 = vmatpush1.msra.mxu0 0.0
    %2340 = vmatprep.subr.mxu0 0.0
    %2341 = vmatpush1.msra.mxu0 0.0
    %2342 = vmatprep.subr.mxu0 0.0
    %2343 = vmatpush1.msra.mxu0 0.0
    %2344 = vmatprep.subr.mxu0 0.0
    %2345 = vmatpush1.msra.mxu0 0.0
    %2346 = vmatprep.subr.mxu0 0.0
    %2347 = vmatpush1.msra.mxu0 0.0
    %2348 = vmatprep.subr.mxu0 0.0
    %2349 = vmatpush1.msra.mxu0 0.0
    %2350 = vmatprep.subr.mxu0 0.0
    %2351 = vmatpush1.msra.mxu0 0.0
    %2352 = vmatprep.subr.mxu0 0.0
    %2353 = vmatpush1.msra.mxu0 0.0
    %2354 = vmatprep.subr.mxu0 0.0
    %2355 = vmatpush1.msra.mxu0 0.0
    %2356 = vmatprep.subr.mxu0 0.0
    %2357 = vmatpush1.msra.mxu0 0.0
    %2358 = vmatprep.subr.mxu0 0.0
    %2359 = vmatpush1.msra.mxu0 0.0
    %2360 = vmatprep.subr.mxu0 0.0
    %2361 = vmatpush1.msra.mxu0 0.0
    %2362 = vmatprep.mubr.f32.mxu0 0.0
    %2363 = vmatmul.mubr.f32.gmra.mrb[0].mxu0 %v2275
    %v2364 = vpop.f32.mrb[0].mxu0
    %v2365 = vadd.f32 %v2272, %v2364
    %v2366 = vpop.f32.mrb[0].mxu0
    %2367 = vmatprep.mubr.f32.mxu0 0.0
    %2368 = vmatmul.mubr.f32.gmra.mrb[0].mxu0 %v2278
    %v2369 = vpop.f32.mrb[0].mxu0
    %v2370 = vadd.f32 %v2272, %v2369
    %v2371 = vpop.f32.mrb[0].mxu0
    %2372 = vmatprep.mubr.f32.mxu0 0.0
    %2373 = vmatmul.mubr.f32.gmra.mrb[0].mxu0 %v2281
    %v2374 = vpop.f32.mrb[0].mxu0
    %v2375 = vadd.f32 %v2272, %v2374
    %v2376 = vpop.f32.mrb[0].mxu0
    %2377 = vmatprep.mubr.f32.mxu0 0.0
    %2378 = vmatmul.mubr.f32.gmra.mrb[0].mxu0 %v2284
    %v2379 = vpop.f32.mrb[0].mxu0
    %v2380 = vadd.f32 %v2272, %v2379
    %v2381 = vpop.f32.mrb[0].mxu0
    %2382 = vmatprep.mubr.f32.mxu0 0.0
    %2383 = vmatmul.mubr.f32.gmra.mrb[0].mxu0 %v2287
    %v2384 = vpop.f32.mrb[0].mxu0
    %v2385 = vadd.f32 %v2272, %v2384
    %v2386 = vpop.f32.mrb[0].mxu0
    %2387 = vmatprep.mubr.f32.mxu0 0.0
    %2388 = vmatmul.mubr.f32.gmra.mrb[0].mxu0 %v2290
    %v2389 = vpop.f32.mrb[0].mxu0
    %v2390 = vadd.f32 %v2272, %v2389
    %v2391 = vpop.f32.mrb[0].mxu0
    %2392 = vmatprep.mubr.f32.mxu0 0.0
    %2393 = vmatmul.mubr.f32.gmra.mrb[0].mxu0 %v2293
    %v2394 = vpop.f32.mrb[0].mxu0
    %v2395 = vadd.f32 %v2272, %v2394
    %v2396 = vpop.f32.mrb[0].mxu0
    %2397 = vmatprep.mubr.f32.mxu0 0.0
    %2398 = vmatmul.mubr.f32.gmra.mrb[0].mxu0 %v2296
    %v2399 = vpop.f32.mrb[0].mxu0
    %v2400 = vadd.f32 %v2272, %v2399
    %v2401 = vpop.f32.mrb[0].mxu0
    %2402 = vdwg.mxu0
    %vm2403 = vcmp.ge.f32.partialorder %v2365, 0.0
    %vm2404 = vcmp.ge.f32.partialorder %v2370, 0.0
    %vm2405 = vcmp.ge.f32.partialorder %v2375, 0.0
    %vm2406 = vcmp.ge.f32.partialorder %v2380, 0.0
    %vm2407 = vcmp.ge.f32.partialorder %v2385, 0.0
    %vm2408 = vcmp.ge.f32.partialorder %v2390, 0.0
    %vm2409 = vcmp.ge.f32.partialorder %v2395, 0.0
    %vm2410 = vcmp.ge.f32.partialorder %v2400, 0.0
    %v2411 = vmul.f32 %v2365, 0.2
    %v2412 = vmul.f32 %v2370, 0.2
    %v2413 = vmul.f32 %v2375, 0.2
    %v2414 = vmul.f32 %v2380, 0.2
    %v2415 = vmul.f32 %v2385, 0.2
    %v2416 = vmul.f32 %v2390, 0.2
    %v2417 = vmul.f32 %v2395, 0.2
    %v2418 = vmul.f32 %v2400, 0.2
    %v2419 = vsel %vm2403, %v2365, %v2411
    %v2420 = vsel %vm2404, %v2370, %v2412
    %v2421 = vsel %vm2405, %v2375, %v2413
    %v2422 = vsel %vm2406, %v2380, %v2414
    %v2423 = vsel %vm2407, %v2385, %v2415
    %v2424 = vsel %vm2408, %v2390, %v2416
    %v2425 = vsel %vm2409, %v2395, %v2417
    %v2426 = vsel %vm2410, %v2400, %v2418
    %v2427 = vld [vmem:[%s65] sm:$0xff]
    %v2428 = vld [vmem:[%s65 + $0x8] sm:$0xff]
    %v2429 = vld [vmem:[#allocation4] sm:$0x1]
    %v2431 = vlaneseq
    %v2432 = vshrl.u32 %v2431, 7
    %v2433 = vsub.s32 0, %v2432
    %v2434 = vrot.slane %v2429, %v2433
    %v2437 = vsel %vm1126, %v2419, 0
    %v2440 = vsel %vm1126, %v2420, 0
    %v2443 = vsel %vm1126, %v2421, 0
    %v2446 = vsel %vm1126, %v2422, 0
    %v2449 = vsel %vm1126, %v2423, 0
    %v2452 = vsel %vm1126, %v2424, 0
    %v2455 = vsel %vm1126, %v2425, 0
    %v2458 = vsel %vm1126, %v2426, 0
    %2460 = vmatprep.subr.mxu0 0.0
    %2461 = vmatpush1.msra.mxu0 %v2427
    %2462 = vmatprep.subr.mxu0 0.0
    %2463 = vmatpush1.msra.mxu0 %v2428
    %2464 = vmatprep.subr.mxu0 0.0
    %2465 = vmatpush1.msra.mxu0 0.0
    %2466 = vmatprep.subr.mxu0 0.0
    %2467 = vmatpush1.msra.mxu0 0.0
    %2468 = vmatprep.subr.mxu0 0.0
    %2469 = vmatpush1.msra.mxu0 0.0
    %2470 = vmatprep.subr.mxu0 0.0
    %2471 = vmatpush1.msra.mxu0 0.0
    %2472 = vmatprep.subr.mxu0 0.0
    %2473 = vmatpush1.msra.mxu0 0.0
    %2474 = vmatprep.subr.mxu0 0.0
    %2475 = vmatpush1.msra.mxu0 0.0
    %2476 = vmatprep.subr.mxu0 0.0
    %2477 = vmatpush1.msra.mxu0 0.0
    %2478 = vmatprep.subr.mxu0 0.0
    %2479 = vmatpush1.msra.mxu0 0.0
    %2480 = vmatprep.subr.mxu0 0.0
    %2481 = vmatpush1.msra.mxu0 0.0
    %2482 = vmatprep.subr.mxu0 0.0
    %2483 = vmatpush1.msra.mxu0 0.0
    %2484 = vmatprep.subr.mxu0 0.0
    %2485 = vmatpush1.msra.mxu0 0.0
    %2486 = vmatprep.subr.mxu0 0.0
    %2487 = vmatpush1.msra.mxu0 0.0
    %2488 = vmatprep.subr.mxu0 0.0
    %2489 = vmatpush1.msra.mxu0 0.0
    %2490 = vmatprep.subr.mxu0 0.0
    %2491 = vmatpush1.msra.mxu0 0.0
    %2492 = vmatprep.subr.mxu0 0.0
    %2493 = vmatpush1.msra.mxu0 0.0
    %2494 = vmatprep.subr.mxu0 0.0
    %2495 = vmatpush1.msra.mxu0 0.0
    %2496 = vmatprep.subr.mxu0 0.0
    %2497 = vmatpush1.msra.mxu0 0.0
    %2498 = vmatprep.subr.mxu0 0.0
    %2499 = vmatpush1.msra.mxu0 0.0
    %2500 = vmatprep.subr.mxu0 0.0
    %2501 = vmatpush1.msra.mxu0 0.0
    %2502 = vmatprep.subr.mxu0 0.0
    %2503 = vmatpush1.msra.mxu0 0.0
    %2504 = vmatprep.subr.mxu0 0.0
    %2505 = vmatpush1.msra.mxu0 0.0
    %2506 = vmatprep.subr.mxu0 0.0
    %2507 = vmatpush1.msra.mxu0 0.0
    %2508 = vmatprep.subr.mxu0 0.0
    %2509 = vmatpush1.msra.mxu0 0.0
    %2510 = vmatprep.subr.mxu0 0.0
    %2511 = vmatpush1.msra.mxu0 0.0
    %2512 = vmatprep.subr.mxu0 0.0
    %2513 = vmatpush1.msra.mxu0 0.0
    %2514 = vmatprep.subr.mxu0 0.0
    %2515 = vmatpush1.msra.mxu0 0.0
    %2516 = vmatprep.subr.mxu0 0.0
    %2517 = vmatpush1.msra.mxu0 0.0
    %2518 = vmatprep.subr.mxu0 0.0
    %2519 = vmatpush1.msra.mxu0 0.0
    %2520 = vmatprep.subr.mxu0 0.0
    %2521 = vmatpush1.msra.mxu0 0.0
    %2522 = vmatprep.subr.mxu0 0.0
    %2523 = vmatpush1.msra.mxu0 0.0
    %2524 = vmatprep.mubr.f32.mxu0 0.0
    %2525 = vmatmul.mubr.f32.gmra.mrb[0].mxu0 %v2437
    %v2526 = vpop.f32.mrb[0].mxu0
    %v2527 = vadd.f32 %v2434, %v2526
    %v2528 = vpop.f32.mrb[0].mxu0
    %2529 = vmatprep.mubr.f32.mxu0 0.0
    %2530 = vmatmul.mubr.f32.gmra.mrb[0].mxu0 %v2440
    %v2531 = vpop.f32.mrb[0].mxu0
    %v2532 = vadd.f32 %v2434, %v2531
    %v2533 = vpop.f32.mrb[0].mxu0
    %2534 = vmatprep.mubr.f32.mxu0 0.0
    %2535 = vmatmul.mubr.f32.gmra.mrb[0].mxu0 %v2443
    %v2536 = vpop.f32.mrb[0].mxu0
    %v2537 = vadd.f32 %v2434, %v2536
    %v2538 = vpop.f32.mrb[0].mxu0
    %2539 = vmatprep.mubr.f32.mxu0 0.0
    %2540 = vmatmul.mubr.f32.gmra.mrb[0].mxu0 %v2446
    %v2541 = vpop.f32.mrb[0].mxu0
    %v2542 = vadd.f32 %v2434, %v2541
    %v2543 = vpop.f32.mrb[0].mxu0
    %2544 = vmatprep.mubr.f32.mxu0 0.0
    %2545 = vmatmul.mubr.f32.gmra.mrb[0].mxu0 %v2449
    %v2546 = vpop.f32.mrb[0].mxu0
    %v2547 = vadd.f32 %v2434, %v2546
    %v2548 = vpop.f32.mrb[0].mxu0
    %2549 = vmatprep.mubr.f32.mxu0 0.0
    %2550 = vmatmul.mubr.f32.gmra.mrb[0].mxu0 %v2452
    %v2551 = vpop.f32.mrb[0].mxu0
    %v2552 = vadd.f32 %v2434, %v2551
    %v2553 = vpop.f32.mrb[0].mxu0
    %2554 = vmatprep.mubr.f32.mxu0 0.0
    %2555 = vmatmul.mubr.f32.gmra.mrb[0].mxu0 %v2455
    %v2556 = vpop.f32.mrb[0].mxu0
    %v2557 = vadd.f32 %v2434, %v2556
    %v2558 = vpop.f32.mrb[0].mxu0
    %2559 = vmatprep.mubr.f32.mxu0 0.0
    %2560 = vmatmul.mubr.f32.gmra.mrb[0].mxu0 %v2458
    %v2561 = vpop.f32.mrb[0].mxu0
    %v2562 = vadd.f32 %v2434, %v2561
    %v2563 = vpop.f32.mrb[0].mxu0
    %2564 = vdwg.mxu0
    %v2565 = vld [vmem:[%s69] sm:$0xf]
    %v2567 = vsel %vm322, %v2565, 0
    %2569 = vmatprep.subr.mxu0 0.0
    %2570 = vmatpush1.msra.mxu0 %v2527
    %2571 = vmatprep.subr.mxu0 0.0
    %2572 = vmatpush1.msra.mxu0 %v2532
    %2573 = vmatprep.subr.mxu0 0.0
    %2574 = vmatpush1.msra.mxu0 %v2537
    %2575 = vmatprep.subr.mxu0 0.0
    %2576 = vmatpush1.msra.mxu0 %v2542
    %2577 = vmatprep.subr.mxu0 0.0
    %2578 = vmatpush1.msra.mxu0 %v2547
    %2579 = vmatprep.subr.mxu0 0.0
    %2580 = vmatpush1.msra.mxu0 %v2552
    %2581 = vmatprep.subr.mxu0 0.0
    %2582 = vmatpush1.msra.mxu0 %v2557
    %2583 = vmatprep.subr.mxu0 0.0
    %2584 = vmatpush1.msra.mxu0 %v2562
    %2585 = vmatprep.subr.mxu0 0.0
    %2586 = vmatpush1.msra.mxu0 0.0
    %2587 = vmatprep.subr.mxu0 0.0
    %2588 = vmatpush1.msra.mxu0 0.0
    %2589 = vmatprep.subr.mxu0 0.0
    %2590 = vmatpush1.msra.mxu0 0.0
    %2591 = vmatprep.subr.mxu0 0.0
    %2592 = vmatpush1.msra.mxu0 0.0
    %2593 = vmatprep.subr.mxu0 0.0
    %2594 = vmatpush1.msra.mxu0 0.0
    %2595 = vmatprep.subr.mxu0 0.0
    %2596 = vmatpush1.msra.mxu0 0.0
    %2597 = vmatprep.subr.mxu0 0.0
    %2598 = vmatpush1.msra.mxu0 0.0
    %2599 = vmatprep.subr.mxu0 0.0
    %2600 = vmatpush1.msra.mxu0 0.0
    %2601 = vmatprep.subr.mxu0 0.0
    %2602 = vmatpush1.msra.mxu0 0.0
    %2603 = vmatprep.subr.mxu0 0.0
    %2604 = vmatpush1.msra.mxu0 0.0
    %2605 = vmatprep.subr.mxu0 0.0
    %2606 = vmatpush1.msra.mxu0 0.0
    %2607 = vmatprep.subr.mxu0 0.0
    %2608 = vmatpush1.msra.mxu0 0.0
    %2609 = vmatprep.subr.mxu0 0.0
    %2610 = vmatpush1.msra.mxu0 0.0
    %2611 = vmatprep.subr.mxu0 0.0
    %2612 = vmatpush1.msra.mxu0 0.0
    %2613 = vmatprep.subr.mxu0 0.0
    %2614 = vmatpush1.msra.mxu0 0.0
    %2615 = vmatprep.subr.mxu0 0.0
    %2616 = vmatpush1.msra.mxu0 0.0
    %2617 = vmatprep.subr.mxu0 0.0
    %2618 = vmatpush1.msra.mxu0 0.0
    %2619 = vmatprep.subr.mxu0 0.0
    %2620 = vmatpush1.msra.mxu0 0.0
    %2621 = vmatprep.subr.mxu0 0.0
    %2622 = vmatpush1.msra.mxu0 0.0
    %2623 = vmatprep.subr.mxu0 0.0
    %2624 = vmatpush1.msra.mxu0 0.0
    %2625 = vmatprep.subr.mxu0 0.0
    %2626 = vmatpush1.msra.mxu0 0.0
    %2627 = vmatprep.subr.mxu0 0.0
    %2628 = vmatpush1.msra.mxu0 0.0
    %2629 = vmatprep.subr.mxu0 0.0
    %2630 = vmatpush1.msra.mxu0 0.0
    %2631 = vmatprep.subr.mxu0 0.0
    %2632 = vmatpush1.msra.mxu0 0.0
    %2633 = vmatprep.mubr.f32.mxu0 0.0
    %2634 = vmatmul.mubr.f32.gmra.mrb[0].mxu0 %v2567
    %v2635 = vpop.f32.mrb[0].mxu0
    %v2636 = vadd.f32 0.0, %v2635
    %v2637 = vpop.f32.mrb[0].mxu0
    %2638 = vdwg.mxu0
    %v2639 = vadd.f32 %v1931, %v2636
    %vm2640 = vcmask 3072
    %2641 = vst.msk [vmem:[%s71] sm:$0xf] %vm2640, %v2639
    // Predicated region
    $region190: #{tpu_custom_call.1} parent=1 // pred_check
      _
    $region191: #{tpu_custom_call.1} parent=1 // pred_check_branch
      %2643 = sbr.rel (0) target = $region193
    $region192: #{tpu_custom_call.1} parent=1 // pred_region
      _
    $region193: #{tpu_custom_call.1} parent=1 // pred_fallthru
      _
    // Predicated region
    $region194: #{tpu_custom_call.1} parent=1 // pred_check
      _
    $region195: #{tpu_custom_call.1} parent=1 // pred_check_branch
      %2645 = sbr.rel (0) target = $region197
    $region196: #{tpu_custom_call.1} parent=1 // pred_region
      _
    $region197: #{tpu_custom_call.1} parent=1 // pred_fallthru
      _
    %2646 = vsyncpa [#allocation6], 1
    %2647 = vsyncpa [#allocation8], 1
    %2648 = vsyncpa [#allocation11], 1
    %2649 = vsyncpa [#allocation14], 1
    %2650 = vsyncpa [#allocation17], 1
    %2651 = vsyncpa [#allocation20], 1
    %2652 = vsyncpa [#allocation23], 1

</llo_original>
